<compile_context>
chip_gen: v7x
topology: tpu7x:2x2x1
jax: 0.10.0
libtpu: 0.0.40
codegen_flags: <defaults>
</compile_context>

<pallas_src>
import functools
import math

import jax
import jax.numpy as jnp
from jax.experimental import pallas as pl
from jax.experimental.pallas import tpu as pltpu

LANE = 128


def _round_up(x, m):
    return ((x + m - 1) // m) * m


def _autoencode_kernel(x_ref,
                       w1, b1, w2, b2, w3, b3,     # encoder params
                       w4, b4, w5, b5, w6, b6,     # decoder params
                       enc_ref, dec_ref,
                       *, matmul_dtype, act_dtype):
    def dense(h, w_ref, b_ref, act):
        # bf16 operands into the MXU, f32 accumulation + bias.  tanh in
        # act_dtype (f32 by default; bf16 optionally on v6e/v7x).
        y = jnp.dot(h.astype(matmul_dtype), w_ref[...],
                    preferred_element_type=jnp.float32) + b_ref[...]
        return jnp.tanh(y.astype(act_dtype)) if act else y

    x = x_ref[...]                       # already matmul_dtype (cast once, at the boundary)

    # ---- encoder: Linear -> Tanh -> Linear -> Tanh -> Linear (no final act)
    h = dense(x, w1, b1, True)
    h = dense(h, w2, b2, True)
    enc = dense(h, w3, b3, False)        # f32 bottleneck code
    enc_ref[...] = enc.astype(enc_ref.dtype)

    # ---- decoder: Linear -> Tanh -> Linear -> Tanh -> Linear -> Tanh (out_fn)
    d = dense(enc, w4, b4, True)
    d = dense(d, w5, b5, True)
    d = dense(d, w6, b6, True)
    dec_ref[...] = d.astype(dec_ref.dtype)


def autoencode_linear_forward(x, params, *, tile_batch=512,
                              matmul_dtype=jnp.bfloat16,
                              act_dtype=jnp.float32,
                              out_dtype=None,
                              single_buffer_params=True):
    """params = list of (W, b) for the 6 Linear layers in execution order.
    W is (fan_in, fan_out) (transpose of nn.Linear.weight), b is (1, fan_out)."""
    batch, in_features = x.shape
    out_dtype = x.dtype if out_dtype is None else out_dtype
    out_itemsize = jnp.dtype(out_dtype).itemsize
    mm_itemsize = jnp.dtype(matmul_dtype).itemsize

    # ---- pad every feature dim to a multiple of 128 (lane-dense, MXU-friendly).
    padded = []
    for w, b in params:
        fan_in, fan_out = w.shape
        fi_p, fo_p = _round_up(fan_in, LANE), _round_up(fan_out, LANE)
        w_p = jnp.zeros((fi_p, fo_p), matmul_dtype).at[:fan_in, :fan_out].set(
            w.astype(matmul_dtype))
        b_p = jnp.zeros((1, fo_p), jnp.float32).at[:, :fan_out].set(
            b.astype(jnp.float32))
        padded.append((w_p, b_p))

    f_p = padded[0][0].shape[0]
    enc_dim = params[2][0].shape[1]          # O/4
    dec_dim = params[5][0].shape[1]          # F
    enc_p = padded[2][0].shape[1]
    dec_p = padded[5][0].shape[1]

    # ---- batch tiling: large tile (default 512) but keep the grid >= 2 steps
    # so the "parallel" batch axis can shard across TensorCores (v7x megacore)
    # and the x/out pipeline has something to overlap.
    batch8 = _round_up(batch, 8)
    tb = max(8, min(_round_up(tile_batch, 8), batch8))
    if batch8 > 8 and tb >= batch8:
        tb = max(8, _round_up(pl.cdiv(batch8, 2), 8))
    batch_p = _round_up(batch, tb)
    grid = (batch_p // tb,)

    # x cast to matmul_dtype once here (halves x DMA bytes + VMEM double-buffer).
    x_p = jnp.zeros((batch_p, f_p), matmul_dtype).at[:batch, :in_features].set(
        x.astype(matmul_dtype))

    flat = [x_p]
    for w_p, b_p in padded:
        flat.append(w_p)
        flat.append(b_p)

    def build_in_specs(param_pipeline_mode):
        specs = [pl.BlockSpec((tb, f_p), lambda i: (i, 0))]
        for w_p, b_p in padded:
            if param_pipeline_mode is None:
                specs.append(pl.BlockSpec(w_p.shape, lambda i: (0, 0)))
                specs.append(pl.BlockSpec(b_p.shape, lambda i: (0, 0)))
            else:
                specs.append(pl.BlockSpec(w_p.shape, lambda i: (0, 0),
                                          pipeline_mode=param_pipeline_mode))
                specs.append(pl.BlockSpec(b_p.shape, lambda i: (0, 0),
                                          pipeline_mode=param_pipeline_mode))
        return specs

    out_specs = (pl.BlockSpec((tb, enc_p), lambda i: (i, 0)),
                 pl.BlockSpec((tb, dec_p), lambda i: (i, 0)))
    out_shape = (jax.ShapeDtypeStruct((batch_p, enc_p), out_dtype),
                 jax.ShapeDtypeStruct((batch_p, dec_p), out_dtype))

    # ---- compiler hints: cost estimate.
    param_bytes = sum(w.size * w.dtype.itemsize + b.size * b.dtype.itemsize
                      for w, b in padded)
    flops, transcendentals = 0, 0
    for idx, (w_p, _) in enumerate(padded):
        fi, fo = w_p.shape
        flops += 2 * batch_p * fi * fo
        if idx != 2:                          # tanh after every layer but encoder's last
            transcendentals += batch_p * fo
    bytes_accessed = (x_p.size * mm_itemsize + param_bytes
                      + batch_p * (enc_p + dec_p) * out_itemsize)
    cost = pl.CostEstimate(flops=flops, transcendentals=transcendentals,
                           bytes_accessed=bytes_accessed)

    # ---- generation-aware VMEM budget (0.8 * physical VMEM as the cap).
    try:
        info = pltpu.get_tpu_info()
        phys_vmem = int(getattr(info, "vmem_capacity_bytes", 128 << 20))
    except Exception:
        phys_vmem = 128 << 20                 # v5e/v6e physical; conservative default
    vmem_cap = int(0.8 * phys_vmem)

    max_width = max(max(w.shape) for w, _ in padded)
    # What Pallas actually allocates: double-buffered x + both outputs, 1x or 2x
    # params, and ~3 f32 intermediates of the widest layer live at once.
    io_bytes = (2 * tb * f_p * mm_itemsize
                + 2 * tb * (enc_p + dec_p) * out_itemsize)
    live_f32 = 3 * tb * max_width * 4

    def vmem_limit_for(param_buffers):
        need = param_buffers * param_bytes + io_bytes + live_f32
        return int(min(max(int(1.25 * need), 32 << 20), vmem_cap))

    kernel = functools.partial(_autoencode_kernel,
                               matmul_dtype=matmul_dtype, act_dtype=act_dtype)

    def run(param_pipeline_mode, param_buffers):
        return pl.pallas_call(
            kernel,
            out_shape=out_shape,
            grid_spec=pltpu.PrefetchScalarGridSpec(
                num_scalar_prefetch=0,
                grid=grid,
                in_specs=build_in_specs(param_pipeline_mode),
                out_specs=out_specs),
            compiler_params=pltpu.CompilerParams(
                dimension_semantics=("parallel",),
                vmem_limit_bytes=vmem_limit_for(param_buffers)),
            cost_estimate=cost,
        )(*flat)

    if single_buffer_params:
        try:
            enc_pad, dec_pad = run(pl.Buffered(1), 1)
        except Exception:
            # pipeline_mode / Buffered(1) unsupported on this JAX build:
            # fall back to default (double-buffered) resident params.
            enc_pad, dec_pad = run(None, 2)
    else:
        enc_pad, dec_pad = run(None, 2)

    return enc_pad[:batch, :enc_dim], dec_pad[:batch, :dec_dim]


def init_params(key, in_features, out_features, layer=3, dtype=jnp.float32):
    """Deterministic init mirroring nn.Linear's default U(-1/sqrt(fan_in), +)."""
    num, out = in_features, out_features
    enc_dims, dec_dims = [], []
    for _ in range(layer):
        enc_dims.append((num, out))           # encode: Linear(num, out)
        dec_dims.append((out, num))           # decode: Linear(out, num)
        num, out = out, out // 2
    dec_dims = dec_dims[::-1]                 # decode = Sequential(decode[::-1])

    params = []
    for (fan_in, fan_out) in enc_dims + dec_dims:
        key, kw, kb = jax.random.split(key, 3)
        bound = 1.0 / math.sqrt(fan_in)
        w = jax.random.uniform(kw, (fan_in, fan_out), dtype, -bound, bound)
        b = jax.random.uniform(kb, (1, fan_out), dtype, -bound, bound)
        params.append((w, b))
    return params


def reference_forward(x, params, matmul_dtype=jnp.bfloat16):
    """Pure-JAX reference replicating the PyTorch forward with the same
    mixed-precision policy as the kernel (bf16 matmul operands, f32 math)."""
    def dense(h, w, b, act):
        y = jnp.dot(h.astype(matmul_dtype), w.astype(matmul_dtype),
                    preferred_element_type=jnp.float32) + b.astype(jnp.float32)
        return jnp.tanh(y) if act else y

    h = x.astype(jnp.float32)
    h = dense(h, *params[0], True)
    h = dense(h, *params[1], True)
    enc = dense(h, *params[2], False)
    d = dense(enc, *params[3], True)
    d = dense(d, *params[4], True)
    d = dense(d, *params[5], True)
    return enc.astype(x.dtype), d.astype(x.dtype)


if __name__ == "__main__":
    IN_FEATURES = 32
    OUT_FEATURES = 64     # small stand-in for the default 512
    BATCH = 256           # tile picker keeps >= 2 grid steps (128-row tiles here)

    key = jax.random.PRNGKey(0)
    key, kx = jax.random.split(key)
    x = jax.random.normal(kx, (BATCH, IN_FEATURES), jnp.float32)

    params = init_params(key, IN_FEATURES, OUT_FEATURES, layer=3)

    enc, dec = autoencode_linear_forward(x, params, tile_batch=512,
                                         matmul_dtype=jnp.bfloat16)
    enc, dec = jax.block_until_ready((enc, dec))

    enc_ref, dec_ref = reference_forward(x, params, matmul_dtype=jnp.bfloat16)

    assert enc.shape == (BATCH, OUT_FEATURES // 4)
    assert dec.shape == (BATCH, IN_FEATURES)
    assert jnp.allclose(enc, enc_ref, atol=1e-4, rtol=1e-4), \
        float(jnp.max(jnp.abs(enc - enc_ref)))
    assert jnp.allclose(dec, dec_ref, atol=1e-4, rtol=1e-4), \
        float(jnp.max(jnp.abs(dec - dec_ref)))

    print("KERNEL_OK")
</pallas_src>

<mosaic_0001>
module attributes {stable_mosaic.version = 11 : i64} {
  func.func @_autoencode_kernel(%arg0: i32, %arg1: memref<128x128xbf16, #tpu.memory_space<vmem>>, %arg2: memref<128x128xbf16, #tpu.memory_space<vmem>>, %arg3: memref<1x128xf32, #tpu.memory_space<vmem>>, %arg4: memref<128x128xbf16, #tpu.memory_space<vmem>>, %arg5: memref<1x128xf32, #tpu.memory_space<vmem>>, %arg6: memref<128x128xbf16, #tpu.memory_space<vmem>>, %arg7: memref<1x128xf32, #tpu.memory_space<vmem>>, %arg8: memref<128x128xbf16, #tpu.memory_space<vmem>>, %arg9: memref<1x128xf32, #tpu.memory_space<vmem>>, %arg10: memref<128x128xbf16, #tpu.memory_space<vmem>>, %arg11: memref<1x128xf32, #tpu.memory_space<vmem>>, %arg12: memref<128x128xbf16, #tpu.memory_space<vmem>>, %arg13: memref<1x128xf32, #tpu.memory_space<vmem>>, %arg14: memref<128x128xf32, #tpu.memory_space<vmem>>, %arg15: memref<128x128xf32, #tpu.memory_space<vmem>>) attributes {dimension_semantics = [#tpu.dimension_semantics<parallel>], iteration_bounds = array<i64: 2>, scalar_prefetch = 0 : i64, scratch_operands = 0 : i64, tpu.core_type = #tpu.core_type<tc>, window_params = [{transform_indices = @transform_0, window_bounds = array<i64: 128, 128>}, {pipeline_mode = #tpu.pipeline_mode<synchronous>, transform_indices = @transform_1, window_bounds = array<i64: 128, 128>}, {pipeline_mode = #tpu.pipeline_mode<synchronous>, transform_indices = @transform_2, window_bounds = array<i64: 1, 128>}, {pipeline_mode = #tpu.pipeline_mode<synchronous>, transform_indices = @transform_3, window_bounds = array<i64: 128, 128>}, {pipeline_mode = #tpu.pipeline_mode<synchronous>, transform_indices = @transform_4, window_bounds = array<i64: 1, 128>}, {pipeline_mode = #tpu.pipeline_mode<synchronous>, transform_indices = @transform_5, window_bounds = array<i64: 128, 128>}, {pipeline_mode = #tpu.pipeline_mode<synchronous>, transform_indices = @transform_6, window_bounds = array<i64: 1, 128>}, {pipeline_mode = #tpu.pipeline_mode<synchronous>, transform_indices = @transform_7, window_bounds = array<i64: 128, 128>}, {pipeline_mode = #tpu.pipeline_mode<synchronous>, transform_indices = @transform_8, window_bounds = array<i64: 1, 128>}, {pipeline_mode = #tpu.pipeline_mode<synchronous>, transform_indices = @transform_9, window_bounds = array<i64: 128, 128>}, {pipeline_mode = #tpu.pipeline_mode<synchronous>, transform_indices = @transform_10, window_bounds = array<i64: 1, 128>}, {pipeline_mode = #tpu.pipeline_mode<synchronous>, transform_indices = @transform_11, window_bounds = array<i64: 128, 128>}, {pipeline_mode = #tpu.pipeline_mode<synchronous>, transform_indices = @transform_12, window_bounds = array<i64: 1, 128>}, {transform_indices = @transform_13, window_bounds = array<i64: 128, 128>}, {transform_indices = @transform_14, window_bounds = array<i64: 128, 128>}]} {
    %c0 = arith.constant 0 : index
    %c0_0 = arith.constant 0 : index
    %0 = vector.load %arg1[%c0, %c0_0] : memref<128x128xbf16, #tpu.memory_space<vmem>>, vector<128x128xbf16>
    %c0_1 = arith.constant 0 : index
    %c0_2 = arith.constant 0 : index
    %1 = vector.load %arg2[%c0_1, %c0_2] : memref<128x128xbf16, #tpu.memory_space<vmem>>, vector<128x128xbf16>
    %cst = arith.constant dense<0.000000e+00> : vector<128x128xf32>
    %2 = tpu.matmul %0, %1, %cst {dimension_numbers = #tpu.dot_dimension_numbers<[1], [0], [0], [1], [0, 0, 1, 1], [], []>} : vector<128x128xbf16>, vector<128x128xbf16>, vector<128x128xf32> -> vector<128x128xf32>
    %c0_3 = arith.constant 0 : index
    %c0_4 = arith.constant 0 : index
    %3 = vector.load %arg3[%c0_3, %c0_4] : memref<1x128xf32, #tpu.memory_space<vmem>>, vector<1x128xf32>
    %4 = vector.broadcast %3 : vector<1x128xf32> to vector<128x128xf32>
    %5 = arith.addf %2, %4 : vector<128x128xf32>
    %6 = math.tanh %5 : vector<128x128xf32>
    %7 = arith.truncf %6 : vector<128x128xf32> to vector<128x128xbf16>
    %c0_5 = arith.constant 0 : index
    %c0_6 = arith.constant 0 : index
    %8 = vector.load %arg4[%c0_5, %c0_6] : memref<128x128xbf16, #tpu.memory_space<vmem>>, vector<128x128xbf16>
    %cst_7 = arith.constant dense<0.000000e+00> : vector<128x128xf32>
    %9 = tpu.matmul %7, %8, %cst_7 {dimension_numbers = #tpu.dot_dimension_numbers<[1], [0], [0], [1], [0, 0, 1, 1], [], []>} : vector<128x128xbf16>, vector<128x128xbf16>, vector<128x128xf32> -> vector<128x128xf32>
    %c0_8 = arith.constant 0 : index
    %c0_9 = arith.constant 0 : index
    %10 = vector.load %arg5[%c0_8, %c0_9] : memref<1x128xf32, #tpu.memory_space<vmem>>, vector<1x128xf32>
    %11 = vector.broadcast %10 : vector<1x128xf32> to vector<128x128xf32>
    %12 = arith.addf %9, %11 : vector<128x128xf32>
    %13 = math.tanh %12 : vector<128x128xf32>
    %14 = arith.truncf %13 : vector<128x128xf32> to vector<128x128xbf16>
    %c0_10 = arith.constant 0 : index
    %c0_11 = arith.constant 0 : index
    %15 = vector.load %arg6[%c0_10, %c0_11] : memref<128x128xbf16, #tpu.memory_space<vmem>>, vector<128x128xbf16>
    %cst_12 = arith.constant dense<0.000000e+00> : vector<128x128xf32>
    %16 = tpu.matmul %14, %15, %cst_12 {dimension_numbers = #tpu.dot_dimension_numbers<[1], [0], [0], [1], [0, 0, 1, 1], [], []>} : vector<128x128xbf16>, vector<128x128xbf16>, vector<128x128xf32> -> vector<128x128xf32>
    %c0_13 = arith.constant 0 : index
    %c0_14 = arith.constant 0 : index
    %17 = vector.load %arg7[%c0_13, %c0_14] : memref<1x128xf32, #tpu.memory_space<vmem>>, vector<1x128xf32>
    %18 = vector.broadcast %17 : vector<1x128xf32> to vector<128x128xf32>
    %19 = arith.addf %16, %18 : vector<128x128xf32>
    %c0_15 = arith.constant 0 : index
    %c0_16 = arith.constant 0 : index
    %20 = vector.load %arg14[%c0_15, %c0_16] : memref<128x128xf32, #tpu.memory_space<vmem>>, vector<128x128xf32>
    tpu.vector_store %arg14[%c0_15, %c0_16], %19 {strides = array<i32>} : memref<128x128xf32, #tpu.memory_space<vmem>>, vector<128x128xf32>,
    %21 = arith.truncf %19 : vector<128x128xf32> to vector<128x128xbf16>
    %c0_17 = arith.constant 0 : index
    %c0_18 = arith.constant 0 : index
    %22 = vector.load %arg8[%c0_17, %c0_18] : memref<128x128xbf16, #tpu.memory_space<vmem>>, vector<128x128xbf16>
    %cst_19 = arith.constant dense<0.000000e+00> : vector<128x128xf32>
    %23 = tpu.matmul %21, %22, %cst_19 {dimension_numbers = #tpu.dot_dimension_numbers<[1], [0], [0], [1], [0, 0, 1, 1], [], []>} : vector<128x128xbf16>, vector<128x128xbf16>, vector<128x128xf32> -> vector<128x128xf32>
    %c0_20 = arith.constant 0 : index
    %c0_21 = arith.constant 0 : index
    %24 = vector.load %arg9[%c0_20, %c0_21] : memref<1x128xf32, #tpu.memory_space<vmem>>, vector<1x128xf32>
    %25 = vector.broadcast %24 : vector<1x128xf32> to vector<128x128xf32>
    %26 = arith.addf %23, %25 : vector<128x128xf32>
    %27 = math.tanh %26 : vector<128x128xf32>
    %28 = arith.truncf %27 : vector<128x128xf32> to vector<128x128xbf16>
    %c0_22 = arith.constant 0 : index
    %c0_23 = arith.constant 0 : index
    %29 = vector.load %arg10[%c0_22, %c0_23] : memref<128x128xbf16, #tpu.memory_space<vmem>>, vector<128x128xbf16>
    %cst_24 = arith.constant dense<0.000000e+00> : vector<128x128xf32>
    %30 = tpu.matmul %28, %29, %cst_24 {dimension_numbers = #tpu.dot_dimension_numbers<[1], [0], [0], [1], [0, 0, 1, 1], [], []>} : vector<128x128xbf16>, vector<128x128xbf16>, vector<128x128xf32> -> vector<128x128xf32>
    %c0_25 = arith.constant 0 : index
    %c0_26 = arith.constant 0 : index
    %31 = vector.load %arg11[%c0_25, %c0_26] : memref<1x128xf32, #tpu.memory_space<vmem>>, vector<1x128xf32>
    %32 = vector.broadcast %31 : vector<1x128xf32> to vector<128x128xf32>
    %33 = arith.addf %30, %32 : vector<128x128xf32>
    %34 = math.tanh %33 : vector<128x128xf32>
    %35 = arith.truncf %34 : vector<128x128xf32> to vector<128x128xbf16>
    %c0_27 = arith.constant 0 : index
    %c0_28 = arith.constant 0 : index
    %36 = vector.load %arg12[%c0_27, %c0_28] : memref<128x128xbf16, #tpu.memory_space<vmem>>, vector<128x128xbf16>
    %cst_29 = arith.constant dense<0.000000e+00> : vector<128x128xf32>
    %37 = tpu.matmul %35, %36, %cst_29 {dimension_numbers = #tpu.dot_dimension_numbers<[1], [0], [0], [1], [0, 0, 1, 1], [], []>} : vector<128x128xbf16>, vector<128x128xbf16>, vector<128x128xf32> -> vector<128x128xf32>
    %c0_30 = arith.constant 0 : index
    %c0_31 = arith.constant 0 : index
    %38 = vector.load %arg13[%c0_30, %c0_31] : memref<1x128xf32, #tpu.memory_space<vmem>>, vector<1x128xf32>
    %39 = vector.broadcast %38 : vector<1x128xf32> to vector<128x128xf32>
    %40 = arith.addf %37, %39 : vector<128x128xf32>
    %41 = math.tanh %40 : vector<128x128xf32>
    %c0_32 = arith.constant 0 : index
    %c0_33 = arith.constant 0 : index
    %42 = vector.load %arg15[%c0_32, %c0_33] : memref<128x128xf32, #tpu.memory_space<vmem>>, vector<128x128xf32>
    tpu.vector_store %arg15[%c0_32, %c0_33], %41 {strides = array<i32>} : memref<128x128xf32, #tpu.memory_space<vmem>>, vector<128x128xf32>,
    return
  }
  func.func @transform_0(%arg0: i32) -> (i32, i32) {
    %c0_i32 = arith.constant 0 : i32
    %c0_i32_0 = arith.constant 0 : i32
    return %arg0, %c0_i32 : i32, i32
  }
  func.func @transform_1(%arg0: i32) -> (i32, i32) {
    %c0_i32 = arith.constant 0 : i32
    %c0_i32_0 = arith.constant 0 : i32
    %c0_i32_1 = arith.constant 0 : i32
    return %c0_i32, %c0_i32_0 : i32, i32
  }
  func.func @transform_2(%arg0: i32) -> (i32, i32) {
    %c0_i32 = arith.constant 0 : i32
    %c0_i32_0 = arith.constant 0 : i32
    %c0_i32_1 = arith.constant 0 : i32
    return %c0_i32, %c0_i32_0 : i32, i32
  }
  func.func @transform_3(%arg0: i32) -> (i32, i32) {
    %c0_i32 = arith.constant 0 : i32
    %c0_i32_0 = arith.constant 0 : i32
    %c0_i32_1 = arith.constant 0 : i32
    return %c0_i32, %c0_i32_0 : i32, i32
  }
  func.func @transform_4(%arg0: i32) -> (i32, i32) {
    %c0_i32 = arith.constant 0 : i32
    %c0_i32_0 = arith.constant 0 : i32
    %c0_i32_1 = arith.constant 0 : i32
    return %c0_i32, %c0_i32_0 : i32, i32
  }
  func.func @transform_5(%arg0: i32) -> (i32, i32) {
    %c0_i32 = arith.constant 0 : i32
    %c0_i32_0 = arith.constant 0 : i32
    %c0_i32_1 = arith.constant 0 : i32
    return %c0_i32, %c0_i32_0 : i32, i32
  }
  func.func @transform_6(%arg0: i32) -> (i32, i32) {
    %c0_i32 = arith.constant 0 : i32
    %c0_i32_0 = arith.constant 0 : i32
    %c0_i32_1 = arith.constant 0 : i32
    return %c0_i32, %c0_i32_0 : i32, i32
  }
  func.func @transform_7(%arg0: i32) -> (i32, i32) {
    %c0_i32 = arith.constant 0 : i32
    %c0_i32_0 = arith.constant 0 : i32
    %c0_i32_1 = arith.constant 0 : i32
    return %c0_i32, %c0_i32_0 : i32, i32
  }
  func.func @transform_8(%arg0: i32) -> (i32, i32) {
    %c0_i32 = arith.constant 0 : i32
    %c0_i32_0 = arith.constant 0 : i32
    %c0_i32_1 = arith.constant 0 : i32
    return %c0_i32, %c0_i32_0 : i32, i32
  }
  func.func @transform_9(%arg0: i32) -> (i32, i32) {
    %c0_i32 = arith.constant 0 : i32
    %c0_i32_0 = arith.constant 0 : i32
    %c0_i32_1 = arith.constant 0 : i32
    return %c0_i32, %c0_i32_0 : i32, i32
  }
  func.func @transform_10(%arg0: i32) -> (i32, i32) {
    %c0_i32 = arith.constant 0 : i32
    %c0_i32_0 = arith.constant 0 : i32
    %c0_i32_1 = arith.constant 0 : i32
    return %c0_i32, %c0_i32_0 : i32, i32
  }
  func.func @transform_11(%arg0: i32) -> (i32, i32) {
    %c0_i32 = arith.constant 0 : i32
    %c0_i32_0 = arith.constant 0 : i32
    %c0_i32_1 = arith.constant 0 : i32
    return %c0_i32, %c0_i32_0 : i32, i32
  }
  func.func @transform_12(%arg0: i32) -> (i32, i32) {
    %c0_i32 = arith.constant 0 : i32
    %c0_i32_0 = arith.constant 0 : i32
    %c0_i32_1 = arith.constant 0 : i32
    return %c0_i32, %c0_i32_0 : i32, i32
  }
  func.func @transform_13(%arg0: i32) -> (i32, i32) {
    %c0_i32 = arith.constant 0 : i32
    %c0_i32_0 = arith.constant 0 : i32
    return %arg0, %c0_i32 : i32, i32
  }
  func.func @transform_14(%arg0: i32) -> (i32, i32) {
    %c0_i32 = arith.constant 0 : i32
    %c0_i32_0 = arith.constant 0 : i32
    return %arg0, %c0_i32 : i32, i32
  }
}

module attributes {stable_mosaic.version = 11 : i64} {
  func.func @_autoencode_kernel(%arg0: i32, %arg1: memref<128x128xbf16, #tpu.memory_space<vmem>>, %arg2: memref<128x128xbf16, #tpu.memory_space<vmem>>, %arg3: memref<1x128xf32, #tpu.memory_space<vmem>>, %arg4: memref<128x128xbf16, #tpu.memory_space<vmem>>, %arg5: memref<1x128xf32, #tpu.memory_space<vmem>>, %arg6: memref<128x128xbf16, #tpu.memory_space<vmem>>, %arg7: memref<1x128xf32, #tpu.memory_space<vmem>>, %arg8: memref<128x128xbf16, #tpu.memory_space<vmem>>, %arg9: memref<1x128xf32, #tpu.memory_space<vmem>>, %arg10: memref<128x128xbf16, #tpu.memory_space<vmem>>, %arg11: memref<1x128xf32, #tpu.memory_space<vmem>>, %arg12: memref<128x128xbf16, #tpu.memory_space<vmem>>, %arg13: memref<1x128xf32, #tpu.memory_space<vmem>>, %arg14: memref<128x128xf32, #tpu.memory_space<vmem>>, %arg15: memref<128x128xf32, #tpu.memory_space<vmem>>) attributes {dimension_semantics = [#tpu.dimension_semantics<parallel>], iteration_bounds = array<i64: 2>, scalar_prefetch = 0 : i64, scratch_operands = 0 : i64, tpu.core_type = #tpu.core_type<tc>, window_params = [{transform_indices = @transform_0, window_bounds = array<i64: 128, 128>}, {pipeline_mode = #tpu.pipeline_mode<synchronous>, transform_indices = @transform_1, window_bounds = array<i64: 128, 128>}, {pipeline_mode = #tpu.pipeline_mode<synchronous>, transform_indices = @transform_2, window_bounds = array<i64: 1, 128>}, {pipeline_mode = #tpu.pipeline_mode<synchronous>, transform_indices = @transform_3, window_bounds = array<i64: 128, 128>}, {pipeline_mode = #tpu.pipeline_mode<synchronous>, transform_indices = @transform_4, window_bounds = array<i64: 1, 128>}, {pipeline_mode = #tpu.pipeline_mode<synchronous>, transform_indices = @transform_5, window_bounds = array<i64: 128, 128>}, {pipeline_mode = #tpu.pipeline_mode<synchronous>, transform_indices = @transform_6, window_bounds = array<i64: 1, 128>}, {pipeline_mode = #tpu.pipeline_mode<synchronous>, transform_indices = @transform_7, window_bounds = array<i64: 128, 128>}, {pipeline_mode = #tpu.pipeline_mode<synchronous>, transform_indices = @transform_8, window_bounds = array<i64: 1, 128>}, {pipeline_mode = #tpu.pipeline_mode<synchronous>, transform_indices = @transform_9, window_bounds = array<i64: 128, 128>}, {pipeline_mode = #tpu.pipeline_mode<synchronous>, transform_indices = @transform_10, window_bounds = array<i64: 1, 128>}, {pipeline_mode = #tpu.pipeline_mode<synchronous>, transform_indices = @transform_11, window_bounds = array<i64: 128, 128>}, {pipeline_mode = #tpu.pipeline_mode<synchronous>, transform_indices = @transform_12, window_bounds = array<i64: 1, 128>}, {transform_indices = @transform_13, window_bounds = array<i64: 128, 128>}, {transform_indices = @transform_14, window_bounds = array<i64: 128, 128>}]} {
    %c0 = arith.constant 0 : index
    %c0_0 = arith.constant 0 : index
    %0 = vector.load %arg1[%c0, %c0_0] : memref<128x128xbf16, #tpu.memory_space<vmem>>, vector<128x128xbf16>
    %c0_1 = arith.constant 0 : index
    %c0_2 = arith.constant 0 : index
    %1 = vector.load %arg2[%c0_1, %c0_2] : memref<128x128xbf16, #tpu.memory_space<vmem>>, vector<128x128xbf16>
    %cst = arith.constant dense<0.000000e+00> : vector<128x128xf32>
    %2 = tpu.matmul %0, %1, %cst {dimension_numbers = #tpu.dot_dimension_numbers<[1], [0], [0], [1], [0, 0, 1, 1], [], []>} : vector<128x128xbf16>, vector<128x128xbf16>, vector<128x128xf32> -> vector<128x128xf32>
    %c0_3 = arith.constant 0 : index
    %c0_4 = arith.constant 0 : index
    %3 = vector.load %arg3[%c0_3, %c0_4] : memref<1x128xf32, #tpu.memory_space<vmem>>, vector<1x128xf32>
    %4 = vector.broadcast %3 : vector<1x128xf32> to vector<128x128xf32>
    %5 = arith.addf %2, %4 : vector<128x128xf32>
    %6 = math.tanh %5 : vector<128x128xf32>
    %7 = arith.truncf %6 : vector<128x128xf32> to vector<128x128xbf16>
    %c0_5 = arith.constant 0 : index
    %c0_6 = arith.constant 0 : index
    %8 = vector.load %arg4[%c0_5, %c0_6] : memref<128x128xbf16, #tpu.memory_space<vmem>>, vector<128x128xbf16>
    %cst_7 = arith.constant dense<0.000000e+00> : vector<128x128xf32>
    %9 = tpu.matmul %7, %8, %cst_7 {dimension_numbers = #tpu.dot_dimension_numbers<[1], [0], [0], [1], [0, 0, 1, 1], [], []>} : vector<128x128xbf16>, vector<128x128xbf16>, vector<128x128xf32> -> vector<128x128xf32>
    %c0_8 = arith.constant 0 : index
    %c0_9 = arith.constant 0 : index
    %10 = vector.load %arg5[%c0_8, %c0_9] : memref<1x128xf32, #tpu.memory_space<vmem>>, vector<1x128xf32>
    %11 = vector.broadcast %10 : vector<1x128xf32> to vector<128x128xf32>
    %12 = arith.addf %9, %11 : vector<128x128xf32>
    %13 = math.tanh %12 : vector<128x128xf32>
    %14 = arith.truncf %13 : vector<128x128xf32> to vector<128x128xbf16>
    %c0_10 = arith.constant 0 : index
    %c0_11 = arith.constant 0 : index
    %15 = vector.load %arg6[%c0_10, %c0_11] : memref<128x128xbf16, #tpu.memory_space<vmem>>, vector<128x128xbf16>
    %cst_12 = arith.constant dense<0.000000e+00> : vector<128x128xf32>
    %16 = tpu.matmul %14, %15, %cst_12 {dimension_numbers = #tpu.dot_dimension_numbers<[1], [0], [0], [1], [0, 0, 1, 1], [], []>} : vector<128x128xbf16>, vector<128x128xbf16>, vector<128x128xf32> -> vector<128x128xf32>
    %c0_13 = arith.constant 0 : index
    %c0_14 = arith.constant 0 : index
    %17 = vector.load %arg7[%c0_13, %c0_14] : memref<1x128xf32, #tpu.memory_space<vmem>>, vector<1x128xf32>
    %18 = vector.broadcast %17 : vector<1x128xf32> to vector<128x128xf32>
    %19 = arith.addf %16, %18 : vector<128x128xf32>
    %c0_15 = arith.constant 0 : index
    %c0_16 = arith.constant 0 : index
    %20 = vector.load %arg14[%c0_15, %c0_16] : memref<128x128xf32, #tpu.memory_space<vmem>>, vector<128x128xf32>
    tpu.vector_store %arg14[%c0_15, %c0_16], %19 {strides = array<i32>} : memref<128x128xf32, #tpu.memory_space<vmem>>, vector<128x128xf32>,
    %21 = arith.truncf %19 : vector<128x128xf32> to vector<128x128xbf16>
    %c0_17 = arith.constant 0 : index
    %c0_18 = arith.constant 0 : index
    %22 = vector.load %arg8[%c0_17, %c0_18] : memref<128x128xbf16, #tpu.memory_space<vmem>>, vector<128x128xbf16>
    %cst_19 = arith.constant dense<0.000000e+00> : vector<128x128xf32>
    %23 = tpu.matmul %21, %22, %cst_19 {dimension_numbers = #tpu.dot_dimension_numbers<[1], [0], [0], [1], [0, 0, 1, 1], [], []>} : vector<128x128xbf16>, vector<128x128xbf16>, vector<128x128xf32> -> vector<128x128xf32>
    %c0_20 = arith.constant 0 : index
    %c0_21 = arith.constant 0 : index
    %24 = vector.load %arg9[%c0_20, %c0_21] : memref<1x128xf32, #tpu.memory_space<vmem>>, vector<1x128xf32>
    %25 = vector.broadcast %24 : vector<1x128xf32> to vector<128x128xf32>
    %26 = arith.addf %23, %25 : vector<128x128xf32>
    %27 = math.tanh %26 : vector<128x128xf32>
    %28 = arith.truncf %27 : vector<128x128xf32> to vector<128x128xbf16>
    %c0_22 = arith.constant 0 : index
    %c0_23 = arith.constant 0 : index
    %29 = vector.load %arg10[%c0_22, %c0_23] : memref<128x128xbf16, #tpu.memory_space<vmem>>, vector<128x128xbf16>
    %cst_24 = arith.constant dense<0.000000e+00> : vector<128x128xf32>
    %30 = tpu.matmul %28, %29, %cst_24 {dimension_numbers = #tpu.dot_dimension_numbers<[1], [0], [0], [1], [0, 0, 1, 1], [], []>} : vector<128x128xbf16>, vector<128x128xbf16>, vector<128x128xf32> -> vector<128x128xf32>
    %c0_25 = arith.constant 0 : index
    %c0_26 = arith.constant 0 : index
    %31 = vector.load %arg11[%c0_25, %c0_26] : memref<1x128xf32, #tpu.memory_space<vmem>>, vector<1x128xf32>
    %32 = vector.broadcast %31 : vector<1x128xf32> to vector<128x128xf32>
    %33 = arith.addf %30, %32 : vector<128x128xf32>
    %34 = math.tanh %33 : vector<128x128xf32>
    %35 = arith.truncf %34 : vector<128x128xf32> to vector<128x128xbf16>
    %c0_27 = arith.constant 0 : index
    %c0_28 = arith.constant 0 : index
    %36 = vector.load %arg12[%c0_27, %c0_28] : memref<128x128xbf16, #tpu.memory_space<vmem>>, vector<128x128xbf16>
    %cst_29 = arith.constant dense<0.000000e+00> : vector<128x128xf32>
    %37 = tpu.matmul %35, %36, %cst_29 {dimension_numbers = #tpu.dot_dimension_numbers<[1], [0], [0], [1], [0, 0, 1, 1], [], []>} : vector<128x128xbf16>, vector<128x128xbf16>, vector<128x128xf32> -> vector<128x128xf32>
    %c0_30 = arith.constant 0 : index
    %c0_31 = arith.constant 0 : index
    %38 = vector.load %arg13[%c0_30, %c0_31] : memref<1x128xf32, #tpu.memory_space<vmem>>, vector<1x128xf32>
    %39 = vector.broadcast %38 : vector<1x128xf32> to vector<128x128xf32>
    %40 = arith.addf %37, %39 : vector<128x128xf32>
    %41 = math.tanh %40 : vector<128x128xf32>
    %c0_32 = arith.constant 0 : index
    %c0_33 = arith.constant 0 : index
    %42 = vector.load %arg15[%c0_32, %c0_33] : memref<128x128xf32, #tpu.memory_space<vmem>>, vector<128x128xf32>
    tpu.vector_store %arg15[%c0_32, %c0_33], %41 {strides = array<i32>} : memref<128x128xf32, #tpu.memory_space<vmem>>, vector<128x128xf32>,
    return
  }
  func.func @transform_0(%arg0: i32) -> (i32, i32) {
    %c0_i32 = arith.constant 0 : i32
    %c0_i32_0 = arith.constant 0 : i32
    return %arg0, %c0_i32 : i32, i32
  }
  func.func @transform_1(%arg0: i32) -> (i32, i32) {
    %c0_i32 = arith.constant 0 : i32
    %c0_i32_0 = arith.constant 0 : i32
    %c0_i32_1 = arith.constant 0 : i32
    return %c0_i32, %c0_i32_0 : i32, i32
  }
  func.func @transform_2(%arg0: i32) -> (i32, i32) {
    %c0_i32 = arith.constant 0 : i32
    %c0_i32_0 = arith.constant 0 : i32
    %c0_i32_1 = arith.constant 0 : i32
    return %c0_i32, %c0_i32_0 : i32, i32
  }
  func.func @transform_3(%arg0: i32) -> (i32, i32) {
    %c0_i32 = arith.constant 0 : i32
    %c0_i32_0 = arith.constant 0 : i32
    %c0_i32_1 = arith.constant 0 : i32
    return %c0_i32, %c0_i32_0 : i32, i32
  }
  func.func @transform_4(%arg0: i32) -> (i32, i32) {
    %c0_i32 = arith.constant 0 : i32
    %c0_i32_0 = arith.constant 0 : i32
    %c0_i32_1 = arith.constant 0 : i32
    return %c0_i32, %c0_i32_0 : i32, i32
  }
  func.func @transform_5(%arg0: i32) -> (i32, i32) {
    %c0_i32 = arith.constant 0 : i32
    %c0_i32_0 = arith.constant 0 : i32
    %c0_i32_1 = arith.constant 0 : i32
    return %c0_i32, %c0_i32_0 : i32, i32
  }
  func.func @transform_6(%arg0: i32) -> (i32, i32) {
    %c0_i32 = arith.constant 0 : i32
    %c0_i32_0 = arith.constant 0 : i32
    %c0_i32_1 = arith.constant 0 : i32
    return %c0_i32, %c0_i32_0 : i32, i32
  }
  func.func @transform_7(%arg0: i32) -> (i32, i32) {
    %c0_i32 = arith.constant 0 : i32
    %c0_i32_0 = arith.constant 0 : i32
    %c0_i32_1 = arith.constant 0 : i32
    return %c0_i32, %c0_i32_0 : i32, i32
  }
  func.func @transform_8(%arg0: i32) -> (i32, i32) {
    %c0_i32 = arith.constant 0 : i32
    %c0_i32_0 = arith.constant 0 : i32
    %c0_i32_1 = arith.constant 0 : i32
    return %c0_i32, %c0_i32_0 : i32, i32
  }
  func.func @transform_9(%arg0: i32) -> (i32, i32) {
    %c0_i32 = arith.constant 0 : i32
    %c0_i32_0 = arith.constant 0 : i32
    %c0_i32_1 = arith.constant 0 : i32
    return %c0_i32, %c0_i32_0 : i32, i32
  }
  func.func @transform_10(%arg0: i32) -> (i32, i32) {
    %c0_i32 = arith.constant 0 : i32
    %c0_i32_0 = arith.constant 0 : i32
    %c0_i32_1 = arith.constant 0 : i32
    return %c0_i32, %c0_i32_0 : i32, i32
  }
  func.func @transform_11(%arg0: i32) -> (i32, i32) {
    %c0_i32 = arith.constant 0 : i32
    %c0_i32_0 = arith.constant 0 : i32
    %c0_i32_1 = arith.constant 0 : i32
    return %c0_i32, %c0_i32_0 : i32, i32
  }
  func.func @transform_12(%arg0: i32) -> (i32, i32) {
    %c0_i32 = arith.constant 0 : i32
    %c0_i32_0 = arith.constant 0 : i32
    %c0_i32_1 = arith.constant 0 : i32
    return %c0_i32, %c0_i32_0 : i32, i32
  }
  func.func @transform_13(%arg0: i32) -> (i32, i32) {
    %c0_i32 = arith.constant 0 : i32
    %c0_i32_0 = arith.constant 0 : i32
    return %arg0, %c0_i32 : i32, i32
  }
  func.func @transform_14(%arg0: i32) -> (i32, i32) {
    %c0_i32 = arith.constant 0 : i32
    %c0_i32_0 = arith.constant 0 : i32
    return %arg0, %c0_i32 : i32, i32
  }
}

</mosaic_0001>

<llo_original>
// kernel: tpu_custom_call.1
$region0: #{tpu_custom_call.1}
  #allocation0 [shape = 'u32[]', space=smem, size = 0x4, offset = 0x4, fixed_abs, tag = 'smem constant byte address 0x4 - core index']
  #allocation1 [shape = 'u32[144,128]{1,0:T(1,128)}', space=vmem, size = 0x12000, scoped, tag = 'internal scratch']
  %s0 = inlined_call_operand.hbm [shape: bf16[256,128], index: 0, kind: input, shape index: {}]
  %s1 = inlined_call_operand.hbm [shape: bf16[128,128], index: 1, kind: input, shape index: {}]
  %s2 = inlined_call_operand.vmem [shape: f32[1,128], index: 2, kind: input, shape index: {}]
  %s3 = inlined_call_operand.hbm [shape: bf16[128,128], index: 3, kind: input, shape index: {}]
  %s4 = inlined_call_operand.vmem [shape: f32[1,128], index: 4, kind: input, shape index: {}]
  %s5 = inlined_call_operand.hbm [shape: bf16[128,128], index: 5, kind: input, shape index: {}]
  %s6 = inlined_call_operand.vmem [shape: f32[1,128], index: 6, kind: input, shape index: {}]
  %s7 = inlined_call_operand.hbm [shape: bf16[128,128], index: 7, kind: input, shape index: {}]
  %s8 = inlined_call_operand.vmem [shape: f32[1,128], index: 8, kind: input, shape index: {}]
  %s9 = inlined_call_operand.hbm [shape: bf16[128,128], index: 9, kind: input, shape index: {}]
  %s10 = inlined_call_operand.vmem [shape: f32[1,128], index: 10, kind: input, shape index: {}]
  %s11 = inlined_call_operand.hbm [shape: bf16[128,128], index: 11, kind: input, shape index: {}]
  %s12 = inlined_call_operand.vmem [shape: f32[1,128], index: 12, kind: input, shape index: {}]
  %s13 = inlined_call_operand.hbm [shape: f32[256,128], index: 13, kind: output, shape index: {0}]
  %s14 = inlined_call_operand.hbm [shape: f32[256,128], index: 14, kind: output, shape index: {1}]
  %15 = xla_tuple %s13, %s14
  %s16 = sld [smem:[#allocation0]]
  $region121: #{tpu_custom_call.1} parent=0
    _
  %s18 = ssub.s32 1, %s16
  %s19 = scalar_select 0, %s18, %s16
  $region1: #{tpu_custom_call.1} parent=0
    #allocation2 [shape = 'u8[65536]{0}', space=vmem, size = 0x10000, scoped, tag = 'input window, operand 0']
    #allocation3 [shape = 's32[2]{0}', space=sflag, size = 0x8, scoped, tag = 'scoped memory for tpu_custom_call.1']
    #allocation4 [shape = 's32[2]{0}', space=sflag, size = 0x8, scoped, tag = 'scoped memory for tpu_custom_call.1']
    #allocation5 [shape = 'u8[32768]{0}', space=vmem, size = 0x8000, scoped, tag = 'input window, operand 1, single buffered']
    #allocation6 [shape = 's32[1]{0}', space=sflag, size = 0x4, scoped, tag = 'scoped memory for tpu_custom_call.1']
    #allocation7 [shape = 'u8[32768]{0}', space=vmem, size = 0x8000, scoped, tag = 'input window, operand 3, single buffered']
    #allocation8 [shape = 'u8[32768]{0}', space=vmem, size = 0x8000, scoped, tag = 'input window, operand 5, single buffered']
    #allocation9 [shape = 's32[1]{0}', space=sflag, size = 0x4, scoped, tag = 'scoped memory for tpu_custom_call.1']
    #allocation10 [shape = 'u8[32768]{0}', space=vmem, size = 0x8000, scoped, tag = 'input window, operand 7, single buffered']
    #allocation11 [shape = 'u8[32768]{0}', space=vmem, size = 0x8000, scoped, tag = 'input window, operand 9, single buffered']
    #allocation12 [shape = 's32[1]{0}', space=sflag, size = 0x4, scoped, tag = 'scoped memory for tpu_custom_call.1']
    #allocation13 [shape = 'u8[32768]{0}', space=vmem, size = 0x8000, scoped, tag = 'input window, operand 11, single buffered']
    #allocation14 [shape = 'u8[131072]{0}', space=vmem, size = 0x20000, scoped, tag = 'output window, operand 0']
    #allocation15 [shape = 'u8[131072]{0}', space=vmem, size = 0x20000, scoped, tag = 'output window, operand 1']
    #allocation16 [shape = 's32[2]{0}', space=sflag, size = 0x8, scoped, tag = 'scoped memory for tpu_custom_call.1']
    %20 = vsyncpa [#allocation3], 0
    %s21 = scalar_lea.sflag [#allocation3], 1
    %22 = vsyncpa %s21, 0
    %23 = vsyncpa [#allocation6], 0
    %24 = vsyncpa [#allocation9], 0
    %25 = vsyncpa [#allocation12], 0
    %26 = vsyncpa [#allocation4], 0
    %s27 = scalar_lea.sflag [#allocation4], 1
    %28 = vsyncpa %s27, 0
    %29 = vsyncpa [#allocation16], 0
    %s30 = scalar_lea.sflag [#allocation16], 1
    %31 = vsyncpa %s30, 0
    loop: start=0, step=1, limit=4
    $region2: #{tpu_custom_call.1} parent=1 // loop_pre_header
      _
    $region3: #{tpu_custom_call.1} parent=1 // loop_header
      %s33 = sphi 0, %s37
      %p34 = scmp.ge.s32.totalorder %s33, 4
      %s43 = sphi 0, %s45
      %s46 = sphi 0, %s43
      %s47 = sphi 0, %s46
      %s63 = sphi 0, %s47
      %s67 = sphi 0, %s67
      %s69 = sphi 0, %s67
      %s70 = sphi 0, %s69
      %s84 = sphi 0, %s70
      %s88 = sphi 0, %s88
      %s90 = sphi 0, %s88
      %s91 = sphi 0, %s90
      %s105 = sphi 0, %s91
      %s109 = sphi 0, %s109
      %s111 = sphi 0, %s109
      %s112 = sphi 0, %s111
      %s126 = sphi 0, %s112
      %s130 = sphi 0, %s130
      %s132 = sphi 0, %s130
      %s133 = sphi 0, %s132
      %s147 = sphi 0, %s133
      %s151 = sphi 0, %s151
      %s153 = sphi 0, %s151
      %s154 = sphi 0, %s153
      %s168 = sphi 0, %s154
      %s172 = sphi 0, %s172
      %s174 = sphi 0, %s172
      %s175 = sphi 0, %s174
      %s189 = sphi 0, %s175
      %s193 = sphi 0, %s193
      %s195 = sphi 0, %s193
      %s196 = sphi 0, %s195
      %s210 = sphi 0, %s196
      %s214 = sphi 0, %s214
      %s216 = sphi 0, %s214
      %s217 = sphi 0, %s216
      %s231 = sphi 0, %s217
      %s235 = sphi 0, %s235
      %s237 = sphi 0, %s235
      %s238 = sphi 0, %s237
      %s252 = sphi 0, %s238
      %s256 = sphi 0, %s256
      %s258 = sphi 0, %s256
      %s259 = sphi 0, %s258
      %s273 = sphi 0, %s259
      %s277 = sphi 0, %s277
      %s279 = sphi 0, %s277
      %s280 = sphi 0, %s279
      %s294 = sphi 0, %s280
      %s298 = sphi 0, %s298
      %s300 = sphi 0, %s298
      %s301 = sphi 0, %s300
      %s315 = sphi 0, %s301
      %s321 = sphi 0, %s323
      %s324 = sphi 0, %s321
      %s325 = sphi 0, %s324
      %s341 = sphi 0, %s325
      %s347 = sphi 0, %s349
      %s350 = sphi 0, %s347
      %s351 = sphi 0, %s350
      %s367 = sphi 0, %s351
    $region4: #{tpu_custom_call.1} parent=1 // loop_header_branch
      %36 = sbr.rel (%p34) target = $region8
    $region5: #{tpu_custom_call.1} parent=1 // loop_body
      %s38 = ssub.s32 %s33, 1
      %s39 = ssub.s32 %s33, 2
      %s40 = sadd.s32 %s33, 1
      %s41 = ssub.s32 %s33, %s40
      %p42 = scmp.eq.s32.totalorder %s41, 0
      %s44 = sadd.s32 %s43, 1
      %s45 = scalar_select %p42, %s43, %s44
      %p48 = pneg %p42
      %p49 = scmp.eq.s32.totalorder %s33, 1
      %p50 = por %p48, %p49
      %p51 = scmp.ne.s32.totalorder %s43, %s46
      %p52 = scmp.eq.s32.totalorder %s33, 0
      %p53 = por %p51, %p52
      %p54 = scmp.ne.s32.totalorder %s43, %s46
      %p55 = scmp.eq.s32.totalorder %s38, 1
      %p56 = por %p54, %p55
      %p57 = scmp.ne.s32.totalorder %s46, %s47
      %p58 = scmp.eq.s32.totalorder %s38, 0
      %p59 = por %p57, %p58
      %p60 = scmp.ne.s32.totalorder %s46, %s47
      %p61 = scmp.eq.s32.totalorder %s39, 1
      %p62 = por %p60, %p61
      %p64 = scmp.ne.s32.totalorder %s47, %s63
      %p65 = scmp.eq.s32.totalorder %s39, 0
      %p66 = por %p64, %p65
      %s68 = sadd.s32 %s67, 1
      %p71 = scmp.eq.s32.totalorder %s33, 1
      %p72 = scmp.ne.s32.totalorder %s67, %s69
      %p73 = scmp.eq.s32.totalorder %s33, 0
      %p74 = por %p72, %p73
      %p75 = scmp.ne.s32.totalorder %s67, %s69
      %p76 = scmp.eq.s32.totalorder %s38, 1
      %p77 = por %p75, %p76
      %p78 = scmp.ne.s32.totalorder %s69, %s70
      %p79 = scmp.eq.s32.totalorder %s38, 0
      %p80 = por %p78, %p79
      %p81 = scmp.ne.s32.totalorder %s69, %s70
      %p82 = scmp.eq.s32.totalorder %s39, 1
      %p83 = por %p81, %p82
      %p85 = scmp.ne.s32.totalorder %s70, %s84
      %p86 = scmp.eq.s32.totalorder %s39, 0
      %p87 = por %p85, %p86
      %s89 = sadd.s32 %s88, 1
      %p92 = scmp.eq.s32.totalorder %s33, 1
      %p93 = scmp.ne.s32.totalorder %s88, %s90
      %p94 = scmp.eq.s32.totalorder %s33, 0
      %p95 = por %p93, %p94
      %p96 = scmp.ne.s32.totalorder %s88, %s90
      %p97 = scmp.eq.s32.totalorder %s38, 1
      %p98 = por %p96, %p97
      %p99 = scmp.ne.s32.totalorder %s90, %s91
      %p100 = scmp.eq.s32.totalorder %s38, 0
      %p101 = por %p99, %p100
      %p102 = scmp.ne.s32.totalorder %s90, %s91
      %p103 = scmp.eq.s32.totalorder %s39, 1
      %p104 = por %p102, %p103
      %p106 = scmp.ne.s32.totalorder %s91, %s105
      %p107 = scmp.eq.s32.totalorder %s39, 0
      %p108 = por %p106, %p107
      %s110 = sadd.s32 %s109, 1
      %p113 = scmp.eq.s32.totalorder %s33, 1
      %p114 = scmp.ne.s32.totalorder %s109, %s111
      %p115 = scmp.eq.s32.totalorder %s33, 0
      %p116 = por %p114, %p115
      %p117 = scmp.ne.s32.totalorder %s109, %s111
      %p118 = scmp.eq.s32.totalorder %s38, 1
      %p119 = por %p117, %p118
      %p120 = scmp.ne.s32.totalorder %s111, %s112
      %p121 = scmp.eq.s32.totalorder %s38, 0
      %p122 = por %p120, %p121
      %p123 = scmp.ne.s32.totalorder %s111, %s112
      %p124 = scmp.eq.s32.totalorder %s39, 1
      %p125 = por %p123, %p124
      %p127 = scmp.ne.s32.totalorder %s112, %s126
      %p128 = scmp.eq.s32.totalorder %s39, 0
      %p129 = por %p127, %p128
      %s131 = sadd.s32 %s130, 1
      %p134 = scmp.eq.s32.totalorder %s33, 1
      %p135 = scmp.ne.s32.totalorder %s130, %s132
      %p136 = scmp.eq.s32.totalorder %s33, 0
      %p137 = por %p135, %p136
      %p138 = scmp.ne.s32.totalorder %s130, %s132
      %p139 = scmp.eq.s32.totalorder %s38, 1
      %p140 = por %p138, %p139
      %p141 = scmp.ne.s32.totalorder %s132, %s133
      %p142 = scmp.eq.s32.totalorder %s38, 0
      %p143 = por %p141, %p142
      %p144 = scmp.ne.s32.totalorder %s132, %s133
      %p145 = scmp.eq.s32.totalorder %s39, 1
      %p146 = por %p144, %p145
      %p148 = scmp.ne.s32.totalorder %s133, %s147
      %p149 = scmp.eq.s32.totalorder %s39, 0
      %p150 = por %p148, %p149
      %s152 = sadd.s32 %s151, 1
      %p155 = scmp.eq.s32.totalorder %s33, 1
      %p156 = scmp.ne.s32.totalorder %s151, %s153
      %p157 = scmp.eq.s32.totalorder %s33, 0
      %p158 = por %p156, %p157
      %p159 = scmp.ne.s32.totalorder %s151, %s153
      %p160 = scmp.eq.s32.totalorder %s38, 1
      %p161 = por %p159, %p160
      %p162 = scmp.ne.s32.totalorder %s153, %s154
      %p163 = scmp.eq.s32.totalorder %s38, 0
      %p164 = por %p162, %p163
      %p165 = scmp.ne.s32.totalorder %s153, %s154
      %p166 = scmp.eq.s32.totalorder %s39, 1
      %p167 = por %p165, %p166
      %p169 = scmp.ne.s32.totalorder %s154, %s168
      %p170 = scmp.eq.s32.totalorder %s39, 0
      %p171 = por %p169, %p170
      %s173 = sadd.s32 %s172, 1
      %p176 = scmp.eq.s32.totalorder %s33, 1
      %p177 = scmp.ne.s32.totalorder %s172, %s174
      %p178 = scmp.eq.s32.totalorder %s33, 0
      %p179 = por %p177, %p178
      %p180 = scmp.ne.s32.totalorder %s172, %s174
      %p181 = scmp.eq.s32.totalorder %s38, 1
      %p182 = por %p180, %p181
      %p183 = scmp.ne.s32.totalorder %s174, %s175
      %p184 = scmp.eq.s32.totalorder %s38, 0
      %p185 = por %p183, %p184
      %p186 = scmp.ne.s32.totalorder %s174, %s175
      %p187 = scmp.eq.s32.totalorder %s39, 1
      %p188 = por %p186, %p187
      %p190 = scmp.ne.s32.totalorder %s175, %s189
      %p191 = scmp.eq.s32.totalorder %s39, 0
      %p192 = por %p190, %p191
      %s194 = sadd.s32 %s193, 1
      %p197 = scmp.eq.s32.totalorder %s33, 1
      %p198 = scmp.ne.s32.totalorder %s193, %s195
      %p199 = scmp.eq.s32.totalorder %s33, 0
      %p200 = por %p198, %p199
      %p201 = scmp.ne.s32.totalorder %s193, %s195
      %p202 = scmp.eq.s32.totalorder %s38, 1
      %p203 = por %p201, %p202
      %p204 = scmp.ne.s32.totalorder %s195, %s196
      %p205 = scmp.eq.s32.totalorder %s38, 0
      %p206 = por %p204, %p205
      %p207 = scmp.ne.s32.totalorder %s195, %s196
      %p208 = scmp.eq.s32.totalorder %s39, 1
      %p209 = por %p207, %p208
      %p211 = scmp.ne.s32.totalorder %s196, %s210
      %p212 = scmp.eq.s32.totalorder %s39, 0
      %p213 = por %p211, %p212
      %s215 = sadd.s32 %s214, 1
      %p218 = scmp.eq.s32.totalorder %s33, 1
      %p219 = scmp.ne.s32.totalorder %s214, %s216
      %p220 = scmp.eq.s32.totalorder %s33, 0
      %p221 = por %p219, %p220
      %p222 = scmp.ne.s32.totalorder %s214, %s216
      %p223 = scmp.eq.s32.totalorder %s38, 1
      %p224 = por %p222, %p223
      %p225 = scmp.ne.s32.totalorder %s216, %s217
      %p226 = scmp.eq.s32.totalorder %s38, 0
      %p227 = por %p225, %p226
      %p228 = scmp.ne.s32.totalorder %s216, %s217
      %p229 = scmp.eq.s32.totalorder %s39, 1
      %p230 = por %p228, %p229
      %p232 = scmp.ne.s32.totalorder %s217, %s231
      %p233 = scmp.eq.s32.totalorder %s39, 0
      %p234 = por %p232, %p233
      %s236 = sadd.s32 %s235, 1
      %p239 = scmp.eq.s32.totalorder %s33, 1
      %p240 = scmp.ne.s32.totalorder %s235, %s237
      %p241 = scmp.eq.s32.totalorder %s33, 0
      %p242 = por %p240, %p241
      %p243 = scmp.ne.s32.totalorder %s235, %s237
      %p244 = scmp.eq.s32.totalorder %s38, 1
      %p245 = por %p243, %p244
      %p246 = scmp.ne.s32.totalorder %s237, %s238
      %p247 = scmp.eq.s32.totalorder %s38, 0
      %p248 = por %p246, %p247
      %p249 = scmp.ne.s32.totalorder %s237, %s238
      %p250 = scmp.eq.s32.totalorder %s39, 1
      %p251 = por %p249, %p250
      %p253 = scmp.ne.s32.totalorder %s238, %s252
      %p254 = scmp.eq.s32.totalorder %s39, 0
      %p255 = por %p253, %p254
      %s257 = sadd.s32 %s256, 1
      %p260 = scmp.eq.s32.totalorder %s33, 1
      %p261 = scmp.ne.s32.totalorder %s256, %s258
      %p262 = scmp.eq.s32.totalorder %s33, 0
      %p263 = por %p261, %p262
      %p264 = scmp.ne.s32.totalorder %s256, %s258
      %p265 = scmp.eq.s32.totalorder %s38, 1
      %p266 = por %p264, %p265
      %p267 = scmp.ne.s32.totalorder %s258, %s259
      %p268 = scmp.eq.s32.totalorder %s38, 0
      %p269 = por %p267, %p268
      %p270 = scmp.ne.s32.totalorder %s258, %s259
      %p271 = scmp.eq.s32.totalorder %s39, 1
      %p272 = por %p270, %p271
      %p274 = scmp.ne.s32.totalorder %s259, %s273
      %p275 = scmp.eq.s32.totalorder %s39, 0
      %p276 = por %p274, %p275
      %s278 = sadd.s32 %s277, 1
      %p281 = scmp.eq.s32.totalorder %s33, 1
      %p282 = scmp.ne.s32.totalorder %s277, %s279
      %p283 = scmp.eq.s32.totalorder %s33, 0
      %p284 = por %p282, %p283
      %p285 = scmp.ne.s32.totalorder %s277, %s279
      %p286 = scmp.eq.s32.totalorder %s38, 1
      %p287 = por %p285, %p286
      %p288 = scmp.ne.s32.totalorder %s279, %s280
      %p289 = scmp.eq.s32.totalorder %s38, 0
      %p290 = por %p288, %p289
      %p291 = scmp.ne.s32.totalorder %s279, %s280
      %p292 = scmp.eq.s32.totalorder %s39, 1
      %p293 = por %p291, %p292
      %p295 = scmp.ne.s32.totalorder %s280, %s294
      %p296 = scmp.eq.s32.totalorder %s39, 0
      %p297 = por %p295, %p296
      %s299 = sadd.s32 %s298, 1
      %p302 = scmp.eq.s32.totalorder %s33, 1
      %p303 = scmp.ne.s32.totalorder %s298, %s300
      %p304 = scmp.eq.s32.totalorder %s33, 0
      %p305 = por %p303, %p304
      %p306 = scmp.ne.s32.totalorder %s298, %s300
      %p307 = scmp.eq.s32.totalorder %s38, 1
      %p308 = por %p306, %p307
      %p309 = scmp.ne.s32.totalorder %s300, %s301
      %p310 = scmp.eq.s32.totalorder %s38, 0
      %p311 = por %p309, %p310
      %p312 = scmp.ne.s32.totalorder %s300, %s301
      %p313 = scmp.eq.s32.totalorder %s39, 1
      %p314 = por %p312, %p313
      %p316 = scmp.ne.s32.totalorder %s301, %s315
      %p317 = scmp.eq.s32.totalorder %s39, 0
      %p318 = por %p316, %p317
      %s319 = ssub.s32 %s33, %s40
      %p320 = scmp.eq.s32.totalorder %s319, 0
      %s322 = sadd.s32 %s321, 1
      %s323 = scalar_select %p320, %s321, %s322
      %p326 = pneg %p320
      %p327 = scmp.eq.s32.totalorder %s33, 1
      %p328 = por %p326, %p327
      %p329 = scmp.ne.s32.totalorder %s321, %s324
      %p330 = scmp.eq.s32.totalorder %s33, 0
      %p331 = por %p329, %p330
      %p332 = scmp.ne.s32.totalorder %s321, %s324
      %p333 = scmp.eq.s32.totalorder %s38, 1
      %p334 = por %p332, %p333
      %p335 = scmp.ne.s32.totalorder %s324, %s325
      %p336 = scmp.eq.s32.totalorder %s38, 0
      %p337 = por %p335, %p336
      %p338 = scmp.ne.s32.totalorder %s324, %s325
      %p339 = scmp.eq.s32.totalorder %s39, 1
      %p340 = por %p338, %p339
      %p342 = scmp.ne.s32.totalorder %s325, %s341
      %p343 = scmp.eq.s32.totalorder %s39, 0
      %p344 = por %p342, %p343
      %s345 = ssub.s32 %s33, %s40
      %p346 = scmp.eq.s32.totalorder %s345, 0
      %s348 = sadd.s32 %s347, 1
      %s349 = scalar_select %p346, %s347, %s348
      %p352 = pneg %p346
      %p353 = scmp.eq.s32.totalorder %s33, 1
      %p354 = por %p352, %p353
      %p355 = scmp.ne.s32.totalorder %s347, %s350
      %p356 = scmp.eq.s32.totalorder %s33, 0
      %p357 = por %p355, %p356
      %p358 = scmp.ne.s32.totalorder %s347, %s350
      %p359 = scmp.eq.s32.totalorder %s38, 1
      %p360 = por %p358, %p359
      %p361 = scmp.ne.s32.totalorder %s350, %s351
      %p362 = scmp.eq.s32.totalorder %s38, 0
      %p363 = por %p361, %p362
      %p364 = scmp.ne.s32.totalorder %s350, %s351
      %p365 = scmp.eq.s32.totalorder %s39, 1
      %p366 = por %p364, %p365
      %p368 = scmp.ne.s32.totalorder %s351, %s367
      %p369 = scmp.eq.s32.totalorder %s39, 0
      %p370 = por %p368, %p369
      %p371 = scmp.le.s32.totalorder 1, %s33
      %p372 = scmp.lt.s32.totalorder %s33, 3
      %p373 = pnand %p371, %p372
      %p374 = pneg %p373
      // Predicated region
      $region9: #{tpu_custom_call.1} parent=5 // pred_check
        _
      $region10: #{tpu_custom_call.1} parent=5 // pred_check_branch
        %376 = sbr.rel (%p373) target = $region12
      $region11: #{tpu_custom_call.1} parent=5 // pred_region
        %s377 = ssub.s32 %s33, 1
        // Predicated region
        $region13: #{tpu_custom_call.1} parent=11 // pred_check
          %p378 = pneg %p80
        $region14: #{tpu_custom_call.1} parent=11 // pred_check_branch
          %380 = sbr.rel (%p378) target = $region16
        $region15: #{tpu_custom_call.1} parent=11 // pred_region
          %s382 = ssub.s32 1024, 1024
          %383 = vsyncadd [#allocation6], %s382
          %s384 = sshll.u32 [#allocation5], 4
          %s385 = int_to_ptr.vmem [resolvable:$true] %s384
          %390 = dma.hbm_to_vmem [thread:$0]  %s1, 1024, %s385, [#allocation6], 64, 64, 4
        $region16: #{tpu_custom_call.1} parent=11 // pred_fallthru
          _
        // Predicated region
        $region17: #{tpu_custom_call.1} parent=11 // pred_check
          %p391 = pneg %p101
        $region18: #{tpu_custom_call.1} parent=11 // pred_check_branch
          %393 = sbr.rel (%p391) target = $region20
        $region19: #{tpu_custom_call.1} parent=11 // pred_region
          _
        $region20: #{tpu_custom_call.1} parent=11 // pred_fallthru
          _
        // Predicated region
        $region21: #{tpu_custom_call.1} parent=11 // pred_check
          %p394 = pneg %p122
        $region22: #{tpu_custom_call.1} parent=11 // pred_check_branch
          %396 = sbr.rel (%p394) target = $region24
        $region23: #{tpu_custom_call.1} parent=11 // pred_region
          %s398 = ssub.s32 1024, 1024
          %399 = vsyncadd [#allocation6], %s398
          %s400 = sshll.u32 [#allocation7], 4
          %s401 = int_to_ptr.vmem [resolvable:$true] %s400
          %406 = dma.hbm_to_vmem [thread:$0]  %s3, 1024, %s401, [#allocation6], 64, 64, 4
        $region24: #{tpu_custom_call.1} parent=11 // pred_fallthru
          _
        // Predicated region
        $region25: #{tpu_custom_call.1} parent=11 // pred_check
          %p407 = pneg %p143
        $region26: #{tpu_custom_call.1} parent=11 // pred_check_branch
          %409 = sbr.rel (%p407) target = $region28
        $region27: #{tpu_custom_call.1} parent=11 // pred_region
          _
        $region28: #{tpu_custom_call.1} parent=11 // pred_fallthru
          _
        // Predicated region
        $region29: #{tpu_custom_call.1} parent=11 // pred_check
          %p410 = pneg %p164
        $region30: #{tpu_custom_call.1} parent=11 // pred_check_branch
          %412 = sbr.rel (%p410) target = $region32
        $region31: #{tpu_custom_call.1} parent=11 // pred_region
          %s414 = ssub.s32 1024, 1024
          %415 = vsyncadd [#allocation9], %s414
          %s416 = sshll.u32 [#allocation8], 4
          %s417 = int_to_ptr.vmem [resolvable:$true] %s416
          %422 = dma.hbm_to_vmem [thread:$0]  %s5, 1024, %s417, [#allocation9], 64, 64, 4
        $region32: #{tpu_custom_call.1} parent=11 // pred_fallthru
          _
        // Predicated region
        $region33: #{tpu_custom_call.1} parent=11 // pred_check
          %p423 = pneg %p185
        $region34: #{tpu_custom_call.1} parent=11 // pred_check_branch
          %425 = sbr.rel (%p423) target = $region36
        $region35: #{tpu_custom_call.1} parent=11 // pred_region
          _
        $region36: #{tpu_custom_call.1} parent=11 // pred_fallthru
          _
        // Predicated region
        $region37: #{tpu_custom_call.1} parent=11 // pred_check
          %p426 = pneg %p206
        $region38: #{tpu_custom_call.1} parent=11 // pred_check_branch
          %428 = sbr.rel (%p426) target = $region40
        $region39: #{tpu_custom_call.1} parent=11 // pred_region
          %s430 = ssub.s32 1024, 1024
          %431 = vsyncadd [#allocation9], %s430
          %s432 = sshll.u32 [#allocation10], 4
          %s433 = int_to_ptr.vmem [resolvable:$true] %s432
          %438 = dma.hbm_to_vmem [thread:$0]  %s7, 1024, %s433, [#allocation9], 64, 64, 4
        $region40: #{tpu_custom_call.1} parent=11 // pred_fallthru
          _
        // Predicated region
        $region41: #{tpu_custom_call.1} parent=11 // pred_check
          %p439 = pneg %p227
        $region42: #{tpu_custom_call.1} parent=11 // pred_check_branch
          %441 = sbr.rel (%p439) target = $region44
        $region43: #{tpu_custom_call.1} parent=11 // pred_region
          _
        $region44: #{tpu_custom_call.1} parent=11 // pred_fallthru
          _
        // Predicated region
        $region45: #{tpu_custom_call.1} parent=11 // pred_check
          %p442 = pneg %p248
        $region46: #{tpu_custom_call.1} parent=11 // pred_check_branch
          %444 = sbr.rel (%p442) target = $region48
        $region47: #{tpu_custom_call.1} parent=11 // pred_region
          %s446 = ssub.s32 1024, 1024
          %447 = vsyncadd [#allocation12], %s446
          %s448 = sshll.u32 [#allocation11], 4
          %s449 = int_to_ptr.vmem [resolvable:$true] %s448
          %454 = dma.hbm_to_vmem [thread:$0]  %s9, 1024, %s449, [#allocation12], 64, 64, 4
        $region48: #{tpu_custom_call.1} parent=11 // pred_fallthru
          _
        // Predicated region
        $region49: #{tpu_custom_call.1} parent=11 // pred_check
          %p455 = pneg %p269
        $region50: #{tpu_custom_call.1} parent=11 // pred_check_branch
          %457 = sbr.rel (%p455) target = $region52
        $region51: #{tpu_custom_call.1} parent=11 // pred_region
          _
        $region52: #{tpu_custom_call.1} parent=11 // pred_fallthru
          _
        // Predicated region
        $region53: #{tpu_custom_call.1} parent=11 // pred_check
          %p458 = pneg %p290
        $region54: #{tpu_custom_call.1} parent=11 // pred_check_branch
          %460 = sbr.rel (%p458) target = $region56
        $region55: #{tpu_custom_call.1} parent=11 // pred_region
          %s462 = ssub.s32 1024, 1024
          %463 = vsyncadd [#allocation12], %s462
          %s464 = sshll.u32 [#allocation13], 4
          %s465 = int_to_ptr.vmem [resolvable:$true] %s464
          %470 = dma.hbm_to_vmem [thread:$0]  %s11, 1024, %s465, [#allocation12], 64, 64, 4
        $region56: #{tpu_custom_call.1} parent=11 // pred_fallthru
          _
        // Predicated region
        $region57: #{tpu_custom_call.1} parent=11 // pred_check
          %p471 = pneg %p311
        $region58: #{tpu_custom_call.1} parent=11 // pred_check_branch
          %473 = sbr.rel (%p471) target = $region60
        $region59: #{tpu_custom_call.1} parent=11 // pred_region
          _
        $region60: #{tpu_custom_call.1} parent=11 // pred_fallthru
          _
      $region12: #{tpu_custom_call.1} parent=5 // pred_fallthru
        _
      %p474 = scmp.lt.s32.totalorder %s33, 2
      // Predicated region
      $region61: #{tpu_custom_call.1} parent=5 // pred_check
        %p475 = pneg %p474
      $region62: #{tpu_custom_call.1} parent=5 // pred_check_branch
        %477 = sbr.rel (%p475) target = $region64
      $region63: #{tpu_custom_call.1} parent=5 // pred_region
        // Predicated region
        $region65: #{tpu_custom_call.1} parent=63 // pred_check
          %p478 = pneg %p53
        $region66: #{tpu_custom_call.1} parent=63 // pred_check_branch
          %480 = sbr.rel (%p478) target = $region68
        $region67: #{tpu_custom_call.1} parent=63 // pred_region
          %s481 = sand.u32 %s43, 1
          %s482 = scalar_lea.sflag [#allocation3], %s481
          %s483 = sand.u32 %s43, 1
          %s484 = smul.addr %s483, 64
          %s485 = scalar_lea.vmem [#allocation2], %s484
          %s486 = smul.u32 16, %s33
          %s488 = ssub.s32 1024, 1024
          %489 = vsyncadd %s482, %s488
          %s490 = smul.addr %s486, 64
          %s491 = scalar_lea.hbm %s0, %s490
          %s492 = sshll.u32 %s485, 4
          %s493 = int_to_ptr.vmem [resolvable:$true] %s492
          %498 = dma.hbm_to_vmem [thread:$0]  %s491, 1024, %s493, %s482, 64, 64, 4
        $region68: #{tpu_custom_call.1} parent=63 // pred_fallthru
          _
      $region64: #{tpu_custom_call.1} parent=5 // pred_fallthru
        _
      %p499 = scmp.le.s32.totalorder 1, %s33
      %p500 = scmp.lt.s32.totalorder %s33, 3
      %p501 = pnand %p499, %p500
      %p502 = pneg %p501
      // Predicated region
      $region69: #{tpu_custom_call.1} parent=5 // pred_check
        _
      $region70: #{tpu_custom_call.1} parent=5 // pred_check_branch
        %504 = sbr.rel (%p501) target = $region72
      $region71: #{tpu_custom_call.1} parent=5 // pred_region
        %s505 = ssub.s32 %s33, 1
        %s506 = sand.u32 %s46, 1
        %s507 = scalar_lea.sflag [#allocation3], %s506
        %s508 = sand.u32 %s46, 1
        %s509 = smul.addr %s508, 64
        %s510 = scalar_lea.vmem [#allocation2], %s509
        // Predicated region
        $region73: #{tpu_custom_call.1} parent=71 // pred_check
          %p511 = pneg %p59
        $region74: #{tpu_custom_call.1} parent=71 // pred_check_branch
          %513 = sbr.rel (%p511) target = $region76
        $region75: #{tpu_custom_call.1} parent=71 // pred_region
          %514 = dma.done %s507, 1024
        $region76: #{tpu_custom_call.1} parent=71 // pred_fallthru
          _
        // Predicated region
        $region77: #{tpu_custom_call.1} parent=71 // pred_check
          %p515 = pneg %p80
        $region78: #{tpu_custom_call.1} parent=71 // pred_check_branch
          %517 = sbr.rel (%p515) target = $region80
        $region79: #{tpu_custom_call.1} parent=71 // pred_region
          %518 = dma.done [#allocation6], 1024
        $region80: #{tpu_custom_call.1} parent=71 // pred_fallthru
          _
        // Predicated region
        $region81: #{tpu_custom_call.1} parent=71 // pred_check
          %p519 = pneg %p122
        $region82: #{tpu_custom_call.1} parent=71 // pred_check_branch
          %521 = sbr.rel (%p519) target = $region84
        $region83: #{tpu_custom_call.1} parent=71 // pred_region
          %522 = dma.done [#allocation6], 1024
        $region84: #{tpu_custom_call.1} parent=71 // pred_fallthru
          _
        // Predicated region
        $region85: #{tpu_custom_call.1} parent=71 // pred_check
          %p523 = pneg %p164
        $region86: #{tpu_custom_call.1} parent=71 // pred_check_branch
          %525 = sbr.rel (%p523) target = $region88
        $region87: #{tpu_custom_call.1} parent=71 // pred_region
          %526 = dma.done [#allocation9], 1024
        $region88: #{tpu_custom_call.1} parent=71 // pred_fallthru
          _
        // Predicated region
        $region89: #{tpu_custom_call.1} parent=71 // pred_check
          %p527 = pneg %p206
        $region90: #{tpu_custom_call.1} parent=71 // pred_check_branch
          %529 = sbr.rel (%p527) target = $region92
        $region91: #{tpu_custom_call.1} parent=71 // pred_region
          %530 = dma.done [#allocation9], 1024
        $region92: #{tpu_custom_call.1} parent=71 // pred_fallthru
          _
        // Predicated region
        $region93: #{tpu_custom_call.1} parent=71 // pred_check
          %p531 = pneg %p248
        $region94: #{tpu_custom_call.1} parent=71 // pred_check_branch
          %533 = sbr.rel (%p531) target = $region96
        $region95: #{tpu_custom_call.1} parent=71 // pred_region
          %534 = dma.done [#allocation12], 1024
        $region96: #{tpu_custom_call.1} parent=71 // pred_fallthru
          _
        // Predicated region
        $region97: #{tpu_custom_call.1} parent=71 // pred_check
          %p535 = pneg %p290
        $region98: #{tpu_custom_call.1} parent=71 // pred_check_branch
          %537 = sbr.rel (%p535) target = $region100
        $region99: #{tpu_custom_call.1} parent=71 // pred_region
          %538 = dma.done [#allocation12], 1024
        $region100: #{tpu_custom_call.1} parent=71 // pred_fallthru
          _
        %s539 = sand.u32 %s46, 1
        %s540 = scalar_lea.sflag [#allocation3], %s539
        %s541 = sand.u32 %s46, 1
        %s542 = smul.addr %s541, 64
        %s543 = scalar_lea.vmem [#allocation2], %s542
        %p544 = pneg %p59
        %p545 = pneg %p56
        %p546 = pneg %p80
        %p547 = pneg %p77
        %p548 = pneg %p101
        %p549 = pneg %p98
        %p550 = pneg %p122
        %p551 = pneg %p119
        %p552 = pneg %p143
        %p553 = pneg %p140
        %p554 = pneg %p164
        %p555 = pneg %p161
        %p556 = pneg %p185
        %p557 = pneg %p182
        %p558 = pneg %p206
        %p559 = pneg %p203
        %p560 = pneg %p227
        %p561 = pneg %p224
        %p562 = pneg %p248
        %p563 = pneg %p245
        %p564 = pneg %p269
        %p565 = pneg %p266
        %p566 = pneg %p290
        %p567 = pneg %p287
        %p568 = pneg %p311
        %p569 = pneg %p308
        %p570 = pneg %p337
        %p571 = pneg %p334
        %s572 = sand.u32 %s324, 1
        %s573 = scalar_lea.sflag [#allocation4], %s572
        %s574 = sand.u32 %s324, 1
        %s575 = smul.addr %s574, 128
        %s576 = scalar_lea.vmem [#allocation14], %s575
        %p577 = pneg %p363
        %p578 = pneg %p360
        %s579 = sand.u32 %s350, 1
        %s580 = scalar_lea.sflag [#allocation16], %s579
        %s581 = sand.u32 %s350, 1
        %s582 = smul.addr %s581, 128
        %s583 = scalar_lea.vmem [#allocation15], %s582
        %s584 = smul.u32 16, %s38
        %s585 = smul.u32 16, %s38
        %s586 = smul.u32 16, %s38
        %v588 = vld [vmem:[%s510] sm:$0xf]
        %v589 = vld [vmem:[%s510 + $0x4] sm:$0xf]
        %v590 = vld [vmem:[%s510 + $0x8] sm:$0xf]
        %v591 = vld [vmem:[%s510 + $0xc] sm:$0xf]
        %v592 = vld [vmem:[%s510 + $0x10] sm:$0xf]
        %v593 = vld [vmem:[%s510 + $0x14] sm:$0xf]
        %v594 = vld [vmem:[%s510 + $0x18] sm:$0xf]
        %v595 = vld [vmem:[%s510 + $0x1c] sm:$0xf]
        %v596 = vld [vmem:[%s510 + $0x20] sm:$0xf]
        %v597 = vld [vmem:[%s510 + $0x24] sm:$0xf]
        %v598 = vld [vmem:[%s510 + $0x28] sm:$0xf]
        %v599 = vld [vmem:[%s510 + $0x2c] sm:$0xf]
        %v600 = vld [vmem:[%s510 + $0x30] sm:$0xf]
        %v601 = vld [vmem:[%s510 + $0x34] sm:$0xf]
        %v602 = vld [vmem:[%s510 + $0x38] sm:$0xf]
        %v603 = vld [vmem:[%s510 + $0x3c] sm:$0xf]
        %v604 = vld [vmem:[#allocation5] sm:$0xf]
        %v605 = vld [vmem:[#allocation5 + $0x4] sm:$0xf]
        %v606 = vld [vmem:[#allocation5 + $0x8] sm:$0xf]
        %v607 = vld [vmem:[#allocation5 + $0xc] sm:$0xf]
        %v608 = vld [vmem:[#allocation5 + $0x10] sm:$0xf]
        %v609 = vld [vmem:[#allocation5 + $0x14] sm:$0xf]
        %v610 = vld [vmem:[#allocation5 + $0x18] sm:$0xf]
        %v611 = vld [vmem:[#allocation5 + $0x1c] sm:$0xf]
        %v612 = vld [vmem:[#allocation5 + $0x20] sm:$0xf]
        %v613 = vld [vmem:[#allocation5 + $0x24] sm:$0xf]
        %v614 = vld [vmem:[#allocation5 + $0x28] sm:$0xf]
        %v615 = vld [vmem:[#allocation5 + $0x2c] sm:$0xf]
        %v616 = vld [vmem:[#allocation5 + $0x30] sm:$0xf]
        %v617 = vld [vmem:[#allocation5 + $0x34] sm:$0xf]
        %v618 = vld [vmem:[#allocation5 + $0x38] sm:$0xf]
        %v619 = vld [vmem:[#allocation5 + $0x3c] sm:$0xf]
        %v620 = vld [vmem:[%s2] sm:$0x1]
        %v622 = vlaneseq
        %v623 = vshrl.u32 %v622, 7
        %v624 = vsub.s32 0, %v623
        %v625 = vrot.slane %v620, %v624
        %v643 = vunpack.c.l.b16 %v588
        %v644 = vunpack.c.l.b16 %v589
        %v645 = vunpack.c.l.b16 %v590
        %v646 = vunpack.c.l.b16 %v591
        %v647 = vunpack.c.l.b16 %v592
        %v648 = vunpack.c.l.b16 %v593
        %v649 = vunpack.c.l.b16 %v594
        %v650 = vunpack.c.l.b16 %v595
        %v651 = vunpack.c.l.b16 %v596
        %v652 = vunpack.c.l.b16 %v597
        %v653 = vunpack.c.l.b16 %v598
        %v654 = vunpack.c.l.b16 %v599
        %v655 = vunpack.c.l.b16 %v600
        %v656 = vunpack.c.l.b16 %v601
        %v657 = vunpack.c.l.b16 %v602
        %v658 = vunpack.c.l.b16 %v603
        %v659 = vpack.c.b16 %v644, %v643
        %v660 = vpack.c.b16 %v646, %v645
        %v661 = vpack.c.b16 %v648, %v647
        %v662 = vpack.c.b16 %v650, %v649
        %v663 = vpack.c.b16 %v652, %v651
        %v664 = vpack.c.b16 %v654, %v653
        %v665 = vpack.c.b16 %v656, %v655
        %v666 = vpack.c.b16 %v658, %v657
        %v691 = vunpack.c.l.b16 %v604
        %v692 = vunpack.c.l.b16 %v605
        %v693 = vunpack.c.l.b16 %v606
        %v694 = vunpack.c.l.b16 %v607
        %v695 = vunpack.c.l.b16 %v608
        %v696 = vunpack.c.l.b16 %v609
        %v697 = vunpack.c.l.b16 %v610
        %v698 = vunpack.c.l.b16 %v611
        %v699 = vunpack.c.l.b16 %v612
        %v700 = vunpack.c.l.b16 %v613
        %v701 = vunpack.c.l.b16 %v614
        %v702 = vunpack.c.l.b16 %v615
        %v703 = vunpack.c.l.b16 %v616
        %v704 = vunpack.c.l.b16 %v617
        %v705 = vunpack.c.l.b16 %v618
        %v706 = vunpack.c.l.b16 %v619
        %v707 = vpack.c.b16 %v692, %v691
        %v708 = vpack.c.b16 %v694, %v693
        %v709 = vpack.c.b16 %v696, %v695
        %v710 = vpack.c.b16 %v698, %v697
        %v711 = vpack.c.b16 %v700, %v699
        %v712 = vpack.c.b16 %v702, %v701
        %v713 = vpack.c.b16 %v704, %v703
        %v714 = vpack.c.b16 %v706, %v705
        %723 = vmatprep.subr.bf16.mxu0 0
        %724 = vmatpush1.bf16.msra.mxu0 %v707
        %725 = vmatprep.subr.bf16.mxu0 0
        %726 = vmatpush1.bf16.msra.mxu0 %v708
        %727 = vmatprep.subr.bf16.mxu0 0
        %728 = vmatpush1.bf16.msra.mxu0 %v709
        %729 = vmatprep.subr.bf16.mxu0 0
        %730 = vmatpush1.bf16.msra.mxu0 %v710
        %731 = vmatprep.subr.bf16.mxu0 0
        %732 = vmatpush1.bf16.msra.mxu0 %v711
        %733 = vmatprep.subr.bf16.mxu0 0
        %734 = vmatpush1.bf16.msra.mxu0 %v712
        %735 = vmatprep.subr.bf16.mxu0 0
        %736 = vmatpush1.bf16.msra.mxu0 %v713
        %737 = vmatprep.subr.bf16.mxu0 0
        %738 = vmatpush1.bf16.msra.mxu0 %v714
        %739 = vmatprep.subr.bf16.mxu0 0
        %740 = vmatpush1.bf16.msra.mxu0 0
        %741 = vmatprep.subr.bf16.mxu0 0
        %742 = vmatpush1.bf16.msra.mxu0 0
        %743 = vmatprep.subr.bf16.mxu0 0
        %744 = vmatpush1.bf16.msra.mxu0 0
        %745 = vmatprep.subr.bf16.mxu0 0
        %746 = vmatpush1.bf16.msra.mxu0 0
        %747 = vmatprep.subr.bf16.mxu0 0
        %748 = vmatpush1.bf16.msra.mxu0 0
        %749 = vmatprep.subr.bf16.mxu0 0
        %750 = vmatpush1.bf16.msra.mxu0 0
        %751 = vmatprep.subr.bf16.mxu0 0
        %752 = vmatpush1.bf16.msra.mxu0 0
        %753 = vmatprep.subr.bf16.mxu0 0
        %754 = vmatpush1.bf16.msra.mxu0 0
        %755 = vmatprep.mubr.bf16.mxu0 0
        %756 = vmatmul.mubr.bf16.gmra.mrb[0].mxu0 %v659
        %v757 = vpop.f32.mrb[0].mxu0
        %v758 = vadd.f32 %v625, %v757
        %v759 = vpop.f32.mrb[0].mxu0
        %v760 = vpop.f32.mrb[0].mxu0
        %v761 = vadd.f32 %v625, %v760
        %v762 = vpop.f32.mrb[0].mxu0
        %763 = vmatprep.mubr.bf16.mxu0 0
        %764 = vmatmul.mubr.bf16.gmra.mrb[0].mxu0 %v660
        %v765 = vpop.f32.mrb[0].mxu0
        %v766 = vadd.f32 %v625, %v765
        %v767 = vpop.f32.mrb[0].mxu0
        %v768 = vpop.f32.mrb[0].mxu0
        %v769 = vadd.f32 %v625, %v768
        %v770 = vpop.f32.mrb[0].mxu0
        %771 = vmatprep.mubr.bf16.mxu0 0
        %772 = vmatmul.mubr.bf16.gmra.mrb[0].mxu0 %v661
        %v773 = vpop.f32.mrb[0].mxu0
        %v774 = vadd.f32 %v625, %v773
        %v775 = vpop.f32.mrb[0].mxu0
        %v776 = vpop.f32.mrb[0].mxu0
        %v777 = vadd.f32 %v625, %v776
        %v778 = vpop.f32.mrb[0].mxu0
        %779 = vmatprep.mubr.bf16.mxu0 0
        %780 = vmatmul.mubr.bf16.gmra.mrb[0].mxu0 %v662
        %v781 = vpop.f32.mrb[0].mxu0
        %v782 = vadd.f32 %v625, %v781
        %v783 = vpop.f32.mrb[0].mxu0
        %v784 = vpop.f32.mrb[0].mxu0
        %v785 = vadd.f32 %v625, %v784
        %v786 = vpop.f32.mrb[0].mxu0
        %787 = vmatprep.mubr.bf16.mxu0 0
        %788 = vmatmul.mubr.bf16.gmra.mrb[0].mxu0 %v663
        %v789 = vpop.f32.mrb[0].mxu0
        %v790 = vadd.f32 %v625, %v789
        %v791 = vpop.f32.mrb[0].mxu0
        %v792 = vpop.f32.mrb[0].mxu0
        %v793 = vadd.f32 %v625, %v792
        %v794 = vpop.f32.mrb[0].mxu0
        %795 = vmatprep.mubr.bf16.mxu0 0
        %796 = vmatmul.mubr.bf16.gmra.mrb[0].mxu0 %v664
        %v797 = vpop.f32.mrb[0].mxu0
        %v798 = vadd.f32 %v625, %v797
        %v799 = vpop.f32.mrb[0].mxu0
        %v800 = vpop.f32.mrb[0].mxu0
        %v801 = vadd.f32 %v625, %v800
        %v802 = vpop.f32.mrb[0].mxu0
        %803 = vmatprep.mubr.bf16.mxu0 0
        %804 = vmatmul.mubr.bf16.gmra.mrb[0].mxu0 %v665
        %v805 = vpop.f32.mrb[0].mxu0
        %v806 = vadd.f32 %v625, %v805
        %v807 = vpop.f32.mrb[0].mxu0
        %v808 = vpop.f32.mrb[0].mxu0
        %v809 = vadd.f32 %v625, %v808
        %v810 = vpop.f32.mrb[0].mxu0
        %811 = vmatprep.mubr.bf16.mxu0 0
        %812 = vmatmul.mubr.bf16.gmra.mrb[0].mxu0 %v666
        %v813 = vpop.f32.mrb[0].mxu0
        %v814 = vadd.f32 %v625, %v813
        %v815 = vpop.f32.mrb[0].mxu0
        %v816 = vpop.f32.mrb[0].mxu0
        %v817 = vadd.f32 %v625, %v816
        %v818 = vpop.f32.mrb[0].mxu0
        %819 = vdwg.mxu0
        %v820 = vtanh.pop %v758
        %v821 = vtanh.pop %v761
        %v822 = vtanh.pop %v766
        %v823 = vtanh.pop %v769
        %v824 = vtanh.pop %v774
        %v825 = vtanh.pop %v777
        %v826 = vtanh.pop %v782
        %v827 = vtanh.pop %v785
        %v828 = vtanh.pop %v790
        %v829 = vtanh.pop %v793
        %v830 = vtanh.pop %v798
        %v831 = vtanh.pop %v801
        %v832 = vtanh.pop %v806
        %v833 = vtanh.pop %v809
        %v834 = vtanh.pop %v814
        %v835 = vtanh.pop %v817
        %v836 = vpack.c.bf16 %v821, %v820
        %v837 = vpack.c.bf16 %v823, %v822
        %v838 = vpack.c.bf16 %v825, %v824
        %v839 = vpack.c.bf16 %v827, %v826
        %v840 = vpack.c.bf16 %v829, %v828
        %v841 = vpack.c.bf16 %v831, %v830
        %v842 = vpack.c.bf16 %v833, %v832
        %v843 = vpack.c.bf16 %v835, %v834
        %v844 = vld [vmem:[#allocation7] sm:$0xf]
        %v845 = vld [vmem:[#allocation7 + $0x4] sm:$0xf]
        %v846 = vld [vmem:[#allocation7 + $0x8] sm:$0xf]
        %v847 = vld [vmem:[#allocation7 + $0xc] sm:$0xf]
        %v848 = vld [vmem:[#allocation7 + $0x10] sm:$0xf]
        %v849 = vld [vmem:[#allocation7 + $0x14] sm:$0xf]
        %v850 = vld [vmem:[#allocation7 + $0x18] sm:$0xf]
        %v851 = vld [vmem:[#allocation7 + $0x1c] sm:$0xf]
        %v852 = vld [vmem:[#allocation7 + $0x20] sm:$0xf]
        %v853 = vld [vmem:[#allocation7 + $0x24] sm:$0xf]
        %v854 = vld [vmem:[#allocation7 + $0x28] sm:$0xf]
        %v855 = vld [vmem:[#allocation7 + $0x2c] sm:$0xf]
        %v856 = vld [vmem:[#allocation7 + $0x30] sm:$0xf]
        %v857 = vld [vmem:[#allocation7 + $0x34] sm:$0xf]
        %v858 = vld [vmem:[#allocation7 + $0x38] sm:$0xf]
        %v859 = vld [vmem:[#allocation7 + $0x3c] sm:$0xf]
        %v860 = vld [vmem:[%s4] sm:$0x1]
        %v862 = vlaneseq
        %v863 = vshrl.u32 %v862, 7
        %v864 = vsub.s32 0, %v863
        %v865 = vrot.slane %v860, %v864
        %v883 = vunpack.c.l.b16 %v844
        %v884 = vunpack.c.l.b16 %v845
        %v885 = vunpack.c.l.b16 %v846
        %v886 = vunpack.c.l.b16 %v847
        %v887 = vunpack.c.l.b16 %v848
        %v888 = vunpack.c.l.b16 %v849
        %v889 = vunpack.c.l.b16 %v850
        %v890 = vunpack.c.l.b16 %v851
        %v891 = vunpack.c.l.b16 %v852
        %v892 = vunpack.c.l.b16 %v853
        %v893 = vunpack.c.l.b16 %v854
        %v894 = vunpack.c.l.b16 %v855
        %v895 = vunpack.c.l.b16 %v856
        %v896 = vunpack.c.l.b16 %v857
        %v897 = vunpack.c.l.b16 %v858
        %v898 = vunpack.c.l.b16 %v859
        %v899 = vpack.c.b16 %v884, %v883
        %v900 = vpack.c.b16 %v886, %v885
        %v901 = vpack.c.b16 %v888, %v887
        %v902 = vpack.c.b16 %v890, %v889
        %v903 = vpack.c.b16 %v892, %v891
        %v904 = vpack.c.b16 %v894, %v893
        %v905 = vpack.c.b16 %v896, %v895
        %v906 = vpack.c.b16 %v898, %v897
        %915 = vmatprep.subr.bf16.mxu0 0
        %916 = vmatpush1.bf16.msra.mxu0 %v899
        %917 = vmatprep.subr.bf16.mxu0 0
        %918 = vmatpush1.bf16.msra.mxu0 %v900
        %919 = vmatprep.subr.bf16.mxu0 0
        %920 = vmatpush1.bf16.msra.mxu0 %v901
        %921 = vmatprep.subr.bf16.mxu0 0
        %922 = vmatpush1.bf16.msra.mxu0 %v902
        %923 = vmatprep.subr.bf16.mxu0 0
        %924 = vmatpush1.bf16.msra.mxu0 %v903
        %925 = vmatprep.subr.bf16.mxu0 0
        %926 = vmatpush1.bf16.msra.mxu0 %v904
        %927 = vmatprep.subr.bf16.mxu0 0
        %928 = vmatpush1.bf16.msra.mxu0 %v905
        %929 = vmatprep.subr.bf16.mxu0 0
        %930 = vmatpush1.bf16.msra.mxu0 %v906
        %931 = vmatprep.subr.bf16.mxu0 0
        %932 = vmatpush1.bf16.msra.mxu0 0
        %933 = vmatprep.subr.bf16.mxu0 0
        %934 = vmatpush1.bf16.msra.mxu0 0
        %935 = vmatprep.subr.bf16.mxu0 0
        %936 = vmatpush1.bf16.msra.mxu0 0
        %937 = vmatprep.subr.bf16.mxu0 0
        %938 = vmatpush1.bf16.msra.mxu0 0
        %939 = vmatprep.subr.bf16.mxu0 0
        %940 = vmatpush1.bf16.msra.mxu0 0
        %941 = vmatprep.subr.bf16.mxu0 0
        %942 = vmatpush1.bf16.msra.mxu0 0
        %943 = vmatprep.subr.bf16.mxu0 0
        %944 = vmatpush1.bf16.msra.mxu0 0
        %945 = vmatprep.subr.bf16.mxu0 0
        %946 = vmatpush1.bf16.msra.mxu0 0
        %947 = vmatprep.mubr.bf16.mxu0 0
        %948 = vmatmul.mubr.bf16.gmra.mrb[0].mxu0 %v836
        %v949 = vpop.f32.mrb[0].mxu0
        %v950 = vadd.f32 %v865, %v949
        %v951 = vpop.f32.mrb[0].mxu0
        %v952 = vpop.f32.mrb[0].mxu0
        %v953 = vadd.f32 %v865, %v952
        %v954 = vpop.f32.mrb[0].mxu0
        %955 = vmatprep.mubr.bf16.mxu0 0
        %956 = vmatmul.mubr.bf16.gmra.mrb[0].mxu0 %v837
        %v957 = vpop.f32.mrb[0].mxu0
        %v958 = vadd.f32 %v865, %v957
        %v959 = vpop.f32.mrb[0].mxu0
        %v960 = vpop.f32.mrb[0].mxu0
        %v961 = vadd.f32 %v865, %v960
        %v962 = vpop.f32.mrb[0].mxu0
        %963 = vmatprep.mubr.bf16.mxu0 0
        %964 = vmatmul.mubr.bf16.gmra.mrb[0].mxu0 %v838
        %v965 = vpop.f32.mrb[0].mxu0
        %v966 = vadd.f32 %v865, %v965
        %v967 = vpop.f32.mrb[0].mxu0
        %v968 = vpop.f32.mrb[0].mxu0
        %v969 = vadd.f32 %v865, %v968
        %v970 = vpop.f32.mrb[0].mxu0
        %971 = vmatprep.mubr.bf16.mxu0 0
        %972 = vmatmul.mubr.bf16.gmra.mrb[0].mxu0 %v839
        %v973 = vpop.f32.mrb[0].mxu0
        %v974 = vadd.f32 %v865, %v973
        %v975 = vpop.f32.mrb[0].mxu0
        %v976 = vpop.f32.mrb[0].mxu0
        %v977 = vadd.f32 %v865, %v976
        %v978 = vpop.f32.mrb[0].mxu0
        %979 = vmatprep.mubr.bf16.mxu0 0
        %980 = vmatmul.mubr.bf16.gmra.mrb[0].mxu0 %v840
        %v981 = vpop.f32.mrb[0].mxu0
        %v982 = vadd.f32 %v865, %v981
        %v983 = vpop.f32.mrb[0].mxu0
        %v984 = vpop.f32.mrb[0].mxu0
        %v985 = vadd.f32 %v865, %v984
        %v986 = vpop.f32.mrb[0].mxu0
        %987 = vmatprep.mubr.bf16.mxu0 0
        %988 = vmatmul.mubr.bf16.gmra.mrb[0].mxu0 %v841
        %v989 = vpop.f32.mrb[0].mxu0
        %v990 = vadd.f32 %v865, %v989
        %v991 = vpop.f32.mrb[0].mxu0
        %v992 = vpop.f32.mrb[0].mxu0
        %v993 = vadd.f32 %v865, %v992
        %v994 = vpop.f32.mrb[0].mxu0
        %995 = vmatprep.mubr.bf16.mxu0 0
        %996 = vmatmul.mubr.bf16.gmra.mrb[0].mxu0 %v842
        %v997 = vpop.f32.mrb[0].mxu0
        %v998 = vadd.f32 %v865, %v997
        %v999 = vpop.f32.mrb[0].mxu0
        %v1000 = vpop.f32.mrb[0].mxu0
        %v1001 = vadd.f32 %v865, %v1000
        %v1002 = vpop.f32.mrb[0].mxu0
        %1003 = vmatprep.mubr.bf16.mxu0 0
        %1004 = vmatmul.mubr.bf16.gmra.mrb[0].mxu0 %v843
        %v1005 = vpop.f32.mrb[0].mxu0
        %v1006 = vadd.f32 %v865, %v1005
        %v1007 = vpop.f32.mrb[0].mxu0
        %v1008 = vpop.f32.mrb[0].mxu0
        %v1009 = vadd.f32 %v865, %v1008
        %v1010 = vpop.f32.mrb[0].mxu0
        %1011 = vdwg.mxu0
        %v1012 = vtanh.pop %v950
        %v1013 = vtanh.pop %v953
        %v1014 = vtanh.pop %v958
        %v1015 = vtanh.pop %v961
        %v1016 = vtanh.pop %v966
        %v1017 = vtanh.pop %v969
        %v1018 = vtanh.pop %v974
        %v1019 = vtanh.pop %v977
        %v1020 = vtanh.pop %v982
        %v1021 = vtanh.pop %v985
        %v1022 = vtanh.pop %v990
        %v1023 = vtanh.pop %v993
        %v1024 = vtanh.pop %v998
        %v1025 = vtanh.pop %v1001
        %v1026 = vtanh.pop %v1006
        %v1027 = vtanh.pop %v1009
        %v1028 = vpack.c.bf16 %v1013, %v1012
        %v1029 = vpack.c.bf16 %v1015, %v1014
        %v1030 = vpack.c.bf16 %v1017, %v1016
        %v1031 = vpack.c.bf16 %v1019, %v1018
        %v1032 = vpack.c.bf16 %v1021, %v1020
        %v1033 = vpack.c.bf16 %v1023, %v1022
        %v1034 = vpack.c.bf16 %v1025, %v1024
        %v1035 = vpack.c.bf16 %v1027, %v1026
        %v1036 = vld [vmem:[#allocation8] sm:$0xf]
        %v1037 = vld [vmem:[#allocation8 + $0x4] sm:$0xf]
        %v1038 = vld [vmem:[#allocation8 + $0x8] sm:$0xf]
        %v1039 = vld [vmem:[#allocation8 + $0xc] sm:$0xf]
        %v1040 = vld [vmem:[#allocation8 + $0x10] sm:$0xf]
        %v1041 = vld [vmem:[#allocation8 + $0x14] sm:$0xf]
        %v1042 = vld [vmem:[#allocation8 + $0x18] sm:$0xf]
        %v1043 = vld [vmem:[#allocation8 + $0x1c] sm:$0xf]
        %v1044 = vld [vmem:[#allocation8 + $0x20] sm:$0xf]
        %v1045 = vld [vmem:[#allocation8 + $0x24] sm:$0xf]
        %v1046 = vld [vmem:[#allocation8 + $0x28] sm:$0xf]
        %v1047 = vld [vmem:[#allocation8 + $0x2c] sm:$0xf]
        %v1048 = vld [vmem:[#allocation8 + $0x30] sm:$0xf]
        %v1049 = vld [vmem:[#allocation8 + $0x34] sm:$0xf]
        %v1050 = vld [vmem:[#allocation8 + $0x38] sm:$0xf]
        %v1051 = vld [vmem:[#allocation8 + $0x3c] sm:$0xf]
        %v1052 = vld [vmem:[%s6] sm:$0x1]
        %v1054 = vlaneseq
        %v1055 = vshrl.u32 %v1054, 7
        %v1056 = vsub.s32 0, %v1055
        %v1057 = vrot.slane %v1052, %v1056
        %v1075 = vunpack.c.l.b16 %v1036
        %v1076 = vunpack.c.l.b16 %v1037
        %v1077 = vunpack.c.l.b16 %v1038
        %v1078 = vunpack.c.l.b16 %v1039
        %v1079 = vunpack.c.l.b16 %v1040
        %v1080 = vunpack.c.l.b16 %v1041
        %v1081 = vunpack.c.l.b16 %v1042
        %v1082 = vunpack.c.l.b16 %v1043
        %v1083 = vunpack.c.l.b16 %v1044
        %v1084 = vunpack.c.l.b16 %v1045
        %v1085 = vunpack.c.l.b16 %v1046
        %v1086 = vunpack.c.l.b16 %v1047
        %v1087 = vunpack.c.l.b16 %v1048
        %v1088 = vunpack.c.l.b16 %v1049
        %v1089 = vunpack.c.l.b16 %v1050
        %v1090 = vunpack.c.l.b16 %v1051
        %v1091 = vpack.c.b16 %v1076, %v1075
        %v1092 = vpack.c.b16 %v1078, %v1077
        %v1093 = vpack.c.b16 %v1080, %v1079
        %v1094 = vpack.c.b16 %v1082, %v1081
        %v1095 = vpack.c.b16 %v1084, %v1083
        %v1096 = vpack.c.b16 %v1086, %v1085
        %v1097 = vpack.c.b16 %v1088, %v1087
        %v1098 = vpack.c.b16 %v1090, %v1089
        %1107 = vmatprep.subr.bf16.mxu0 0
        %1108 = vmatpush1.bf16.msra.mxu0 %v1091
        %1109 = vmatprep.subr.bf16.mxu0 0
        %1110 = vmatpush1.bf16.msra.mxu0 %v1092
        %1111 = vmatprep.subr.bf16.mxu0 0
        %1112 = vmatpush1.bf16.msra.mxu0 %v1093
        %1113 = vmatprep.subr.bf16.mxu0 0
        %1114 = vmatpush1.bf16.msra.mxu0 %v1094
        %1115 = vmatprep.subr.bf16.mxu0 0
        %1116 = vmatpush1.bf16.msra.mxu0 %v1095
        %1117 = vmatprep.subr.bf16.mxu0 0
        %1118 = vmatpush1.bf16.msra.mxu0 %v1096
        %1119 = vmatprep.subr.bf16.mxu0 0
        %1120 = vmatpush1.bf16.msra.mxu0 %v1097
        %1121 = vmatprep.subr.bf16.mxu0 0
        %1122 = vmatpush1.bf16.msra.mxu0 %v1098
        %1123 = vmatprep.subr.bf16.mxu0 0
        %1124 = vmatpush1.bf16.msra.mxu0 0
        %1125 = vmatprep.subr.bf16.mxu0 0
        %1126 = vmatpush1.bf16.msra.mxu0 0
        %1127 = vmatprep.subr.bf16.mxu0 0
        %1128 = vmatpush1.bf16.msra.mxu0 0
        %1129 = vmatprep.subr.bf16.mxu0 0
        %1130 = vmatpush1.bf16.msra.mxu0 0
        %1131 = vmatprep.subr.bf16.mxu0 0
        %1132 = vmatpush1.bf16.msra.mxu0 0
        %1133 = vmatprep.subr.bf16.mxu0 0
        %1134 = vmatpush1.bf16.msra.mxu0 0
        %1135 = vmatprep.subr.bf16.mxu0 0
        %1136 = vmatpush1.bf16.msra.mxu0 0
        %1137 = vmatprep.subr.bf16.mxu0 0
        %1138 = vmatpush1.bf16.msra.mxu0 0
        %1139 = vmatprep.mubr.bf16.mxu0 0
        %1140 = vmatmul.mubr.bf16.gmra.mrb[0].mxu0 %v1028
        %v1141 = vpop.f32.mrb[0].mxu0
        %v1142 = vadd.f32 %v1057, %v1141
        %v1143 = vpop.f32.mrb[0].mxu0
        %v1144 = vpop.f32.mrb[0].mxu0
        %v1145 = vadd.f32 %v1057, %v1144
        %v1146 = vpop.f32.mrb[0].mxu0
        %1147 = vmatprep.mubr.bf16.mxu0 0
        %1148 = vmatmul.mubr.bf16.gmra.mrb[0].mxu0 %v1029
        %v1149 = vpop.f32.mrb[0].mxu0
        %v1150 = vadd.f32 %v1057, %v1149
        %v1151 = vpop.f32.mrb[0].mxu0
        %v1152 = vpop.f32.mrb[0].mxu0
        %v1153 = vadd.f32 %v1057, %v1152
        %v1154 = vpop.f32.mrb[0].mxu0
        %1155 = vmatprep.mubr.bf16.mxu0 0
        %1156 = vmatmul.mubr.bf16.gmra.mrb[0].mxu0 %v1030
        %v1157 = vpop.f32.mrb[0].mxu0
        %v1158 = vadd.f32 %v1057, %v1157
        %v1159 = vpop.f32.mrb[0].mxu0
        %v1160 = vpop.f32.mrb[0].mxu0
        %v1161 = vadd.f32 %v1057, %v1160
        %v1162 = vpop.f32.mrb[0].mxu0
        %1163 = vmatprep.mubr.bf16.mxu0 0
        %1164 = vmatmul.mubr.bf16.gmra.mrb[0].mxu0 %v1031
        %v1165 = vpop.f32.mrb[0].mxu0
        %v1166 = vadd.f32 %v1057, %v1165
        %v1167 = vpop.f32.mrb[0].mxu0
        %v1168 = vpop.f32.mrb[0].mxu0
        %v1169 = vadd.f32 %v1057, %v1168
        %v1170 = vpop.f32.mrb[0].mxu0
        %1171 = vmatprep.mubr.bf16.mxu0 0
        %1172 = vmatmul.mubr.bf16.gmra.mrb[0].mxu0 %v1032
        %v1173 = vpop.f32.mrb[0].mxu0
        %v1174 = vadd.f32 %v1057, %v1173
        %v1175 = vpop.f32.mrb[0].mxu0
        %v1176 = vpop.f32.mrb[0].mxu0
        %v1177 = vadd.f32 %v1057, %v1176
        %v1178 = vpop.f32.mrb[0].mxu0
        %1179 = vmatprep.mubr.bf16.mxu0 0
        %1180 = vmatmul.mubr.bf16.gmra.mrb[0].mxu0 %v1033
        %v1181 = vpop.f32.mrb[0].mxu0
        %v1182 = vadd.f32 %v1057, %v1181
        %v1183 = vpop.f32.mrb[0].mxu0
        %v1184 = vpop.f32.mrb[0].mxu0
        %v1185 = vadd.f32 %v1057, %v1184
        %v1186 = vpop.f32.mrb[0].mxu0
        %1187 = vmatprep.mubr.bf16.mxu0 0
        %1188 = vmatmul.mubr.bf16.gmra.mrb[0].mxu0 %v1034
        %v1189 = vpop.f32.mrb[0].mxu0
        %v1190 = vadd.f32 %v1057, %v1189
        %v1191 = vpop.f32.mrb[0].mxu0
        %v1192 = vpop.f32.mrb[0].mxu0
        %v1193 = vadd.f32 %v1057, %v1192
        %v1194 = vpop.f32.mrb[0].mxu0
        %1195 = vmatprep.mubr.bf16.mxu0 0
        %1196 = vmatmul.mubr.bf16.gmra.mrb[0].mxu0 %v1035
        %v1197 = vpop.f32.mrb[0].mxu0
        %v1198 = vadd.f32 %v1057, %v1197
        %v1199 = vpop.f32.mrb[0].mxu0
        %v1200 = vpop.f32.mrb[0].mxu0
        %v1201 = vadd.f32 %v1057, %v1200
        %v1202 = vpop.f32.mrb[0].mxu0
        %1203 = vdwg.mxu0
        %1204 = vst [vmem:[%s576] sm:$0xff] %v1142
        %1205 = vst [vmem:[%s576 + $0x8] sm:$0xff] %v1145
        %1206 = vst [vmem:[%s576 + $0x10] sm:$0xff] %v1150
        %1207 = vst [vmem:[%s576 + $0x18] sm:$0xff] %v1153
        %1208 = vst [vmem:[%s576 + $0x20] sm:$0xff] %v1158
        %1209 = vst [vmem:[%s576 + $0x28] sm:$0xff] %v1161
        %1210 = vst [vmem:[%s576 + $0x30] sm:$0xff] %v1166
        %1211 = vst [vmem:[%s576 + $0x38] sm:$0xff] %v1169
        %1212 = vst [vmem:[%s576 + $0x40] sm:$0xff] %v1174
        %1213 = vst [vmem:[%s576 + $0x48] sm:$0xff] %v1177
        %1214 = vst [vmem:[%s576 + $0x50] sm:$0xff] %v1182
        %1215 = vst [vmem:[%s576 + $0x58] sm:$0xff] %v1185
        %1216 = vst [vmem:[%s576 + $0x60] sm:$0xff] %v1190
        %1217 = vst [vmem:[%s576 + $0x68] sm:$0xff] %v1193
        %1218 = vst [vmem:[%s576 + $0x70] sm:$0xff] %v1198
        %1219 = vst [vmem:[%s576 + $0x78] sm:$0xff] %v1201
        %v1220 = vpack.c.bf16 %v1145, %v1142
        %v1221 = vpack.c.bf16 %v1153, %v1150
        %v1222 = vpack.c.bf16 %v1161, %v1158
        %v1223 = vpack.c.bf16 %v1169, %v1166
        %v1224 = vpack.c.bf16 %v1177, %v1174
        %v1225 = vpack.c.bf16 %v1185, %v1182
        %v1226 = vpack.c.bf16 %v1193, %v1190
        %v1227 = vpack.c.bf16 %v1201, %v1198
        %v1228 = vld [vmem:[#allocation10] sm:$0xf]
        %v1229 = vld [vmem:[#allocation10 + $0x4] sm:$0xf]
        %v1230 = vld [vmem:[#allocation10 + $0x8] sm:$0xf]
        %v1231 = vld [vmem:[#allocation10 + $0xc] sm:$0xf]
        %v1232 = vld [vmem:[#allocation10 + $0x10] sm:$0xf]
        %v1233 = vld [vmem:[#allocation10 + $0x14] sm:$0xf]
        %v1234 = vld [vmem:[#allocation10 + $0x18] sm:$0xf]
        %v1235 = vld [vmem:[#allocation10 + $0x1c] sm:$0xf]
        %v1236 = vld [vmem:[#allocation10 + $0x20] sm:$0xf]
        %v1237 = vld [vmem:[#allocation10 + $0x24] sm:$0xf]
        %v1238 = vld [vmem:[#allocation10 + $0x28] sm:$0xf]
        %v1239 = vld [vmem:[#allocation10 + $0x2c] sm:$0xf]
        %v1240 = vld [vmem:[#allocation10 + $0x30] sm:$0xf]
        %v1241 = vld [vmem:[#allocation10 + $0x34] sm:$0xf]
        %v1242 = vld [vmem:[#allocation10 + $0x38] sm:$0xf]
        %v1243 = vld [vmem:[#allocation10 + $0x3c] sm:$0xf]
        %v1244 = vld [vmem:[%s8] sm:$0x1]
        %v1246 = vlaneseq
        %v1247 = vshrl.u32 %v1246, 7
        %v1248 = vsub.s32 0, %v1247
        %v1249 = vrot.slane %v1244, %v1248
        %v1267 = vunpack.c.l.b16 %v1228
        %v1268 = vunpack.c.l.b16 %v1229
        %v1269 = vunpack.c.l.b16 %v1230
        %v1270 = vunpack.c.l.b16 %v1231
        %v1271 = vunpack.c.l.b16 %v1232
        %v1272 = vunpack.c.l.b16 %v1233
        %v1273 = vunpack.c.l.b16 %v1234
        %v1274 = vunpack.c.l.b16 %v1235
        %v1275 = vunpack.c.l.b16 %v1236
        %v1276 = vunpack.c.l.b16 %v1237
        %v1277 = vunpack.c.l.b16 %v1238
        %v1278 = vunpack.c.l.b16 %v1239
        %v1279 = vunpack.c.l.b16 %v1240
        %v1280 = vunpack.c.l.b16 %v1241
        %v1281 = vunpack.c.l.b16 %v1242
        %v1282 = vunpack.c.l.b16 %v1243
        %v1283 = vpack.c.b16 %v1268, %v1267
        %v1284 = vpack.c.b16 %v1270, %v1269
        %v1285 = vpack.c.b16 %v1272, %v1271
        %v1286 = vpack.c.b16 %v1274, %v1273
        %v1287 = vpack.c.b16 %v1276, %v1275
        %v1288 = vpack.c.b16 %v1278, %v1277
        %v1289 = vpack.c.b16 %v1280, %v1279
        %v1290 = vpack.c.b16 %v1282, %v1281
        %1299 = vmatprep.subr.bf16.mxu0 0
        %1300 = vmatpush1.bf16.msra.mxu0 %v1283
        %1301 = vmatprep.subr.bf16.mxu0 0
        %1302 = vmatpush1.bf16.msra.mxu0 %v1284
        %1303 = vmatprep.subr.bf16.mxu0 0
        %1304 = vmatpush1.bf16.msra.mxu0 %v1285
        %1305 = vmatprep.subr.bf16.mxu0 0
        %1306 = vmatpush1.bf16.msra.mxu0 %v1286
        %1307 = vmatprep.subr.bf16.mxu0 0
        %1308 = vmatpush1.bf16.msra.mxu0 %v1287
        %1309 = vmatprep.subr.bf16.mxu0 0
        %1310 = vmatpush1.bf16.msra.mxu0 %v1288
        %1311 = vmatprep.subr.bf16.mxu0 0
        %1312 = vmatpush1.bf16.msra.mxu0 %v1289
        %1313 = vmatprep.subr.bf16.mxu0 0
        %1314 = vmatpush1.bf16.msra.mxu0 %v1290
        %1315 = vmatprep.subr.bf16.mxu0 0
        %1316 = vmatpush1.bf16.msra.mxu0 0
        %1317 = vmatprep.subr.bf16.mxu0 0
        %1318 = vmatpush1.bf16.msra.mxu0 0
        %1319 = vmatprep.subr.bf16.mxu0 0
        %1320 = vmatpush1.bf16.msra.mxu0 0
        %1321 = vmatprep.subr.bf16.mxu0 0
        %1322 = vmatpush1.bf16.msra.mxu0 0
        %1323 = vmatprep.subr.bf16.mxu0 0
        %1324 = vmatpush1.bf16.msra.mxu0 0
        %1325 = vmatprep.subr.bf16.mxu0 0
        %1326 = vmatpush1.bf16.msra.mxu0 0
        %1327 = vmatprep.subr.bf16.mxu0 0
        %1328 = vmatpush1.bf16.msra.mxu0 0
        %1329 = vmatprep.subr.bf16.mxu0 0
        %1330 = vmatpush1.bf16.msra.mxu0 0
        %1331 = vmatprep.mubr.bf16.mxu0 0
        %1332 = vmatmul.mubr.bf16.gmra.mrb[0].mxu0 %v1220
        %v1333 = vpop.f32.mrb[0].mxu0
        %v1334 = vadd.f32 %v1249, %v1333
        %v1335 = vpop.f32.mrb[0].mxu0
        %v1336 = vpop.f32.mrb[0].mxu0
        %v1337 = vadd.f32 %v1249, %v1336
        %v1338 = vpop.f32.mrb[0].mxu0
        %1339 = vmatprep.mubr.bf16.mxu0 0
        %1340 = vmatmul.mubr.bf16.gmra.mrb[0].mxu0 %v1221
        %v1341 = vpop.f32.mrb[0].mxu0
        %v1342 = vadd.f32 %v1249, %v1341
        %v1343 = vpop.f32.mrb[0].mxu0
        %v1344 = vpop.f32.mrb[0].mxu0
        %v1345 = vadd.f32 %v1249, %v1344
        %v1346 = vpop.f32.mrb[0].mxu0
        %1347 = vmatprep.mubr.bf16.mxu0 0
        %1348 = vmatmul.mubr.bf16.gmra.mrb[0].mxu0 %v1222
        %v1349 = vpop.f32.mrb[0].mxu0
        %v1350 = vadd.f32 %v1249, %v1349
        %v1351 = vpop.f32.mrb[0].mxu0
        %v1352 = vpop.f32.mrb[0].mxu0
        %v1353 = vadd.f32 %v1249, %v1352
        %v1354 = vpop.f32.mrb[0].mxu0
        %1355 = vmatprep.mubr.bf16.mxu0 0
        %1356 = vmatmul.mubr.bf16.gmra.mrb[0].mxu0 %v1223
        %v1357 = vpop.f32.mrb[0].mxu0
        %v1358 = vadd.f32 %v1249, %v1357
        %v1359 = vpop.f32.mrb[0].mxu0
        %v1360 = vpop.f32.mrb[0].mxu0
        %v1361 = vadd.f32 %v1249, %v1360
        %v1362 = vpop.f32.mrb[0].mxu0
        %1363 = vmatprep.mubr.bf16.mxu0 0
        %1364 = vmatmul.mubr.bf16.gmra.mrb[0].mxu0 %v1224
        %v1365 = vpop.f32.mrb[0].mxu0
        %v1366 = vadd.f32 %v1249, %v1365
        %v1367 = vpop.f32.mrb[0].mxu0
        %v1368 = vpop.f32.mrb[0].mxu0
        %v1369 = vadd.f32 %v1249, %v1368
        %v1370 = vpop.f32.mrb[0].mxu0
        %1371 = vmatprep.mubr.bf16.mxu0 0
        %1372 = vmatmul.mubr.bf16.gmra.mrb[0].mxu0 %v1225
        %v1373 = vpop.f32.mrb[0].mxu0
        %v1374 = vadd.f32 %v1249, %v1373
        %v1375 = vpop.f32.mrb[0].mxu0
        %v1376 = vpop.f32.mrb[0].mxu0
        %v1377 = vadd.f32 %v1249, %v1376
        %v1378 = vpop.f32.mrb[0].mxu0
        %1379 = vmatprep.mubr.bf16.mxu0 0
        %1380 = vmatmul.mubr.bf16.gmra.mrb[0].mxu0 %v1226
        %v1381 = vpop.f32.mrb[0].mxu0
        %v1382 = vadd.f32 %v1249, %v1381
        %v1383 = vpop.f32.mrb[0].mxu0
        %v1384 = vpop.f32.mrb[0].mxu0
        %v1385 = vadd.f32 %v1249, %v1384
        %v1386 = vpop.f32.mrb[0].mxu0
        %1387 = vmatprep.mubr.bf16.mxu0 0
        %1388 = vmatmul.mubr.bf16.gmra.mrb[0].mxu0 %v1227
        %v1389 = vpop.f32.mrb[0].mxu0
        %v1390 = vadd.f32 %v1249, %v1389
        %v1391 = vpop.f32.mrb[0].mxu0
        %v1392 = vpop.f32.mrb[0].mxu0
        %v1393 = vadd.f32 %v1249, %v1392
        %v1394 = vpop.f32.mrb[0].mxu0
        %1395 = vdwg.mxu0
        %v1396 = vtanh.pop %v1334
        %v1397 = vtanh.pop %v1337
        %v1398 = vtanh.pop %v1342
        %v1399 = vtanh.pop %v1345
        %v1400 = vtanh.pop %v1350
        %v1401 = vtanh.pop %v1353
        %v1402 = vtanh.pop %v1358
        %v1403 = vtanh.pop %v1361
        %v1404 = vtanh.pop %v1366
        %v1405 = vtanh.pop %v1369
        %v1406 = vtanh.pop %v1374
        %v1407 = vtanh.pop %v1377
        %v1408 = vtanh.pop %v1382
        %v1409 = vtanh.pop %v1385
        %v1410 = vtanh.pop %v1390
        %v1411 = vtanh.pop %v1393
        %v1412 = vpack.c.bf16 %v1397, %v1396
        %v1413 = vpack.c.bf16 %v1399, %v1398
        %v1414 = vpack.c.bf16 %v1401, %v1400
        %v1415 = vpack.c.bf16 %v1403, %v1402
        %v1416 = vpack.c.bf16 %v1405, %v1404
        %v1417 = vpack.c.bf16 %v1407, %v1406
        %v1418 = vpack.c.bf16 %v1409, %v1408
        %v1419 = vpack.c.bf16 %v1411, %v1410
        %v1420 = vld [vmem:[#allocation11] sm:$0xf]
        %v1421 = vld [vmem:[#allocation11 + $0x4] sm:$0xf]
        %v1422 = vld [vmem:[#allocation11 + $0x8] sm:$0xf]
        %v1423 = vld [vmem:[#allocation11 + $0xc] sm:$0xf]
        %v1424 = vld [vmem:[#allocation11 + $0x10] sm:$0xf]
        %v1425 = vld [vmem:[#allocation11 + $0x14] sm:$0xf]
        %v1426 = vld [vmem:[#allocation11 + $0x18] sm:$0xf]
        %v1427 = vld [vmem:[#allocation11 + $0x1c] sm:$0xf]
        %v1428 = vld [vmem:[#allocation11 + $0x20] sm:$0xf]
        %v1429 = vld [vmem:[#allocation11 + $0x24] sm:$0xf]
        %v1430 = vld [vmem:[#allocation11 + $0x28] sm:$0xf]
        %v1431 = vld [vmem:[#allocation11 + $0x2c] sm:$0xf]
        %v1432 = vld [vmem:[#allocation11 + $0x30] sm:$0xf]
        %v1433 = vld [vmem:[#allocation11 + $0x34] sm:$0xf]
        %v1434 = vld [vmem:[#allocation11 + $0x38] sm:$0xf]
        %v1435 = vld [vmem:[#allocation11 + $0x3c] sm:$0xf]
        %v1436 = vld [vmem:[%s10] sm:$0x1]
        %v1438 = vlaneseq
        %v1439 = vshrl.u32 %v1438, 7
        %v1440 = vsub.s32 0, %v1439
        %v1441 = vrot.slane %v1436, %v1440
        %v1459 = vunpack.c.l.b16 %v1420
        %v1460 = vunpack.c.l.b16 %v1421
        %v1461 = vunpack.c.l.b16 %v1422
        %v1462 = vunpack.c.l.b16 %v1423
        %v1463 = vunpack.c.l.b16 %v1424
        %v1464 = vunpack.c.l.b16 %v1425
        %v1465 = vunpack.c.l.b16 %v1426
        %v1466 = vunpack.c.l.b16 %v1427
        %v1467 = vunpack.c.l.b16 %v1428
        %v1468 = vunpack.c.l.b16 %v1429
        %v1469 = vunpack.c.l.b16 %v1430
        %v1470 = vunpack.c.l.b16 %v1431
        %v1471 = vunpack.c.l.b16 %v1432
        %v1472 = vunpack.c.l.b16 %v1433
        %v1473 = vunpack.c.l.b16 %v1434
        %v1474 = vunpack.c.l.b16 %v1435
        %v1475 = vpack.c.b16 %v1460, %v1459
        %v1476 = vpack.c.b16 %v1462, %v1461
        %v1477 = vpack.c.b16 %v1464, %v1463
        %v1478 = vpack.c.b16 %v1466, %v1465
        %v1479 = vpack.c.b16 %v1468, %v1467
        %v1480 = vpack.c.b16 %v1470, %v1469
        %v1481 = vpack.c.b16 %v1472, %v1471
        %v1482 = vpack.c.b16 %v1474, %v1473
        %1491 = vmatprep.subr.bf16.mxu0 0
        %1492 = vmatpush1.bf16.msra.mxu0 %v1475
        %1493 = vmatprep.subr.bf16.mxu0 0
        %1494 = vmatpush1.bf16.msra.mxu0 %v1476
        %1495 = vmatprep.subr.bf16.mxu0 0
        %1496 = vmatpush1.bf16.msra.mxu0 %v1477
        %1497 = vmatprep.subr.bf16.mxu0 0
        %1498 = vmatpush1.bf16.msra.mxu0 %v1478
        %1499 = vmatprep.subr.bf16.mxu0 0
        %1500 = vmatpush1.bf16.msra.mxu0 %v1479
        %1501 = vmatprep.subr.bf16.mxu0 0
        %1502 = vmatpush1.bf16.msra.mxu0 %v1480
        %1503 = vmatprep.subr.bf16.mxu0 0
        %1504 = vmatpush1.bf16.msra.mxu0 %v1481
        %1505 = vmatprep.subr.bf16.mxu0 0
        %1506 = vmatpush1.bf16.msra.mxu0 %v1482
        %1507 = vmatprep.subr.bf16.mxu0 0
        %1508 = vmatpush1.bf16.msra.mxu0 0
        %1509 = vmatprep.subr.bf16.mxu0 0
        %1510 = vmatpush1.bf16.msra.mxu0 0
        %1511 = vmatprep.subr.bf16.mxu0 0
        %1512 = vmatpush1.bf16.msra.mxu0 0
        %1513 = vmatprep.subr.bf16.mxu0 0
        %1514 = vmatpush1.bf16.msra.mxu0 0
        %1515 = vmatprep.subr.bf16.mxu0 0
        %1516 = vmatpush1.bf16.msra.mxu0 0
        %1517 = vmatprep.subr.bf16.mxu0 0
        %1518 = vmatpush1.bf16.msra.mxu0 0
        %1519 = vmatprep.subr.bf16.mxu0 0
        %1520 = vmatpush1.bf16.msra.mxu0 0
        %1521 = vmatprep.subr.bf16.mxu0 0
        %1522 = vmatpush1.bf16.msra.mxu0 0
        %1523 = vmatprep.mubr.bf16.mxu0 0
        %1524 = vmatmul.mubr.bf16.gmra.mrb[0].mxu0 %v1412
        %v1525 = vpop.f32.mrb[0].mxu0
        %v1526 = vadd.f32 %v1441, %v1525
        %v1527 = vpop.f32.mrb[0].mxu0
        %v1528 = vpop.f32.mrb[0].mxu0
        %v1529 = vadd.f32 %v1441, %v1528
        %v1530 = vpop.f32.mrb[0].mxu0
        %1531 = vmatprep.mubr.bf16.mxu0 0
        %1532 = vmatmul.mubr.bf16.gmra.mrb[0].mxu0 %v1413
        %v1533 = vpop.f32.mrb[0].mxu0
        %v1534 = vadd.f32 %v1441, %v1533
        %v1535 = vpop.f32.mrb[0].mxu0
        %v1536 = vpop.f32.mrb[0].mxu0
        %v1537 = vadd.f32 %v1441, %v1536
        %v1538 = vpop.f32.mrb[0].mxu0
        %1539 = vmatprep.mubr.bf16.mxu0 0
        %1540 = vmatmul.mubr.bf16.gmra.mrb[0].mxu0 %v1414
        %v1541 = vpop.f32.mrb[0].mxu0
        %v1542 = vadd.f32 %v1441, %v1541
        %v1543 = vpop.f32.mrb[0].mxu0
        %v1544 = vpop.f32.mrb[0].mxu0
        %v1545 = vadd.f32 %v1441, %v1544
        %v1546 = vpop.f32.mrb[0].mxu0
        %1547 = vmatprep.mubr.bf16.mxu0 0
        %1548 = vmatmul.mubr.bf16.gmra.mrb[0].mxu0 %v1415
        %v1549 = vpop.f32.mrb[0].mxu0
        %v1550 = vadd.f32 %v1441, %v1549
        %v1551 = vpop.f32.mrb[0].mxu0
        %v1552 = vpop.f32.mrb[0].mxu0
        %v1553 = vadd.f32 %v1441, %v1552
        %v1554 = vpop.f32.mrb[0].mxu0
        %1555 = vmatprep.mubr.bf16.mxu0 0
        %1556 = vmatmul.mubr.bf16.gmra.mrb[0].mxu0 %v1416
        %v1557 = vpop.f32.mrb[0].mxu0
        %v1558 = vadd.f32 %v1441, %v1557
        %v1559 = vpop.f32.mrb[0].mxu0
        %v1560 = vpop.f32.mrb[0].mxu0
        %v1561 = vadd.f32 %v1441, %v1560
        %v1562 = vpop.f32.mrb[0].mxu0
        %1563 = vmatprep.mubr.bf16.mxu0 0
        %1564 = vmatmul.mubr.bf16.gmra.mrb[0].mxu0 %v1417
        %v1565 = vpop.f32.mrb[0].mxu0
        %v1566 = vadd.f32 %v1441, %v1565
        %v1567 = vpop.f32.mrb[0].mxu0
        %v1568 = vpop.f32.mrb[0].mxu0
        %v1569 = vadd.f32 %v1441, %v1568
        %v1570 = vpop.f32.mrb[0].mxu0
        %1571 = vmatprep.mubr.bf16.mxu0 0
        %1572 = vmatmul.mubr.bf16.gmra.mrb[0].mxu0 %v1418
        %v1573 = vpop.f32.mrb[0].mxu0
        %v1574 = vadd.f32 %v1441, %v1573
        %v1575 = vpop.f32.mrb[0].mxu0
        %v1576 = vpop.f32.mrb[0].mxu0
        %v1577 = vadd.f32 %v1441, %v1576
        %v1578 = vpop.f32.mrb[0].mxu0
        %1579 = vmatprep.mubr.bf16.mxu0 0
        %1580 = vmatmul.mubr.bf16.gmra.mrb[0].mxu0 %v1419
        %v1581 = vpop.f32.mrb[0].mxu0
        %v1582 = vadd.f32 %v1441, %v1581
        %v1583 = vpop.f32.mrb[0].mxu0
        %v1584 = vpop.f32.mrb[0].mxu0
        %v1585 = vadd.f32 %v1441, %v1584
        %v1586 = vpop.f32.mrb[0].mxu0
        %1587 = vdwg.mxu0
        %v1588 = vtanh.pop %v1526
        %v1589 = vtanh.pop %v1529
        %v1590 = vtanh.pop %v1534
        %v1591 = vtanh.pop %v1537
        %v1592 = vtanh.pop %v1542
        %v1593 = vtanh.pop %v1545
        %v1594 = vtanh.pop %v1550
        %v1595 = vtanh.pop %v1553
        %v1596 = vtanh.pop %v1558
        %v1597 = vtanh.pop %v1561
        %v1598 = vtanh.pop %v1566
        %v1599 = vtanh.pop %v1569
        %v1600 = vtanh.pop %v1574
        %v1601 = vtanh.pop %v1577
        %v1602 = vtanh.pop %v1582
        %v1603 = vtanh.pop %v1585
        %v1604 = vpack.c.bf16 %v1589, %v1588
        %v1605 = vpack.c.bf16 %v1591, %v1590
        %v1606 = vpack.c.bf16 %v1593, %v1592
        %v1607 = vpack.c.bf16 %v1595, %v1594
        %v1608 = vpack.c.bf16 %v1597, %v1596
        %v1609 = vpack.c.bf16 %v1599, %v1598
        %v1610 = vpack.c.bf16 %v1601, %v1600
        %v1611 = vpack.c.bf16 %v1603, %v1602
        %v1612 = vld [vmem:[#allocation13] sm:$0xf]
        %v1613 = vld [vmem:[#allocation13 + $0x4] sm:$0xf]
        %v1614 = vld [vmem:[#allocation13 + $0x8] sm:$0xf]
        %v1615 = vld [vmem:[#allocation13 + $0xc] sm:$0xf]
        %v1616 = vld [vmem:[#allocation13 + $0x10] sm:$0xf]
        %v1617 = vld [vmem:[#allocation13 + $0x14] sm:$0xf]
        %v1618 = vld [vmem:[#allocation13 + $0x18] sm:$0xf]
        %v1619 = vld [vmem:[#allocation13 + $0x1c] sm:$0xf]
        %v1620 = vld [vmem:[#allocation13 + $0x20] sm:$0xf]
        %v1621 = vld [vmem:[#allocation13 + $0x24] sm:$0xf]
        %v1622 = vld [vmem:[#allocation13 + $0x28] sm:$0xf]
        %v1623 = vld [vmem:[#allocation13 + $0x2c] sm:$0xf]
        %v1624 = vld [vmem:[#allocation13 + $0x30] sm:$0xf]
        %v1625 = vld [vmem:[#allocation13 + $0x34] sm:$0xf]
        %v1626 = vld [vmem:[#allocation13 + $0x38] sm:$0xf]
        %v1627 = vld [vmem:[#allocation13 + $0x3c] sm:$0xf]
        %v1628 = vld [vmem:[%s12] sm:$0x1]
        %v1630 = vlaneseq
        %v1631 = vshrl.u32 %v1630, 7
        %v1632 = vsub.s32 0, %v1631
        %v1633 = vrot.slane %v1628, %v1632
        %v1651 = vunpack.c.l.b16 %v1612
        %v1652 = vunpack.c.l.b16 %v1613
        %v1653 = vunpack.c.l.b16 %v1614
        %v1654 = vunpack.c.l.b16 %v1615
        %v1655 = vunpack.c.l.b16 %v1616
        %v1656 = vunpack.c.l.b16 %v1617
        %v1657 = vunpack.c.l.b16 %v1618
        %v1658 = vunpack.c.l.b16 %v1619
        %v1659 = vunpack.c.l.b16 %v1620
        %v1660 = vunpack.c.l.b16 %v1621
        %v1661 = vunpack.c.l.b16 %v1622
        %v1662 = vunpack.c.l.b16 %v1623
        %v1663 = vunpack.c.l.b16 %v1624
        %v1664 = vunpack.c.l.b16 %v1625
        %v1665 = vunpack.c.l.b16 %v1626
        %v1666 = vunpack.c.l.b16 %v1627
        %v1667 = vpack.c.b16 %v1652, %v1651
        %v1668 = vpack.c.b16 %v1654, %v1653
        %v1669 = vpack.c.b16 %v1656, %v1655
        %v1670 = vpack.c.b16 %v1658, %v1657
        %v1671 = vpack.c.b16 %v1660, %v1659
        %v1672 = vpack.c.b16 %v1662, %v1661
        %v1673 = vpack.c.b16 %v1664, %v1663
        %v1674 = vpack.c.b16 %v1666, %v1665
        %1683 = vmatprep.subr.bf16.mxu0 0
        %1684 = vmatpush1.bf16.msra.mxu0 %v1667
        %1685 = vmatprep.subr.bf16.mxu0 0
        %1686 = vmatpush1.bf16.msra.mxu0 %v1668
        %1687 = vmatprep.subr.bf16.mxu0 0
        %1688 = vmatpush1.bf16.msra.mxu0 %v1669
        %1689 = vmatprep.subr.bf16.mxu0 0
        %1690 = vmatpush1.bf16.msra.mxu0 %v1670
        %1691 = vmatprep.subr.bf16.mxu0 0
        %1692 = vmatpush1.bf16.msra.mxu0 %v1671
        %1693 = vmatprep.subr.bf16.mxu0 0
        %1694 = vmatpush1.bf16.msra.mxu0 %v1672
        %1695 = vmatprep.subr.bf16.mxu0 0
        %1696 = vmatpush1.bf16.msra.mxu0 %v1673
        %1697 = vmatprep.subr.bf16.mxu0 0
        %1698 = vmatpush1.bf16.msra.mxu0 %v1674
        %1699 = vmatprep.subr.bf16.mxu0 0
        %1700 = vmatpush1.bf16.msra.mxu0 0
        %1701 = vmatprep.subr.bf16.mxu0 0
        %1702 = vmatpush1.bf16.msra.mxu0 0
        %1703 = vmatprep.subr.bf16.mxu0 0
        %1704 = vmatpush1.bf16.msra.mxu0 0
        %1705 = vmatprep.subr.bf16.mxu0 0
        %1706 = vmatpush1.bf16.msra.mxu0 0
        %1707 = vmatprep.subr.bf16.mxu0 0
        %1708 = vmatpush1.bf16.msra.mxu0 0
        %1709 = vmatprep.subr.bf16.mxu0 0
        %1710 = vmatpush1.bf16.msra.mxu0 0
        %1711 = vmatprep.subr.bf16.mxu0 0
        %1712 = vmatpush1.bf16.msra.mxu0 0
        %1713 = vmatprep.subr.bf16.mxu0 0
        %1714 = vmatpush1.bf16.msra.mxu0 0
        %1715 = vmatprep.mubr.bf16.mxu0 0
        %1716 = vmatmul.mubr.bf16.gmra.mrb[0].mxu0 %v1604
        %v1717 = vpop.f32.mrb[0].mxu0
        %v1718 = vadd.f32 %v1633, %v1717
        %v1719 = vpop.f32.mrb[0].mxu0
        %v1720 = vpop.f32.mrb[0].mxu0
        %v1721 = vadd.f32 %v1633, %v1720
        %v1722 = vpop.f32.mrb[0].mxu0
        %1723 = vmatprep.mubr.bf16.mxu0 0
        %1724 = vmatmul.mubr.bf16.gmra.mrb[0].mxu0 %v1605
        %v1725 = vpop.f32.mrb[0].mxu0
        %v1726 = vadd.f32 %v1633, %v1725
        %v1727 = vpop.f32.mrb[0].mxu0
        %v1728 = vpop.f32.mrb[0].mxu0
        %v1729 = vadd.f32 %v1633, %v1728
        %v1730 = vpop.f32.mrb[0].mxu0
        %1731 = vmatprep.mubr.bf16.mxu0 0
        %1732 = vmatmul.mubr.bf16.gmra.mrb[0].mxu0 %v1606
        %v1733 = vpop.f32.mrb[0].mxu0
        %v1734 = vadd.f32 %v1633, %v1733
        %v1735 = vpop.f32.mrb[0].mxu0
        %v1736 = vpop.f32.mrb[0].mxu0
        %v1737 = vadd.f32 %v1633, %v1736
        %v1738 = vpop.f32.mrb[0].mxu0
        %1739 = vmatprep.mubr.bf16.mxu0 0
        %1740 = vmatmul.mubr.bf16.gmra.mrb[0].mxu0 %v1607
        %v1741 = vpop.f32.mrb[0].mxu0
        %v1742 = vadd.f32 %v1633, %v1741
        %v1743 = vpop.f32.mrb[0].mxu0
        %v1744 = vpop.f32.mrb[0].mxu0
        %v1745 = vadd.f32 %v1633, %v1744
        %v1746 = vpop.f32.mrb[0].mxu0
        %1747 = vmatprep.mubr.bf16.mxu0 0
        %1748 = vmatmul.mubr.bf16.gmra.mrb[0].mxu0 %v1608
        %v1749 = vpop.f32.mrb[0].mxu0
        %v1750 = vadd.f32 %v1633, %v1749
        %v1751 = vpop.f32.mrb[0].mxu0
        %v1752 = vpop.f32.mrb[0].mxu0
        %v1753 = vadd.f32 %v1633, %v1752
        %v1754 = vpop.f32.mrb[0].mxu0
        %1755 = vmatprep.mubr.bf16.mxu0 0
        %1756 = vmatmul.mubr.bf16.gmra.mrb[0].mxu0 %v1609
        %v1757 = vpop.f32.mrb[0].mxu0
        %v1758 = vadd.f32 %v1633, %v1757
        %v1759 = vpop.f32.mrb[0].mxu0
        %v1760 = vpop.f32.mrb[0].mxu0
        %v1761 = vadd.f32 %v1633, %v1760
        %v1762 = vpop.f32.mrb[0].mxu0
        %1763 = vmatprep.mubr.bf16.mxu0 0
        %1764 = vmatmul.mubr.bf16.gmra.mrb[0].mxu0 %v1610
        %v1765 = vpop.f32.mrb[0].mxu0
        %v1766 = vadd.f32 %v1633, %v1765
        %v1767 = vpop.f32.mrb[0].mxu0
        %v1768 = vpop.f32.mrb[0].mxu0
        %v1769 = vadd.f32 %v1633, %v1768
        %v1770 = vpop.f32.mrb[0].mxu0
        %1771 = vmatprep.mubr.bf16.mxu0 0
        %1772 = vmatmul.mubr.bf16.gmra.mrb[0].mxu0 %v1611
        %v1773 = vpop.f32.mrb[0].mxu0
        %v1774 = vadd.f32 %v1633, %v1773
        %v1775 = vpop.f32.mrb[0].mxu0
        %v1776 = vpop.f32.mrb[0].mxu0
        %v1777 = vadd.f32 %v1633, %v1776
        %v1778 = vpop.f32.mrb[0].mxu0
        %1779 = vdwg.mxu0
        %v1780 = vtanh.pop %v1718
        %v1781 = vtanh.pop %v1721
        %v1782 = vtanh.pop %v1726
        %v1783 = vtanh.pop %v1729
        %v1784 = vtanh.pop %v1734
        %v1785 = vtanh.pop %v1737
        %v1786 = vtanh.pop %v1742
        %v1787 = vtanh.pop %v1745
        %v1788 = vtanh.pop %v1750
        %v1789 = vtanh.pop %v1753
        %v1790 = vtanh.pop %v1758
        %v1791 = vtanh.pop %v1761
        %v1792 = vtanh.pop %v1766
        %v1793 = vtanh.pop %v1769
        %v1794 = vtanh.pop %v1774
        %v1795 = vtanh.pop %v1777
        %1796 = vst [vmem:[%s583] sm:$0xff] %v1780
        %1797 = vst [vmem:[%s583 + $0x8] sm:$0xff] %v1781
        %1798 = vst [vmem:[%s583 + $0x10] sm:$0xff] %v1782
        %1799 = vst [vmem:[%s583 + $0x18] sm:$0xff] %v1783
        %1800 = vst [vmem:[%s583 + $0x20] sm:$0xff] %v1784
        %1801 = vst [vmem:[%s583 + $0x28] sm:$0xff] %v1785
        %1802 = vst [vmem:[%s583 + $0x30] sm:$0xff] %v1786
        %1803 = vst [vmem:[%s583 + $0x38] sm:$0xff] %v1787
        %1804 = vst [vmem:[%s583 + $0x40] sm:$0xff] %v1788
        %1805 = vst [vmem:[%s583 + $0x48] sm:$0xff] %v1789
        %1806 = vst [vmem:[%s583 + $0x50] sm:$0xff] %v1790
        %1807 = vst [vmem:[%s583 + $0x58] sm:$0xff] %v1791
        %1808 = vst [vmem:[%s583 + $0x60] sm:$0xff] %v1792
        %1809 = vst [vmem:[%s583 + $0x68] sm:$0xff] %v1793
        %1810 = vst [vmem:[%s583 + $0x70] sm:$0xff] %v1794
        %1811 = vst [vmem:[%s583 + $0x78] sm:$0xff] %v1795
        %s1812 = sand.u32 %s324, 1
        %s1813 = scalar_lea.sflag [#allocation4], %s1812
        %s1814 = sand.u32 %s324, 1
        %s1815 = smul.addr %s1814, 128
        %s1816 = scalar_lea.vmem [#allocation14], %s1815
        %s1817 = sand.u32 %s350, 1
        %s1818 = scalar_lea.sflag [#allocation16], %s1817
        %s1819 = sand.u32 %s350, 1
        %s1820 = smul.addr %s1819, 128
        %s1821 = scalar_lea.vmem [#allocation15], %s1820
        // Predicated region
        $region101: #{tpu_custom_call.1} parent=71 // pred_check
          %p1822 = pneg %p334
        $region102: #{tpu_custom_call.1} parent=71 // pred_check_branch
          %1824 = sbr.rel (%p1822) target = $region104
        $region103: #{tpu_custom_call.1} parent=71 // pred_region
          %s1825 = smul.u32 16, %s38
          %s1827 = ssub.s32 2048, 2048
          %1828 = vsyncadd %s1813, %s1827
          %s1829 = smul.addr %s1825, 128
          %s1830 = scalar_lea.hbm %s13, %s1829
          %s1831 = sshll.u32 %s1816, 4
          %s1832 = int_to_ptr.vmem [resolvable:$true] %s1831
          %1837 = dma.vmem_to_hbm [thread:$0]  %s1832, 2048, %s1830, %s1813, 128, 128, 8
        $region104: #{tpu_custom_call.1} parent=71 // pred_fallthru
          _
        // Predicated region
        $region105: #{tpu_custom_call.1} parent=71 // pred_check
          %p1838 = pneg %p360
        $region106: #{tpu_custom_call.1} parent=71 // pred_check_branch
          %1840 = sbr.rel (%p1838) target = $region108
        $region107: #{tpu_custom_call.1} parent=71 // pred_region
          %s1841 = smul.u32 16, %s38
          %s1843 = ssub.s32 2048, 2048
          %1844 = vsyncadd %s1818, %s1843
          %s1845 = smul.addr %s1841, 128
          %s1846 = scalar_lea.hbm %s14, %s1845
          %s1847 = sshll.u32 %s1821, 4
          %s1848 = int_to_ptr.vmem [resolvable:$true] %s1847
          %1853 = dma.vmem_to_hbm [thread:$0]  %s1848, 2048, %s1846, %s1818, 128, 128, 8
        $region108: #{tpu_custom_call.1} parent=71 // pred_fallthru
          _
      $region72: #{tpu_custom_call.1} parent=5 // pred_fallthru
        _
      %p1854 = scmp.le.s32.totalorder 2, %s33
      // Predicated region
      $region109: #{tpu_custom_call.1} parent=5 // pred_check
        %p1855 = pneg %p1854
      $region110: #{tpu_custom_call.1} parent=5 // pred_check_branch
        %1857 = sbr.rel (%p1855) target = $region112
      $region111: #{tpu_custom_call.1} parent=5 // pred_region
        %s1858 = ssub.s32 %s33, 2
        // Predicated region
        $region113: #{tpu_custom_call.1} parent=111 // pred_check
          %p1859 = pneg %p340
        $region114: #{tpu_custom_call.1} parent=111 // pred_check_branch
          %1861 = sbr.rel (%p1859) target = $region116
        $region115: #{tpu_custom_call.1} parent=111 // pred_region
          %s1862 = sand.u32 %s325, 1
          %s1863 = scalar_lea.sflag [#allocation4], %s1862
          %s1864 = sand.u32 %s325, 1
          %s1865 = smul.addr %s1864, 128
          %s1866 = scalar_lea.vmem [#allocation14], %s1865
          %1867 = dma.done %s1863, 2048
        $region116: #{tpu_custom_call.1} parent=111 // pred_fallthru
          _
        // Predicated region
        $region117: #{tpu_custom_call.1} parent=111 // pred_check
          %p1868 = pneg %p366
        $region118: #{tpu_custom_call.1} parent=111 // pred_check_branch
          %1870 = sbr.rel (%p1868) target = $region120
        $region119: #{tpu_custom_call.1} parent=111 // pred_region
          %s1871 = sand.u32 %s351, 1
          %s1872 = scalar_lea.sflag [#allocation16], %s1871
          %s1873 = sand.u32 %s351, 1
          %s1874 = smul.addr %s1873, 128
          %s1875 = scalar_lea.vmem [#allocation15], %s1874
          %1876 = dma.done %s1872, 2048
        $region120: #{tpu_custom_call.1} parent=111 // pred_fallthru
          _
      $region112: #{tpu_custom_call.1} parent=5 // pred_fallthru
        _
    $region6: #{tpu_custom_call.1} parent=1 // loop_footer
      %s37 = sadd.s32 1, %s33
    $region7: #{tpu_custom_call.1} parent=1 // loop_footer_branch
      %32 = sbr.rel target = $region3
    $region8: #{tpu_custom_call.1} parent=1 // loop_exit
      _
    %1877 = vsyncpa [#allocation3], 1
    %s1878 = scalar_lea.sflag [#allocation3], 1
    %1879 = vsyncpa %s1878, 1
    %1880 = vsyncpa [#allocation6], 1
    %1881 = vsyncpa [#allocation9], 1
    %1882 = vsyncpa [#allocation12], 1
    %1883 = vsyncpa [#allocation4], 1
    %s1884 = scalar_lea.sflag [#allocation4], 1
    %1885 = vsyncpa %s1884, 1
    %1886 = vsyncpa [#allocation16], 1
    %s1887 = scalar_lea.sflag [#allocation16], 1
    %1888 = vsyncpa %s1887, 1

// kernel: tpu_custom_call.1
$region0: #{tpu_custom_call.1}
  #allocation0 [shape = 'u32[]', space=smem, size = 0x4, offset = 0x4, fixed_abs, tag = 'smem constant byte address 0x4 - core index']
  #allocation1 [shape = 'u32[144,128]{1,0:T(1,128)}', space=vmem, size = 0x12000, scoped, tag = 'internal scratch']
  %s0 = inlined_call_operand.hbm [shape: bf16[256,128], index: 0, kind: input, shape index: {}]
  %s1 = inlined_call_operand.hbm [shape: bf16[128,128], index: 1, kind: input, shape index: {}]
  %s2 = inlined_call_operand.vmem [shape: f32[1,128], index: 2, kind: input, shape index: {}]
  %s3 = inlined_call_operand.hbm [shape: bf16[128,128], index: 3, kind: input, shape index: {}]
  %s4 = inlined_call_operand.vmem [shape: f32[1,128], index: 4, kind: input, shape index: {}]
  %s5 = inlined_call_operand.hbm [shape: bf16[128,128], index: 5, kind: input, shape index: {}]
  %s6 = inlined_call_operand.vmem [shape: f32[1,128], index: 6, kind: input, shape index: {}]
  %s7 = inlined_call_operand.hbm [shape: bf16[128,128], index: 7, kind: input, shape index: {}]
  %s8 = inlined_call_operand.vmem [shape: f32[1,128], index: 8, kind: input, shape index: {}]
  %s9 = inlined_call_operand.hbm [shape: bf16[128,128], index: 9, kind: input, shape index: {}]
  %s10 = inlined_call_operand.vmem [shape: f32[1,128], index: 10, kind: input, shape index: {}]
  %s11 = inlined_call_operand.hbm [shape: bf16[128,128], index: 11, kind: input, shape index: {}]
  %s12 = inlined_call_operand.vmem [shape: f32[1,128], index: 12, kind: input, shape index: {}]
  %s13 = inlined_call_operand.hbm [shape: f32[256,128], index: 13, kind: output, shape index: {0}]
  %s14 = inlined_call_operand.hbm [shape: f32[256,128], index: 14, kind: output, shape index: {1}]
  %15 = xla_tuple %s13, %s14
  %s16 = sld [smem:[#allocation0]]
  $region121: #{tpu_custom_call.1} parent=0
    _
  %s18 = ssub.s32 1, %s16
  %s19 = scalar_select 0, %s18, %s16
  $region1: #{tpu_custom_call.1} parent=0
    #allocation2 [shape = 'u8[65536]{0}', space=vmem, size = 0x10000, scoped, tag = 'input window, operand 0']
    #allocation3 [shape = 's32[2]{0}', space=sflag, size = 0x8, scoped, tag = 'scoped memory for tpu_custom_call.1']
    #allocation4 [shape = 's32[2]{0}', space=sflag, size = 0x8, scoped, tag = 'scoped memory for tpu_custom_call.1']
    #allocation5 [shape = 'u8[32768]{0}', space=vmem, size = 0x8000, scoped, tag = 'input window, operand 1, single buffered']
    #allocation6 [shape = 's32[1]{0}', space=sflag, size = 0x4, scoped, tag = 'scoped memory for tpu_custom_call.1']
    #allocation7 [shape = 'u8[32768]{0}', space=vmem, size = 0x8000, scoped, tag = 'input window, operand 3, single buffered']
    #allocation8 [shape = 'u8[32768]{0}', space=vmem, size = 0x8000, scoped, tag = 'input window, operand 5, single buffered']
    #allocation9 [shape = 's32[1]{0}', space=sflag, size = 0x4, scoped, tag = 'scoped memory for tpu_custom_call.1']
    #allocation10 [shape = 'u8[32768]{0}', space=vmem, size = 0x8000, scoped, tag = 'input window, operand 7, single buffered']
    #allocation11 [shape = 'u8[32768]{0}', space=vmem, size = 0x8000, scoped, tag = 'input window, operand 9, single buffered']
    #allocation12 [shape = 's32[1]{0}', space=sflag, size = 0x4, scoped, tag = 'scoped memory for tpu_custom_call.1']
    #allocation13 [shape = 'u8[32768]{0}', space=vmem, size = 0x8000, scoped, tag = 'input window, operand 11, single buffered']
    #allocation14 [shape = 'u8[131072]{0}', space=vmem, size = 0x20000, scoped, tag = 'output window, operand 0']
    #allocation15 [shape = 'u8[131072]{0}', space=vmem, size = 0x20000, scoped, tag = 'output window, operand 1']
    #allocation16 [shape = 's32[2]{0}', space=sflag, size = 0x8, scoped, tag = 'scoped memory for tpu_custom_call.1']
    %20 = vsyncpa [#allocation3], 0
    %s21 = scalar_lea.sflag [#allocation3], 1
    %22 = vsyncpa %s21, 0
    %23 = vsyncpa [#allocation6], 0
    %24 = vsyncpa [#allocation9], 0
    %25 = vsyncpa [#allocation12], 0
    %26 = vsyncpa [#allocation4], 0
    %s27 = scalar_lea.sflag [#allocation4], 1
    %28 = vsyncpa %s27, 0
    %29 = vsyncpa [#allocation16], 0
    %s30 = scalar_lea.sflag [#allocation16], 1
    %31 = vsyncpa %s30, 0
    loop: start=0, step=1, limit=4
    $region2: #{tpu_custom_call.1} parent=1 // loop_pre_header
      _
    $region3: #{tpu_custom_call.1} parent=1 // loop_header
      %s33 = sphi 0, %s37
      %p34 = scmp.ge.s32.totalorder %s33, 4
      %s43 = sphi 0, %s45
      %s46 = sphi 0, %s43
      %s47 = sphi 0, %s46
      %s63 = sphi 0, %s47
      %s67 = sphi 0, %s67
      %s69 = sphi 0, %s67
      %s70 = sphi 0, %s69
      %s84 = sphi 0, %s70
      %s88 = sphi 0, %s88
      %s90 = sphi 0, %s88
      %s91 = sphi 0, %s90
      %s105 = sphi 0, %s91
      %s109 = sphi 0, %s109
      %s111 = sphi 0, %s109
      %s112 = sphi 0, %s111
      %s126 = sphi 0, %s112
      %s130 = sphi 0, %s130
      %s132 = sphi 0, %s130
      %s133 = sphi 0, %s132
      %s147 = sphi 0, %s133
      %s151 = sphi 0, %s151
      %s153 = sphi 0, %s151
      %s154 = sphi 0, %s153
      %s168 = sphi 0, %s154
      %s172 = sphi 0, %s172
      %s174 = sphi 0, %s172
      %s175 = sphi 0, %s174
      %s189 = sphi 0, %s175
      %s193 = sphi 0, %s193
      %s195 = sphi 0, %s193
      %s196 = sphi 0, %s195
      %s210 = sphi 0, %s196
      %s214 = sphi 0, %s214
      %s216 = sphi 0, %s214
      %s217 = sphi 0, %s216
      %s231 = sphi 0, %s217
      %s235 = sphi 0, %s235
      %s237 = sphi 0, %s235
      %s238 = sphi 0, %s237
      %s252 = sphi 0, %s238
      %s256 = sphi 0, %s256
      %s258 = sphi 0, %s256
      %s259 = sphi 0, %s258
      %s273 = sphi 0, %s259
      %s277 = sphi 0, %s277
      %s279 = sphi 0, %s277
      %s280 = sphi 0, %s279
      %s294 = sphi 0, %s280
      %s298 = sphi 0, %s298
      %s300 = sphi 0, %s298
      %s301 = sphi 0, %s300
      %s315 = sphi 0, %s301
      %s321 = sphi 0, %s323
      %s324 = sphi 0, %s321
      %s325 = sphi 0, %s324
      %s341 = sphi 0, %s325
      %s347 = sphi 0, %s349
      %s350 = sphi 0, %s347
      %s351 = sphi 0, %s350
      %s367 = sphi 0, %s351
    $region4: #{tpu_custom_call.1} parent=1 // loop_header_branch
      %36 = sbr.rel (%p34) target = $region8
    $region5: #{tpu_custom_call.1} parent=1 // loop_body
      %s38 = ssub.s32 %s33, 1
      %s39 = ssub.s32 %s33, 2
      %s40 = sadd.s32 %s33, 1
      %s41 = ssub.s32 %s33, %s40
      %p42 = scmp.eq.s32.totalorder %s41, 0
      %s44 = sadd.s32 %s43, 1
      %s45 = scalar_select %p42, %s43, %s44
      %p48 = pneg %p42
      %p49 = scmp.eq.s32.totalorder %s33, 1
      %p50 = por %p48, %p49
      %p51 = scmp.ne.s32.totalorder %s43, %s46
      %p52 = scmp.eq.s32.totalorder %s33, 0
      %p53 = por %p51, %p52
      %p54 = scmp.ne.s32.totalorder %s43, %s46
      %p55 = scmp.eq.s32.totalorder %s38, 1
      %p56 = por %p54, %p55
      %p57 = scmp.ne.s32.totalorder %s46, %s47
      %p58 = scmp.eq.s32.totalorder %s38, 0
      %p59 = por %p57, %p58
      %p60 = scmp.ne.s32.totalorder %s46, %s47
      %p61 = scmp.eq.s32.totalorder %s39, 1
      %p62 = por %p60, %p61
      %p64 = scmp.ne.s32.totalorder %s47, %s63
      %p65 = scmp.eq.s32.totalorder %s39, 0
      %p66 = por %p64, %p65
      %s68 = sadd.s32 %s67, 1
      %p71 = scmp.eq.s32.totalorder %s33, 1
      %p72 = scmp.ne.s32.totalorder %s67, %s69
      %p73 = scmp.eq.s32.totalorder %s33, 0
      %p74 = por %p72, %p73
      %p75 = scmp.ne.s32.totalorder %s67, %s69
      %p76 = scmp.eq.s32.totalorder %s38, 1
      %p77 = por %p75, %p76
      %p78 = scmp.ne.s32.totalorder %s69, %s70
      %p79 = scmp.eq.s32.totalorder %s38, 0
      %p80 = por %p78, %p79
      %p81 = scmp.ne.s32.totalorder %s69, %s70
      %p82 = scmp.eq.s32.totalorder %s39, 1
      %p83 = por %p81, %p82
      %p85 = scmp.ne.s32.totalorder %s70, %s84
      %p86 = scmp.eq.s32.totalorder %s39, 0
      %p87 = por %p85, %p86
      %s89 = sadd.s32 %s88, 1
      %p92 = scmp.eq.s32.totalorder %s33, 1
      %p93 = scmp.ne.s32.totalorder %s88, %s90
      %p94 = scmp.eq.s32.totalorder %s33, 0
      %p95 = por %p93, %p94
      %p96 = scmp.ne.s32.totalorder %s88, %s90
      %p97 = scmp.eq.s32.totalorder %s38, 1
      %p98 = por %p96, %p97
      %p99 = scmp.ne.s32.totalorder %s90, %s91
      %p100 = scmp.eq.s32.totalorder %s38, 0
      %p101 = por %p99, %p100
      %p102 = scmp.ne.s32.totalorder %s90, %s91
      %p103 = scmp.eq.s32.totalorder %s39, 1
      %p104 = por %p102, %p103
      %p106 = scmp.ne.s32.totalorder %s91, %s105
      %p107 = scmp.eq.s32.totalorder %s39, 0
      %p108 = por %p106, %p107
      %s110 = sadd.s32 %s109, 1
      %p113 = scmp.eq.s32.totalorder %s33, 1
      %p114 = scmp.ne.s32.totalorder %s109, %s111
      %p115 = scmp.eq.s32.totalorder %s33, 0
      %p116 = por %p114, %p115
      %p117 = scmp.ne.s32.totalorder %s109, %s111
      %p118 = scmp.eq.s32.totalorder %s38, 1
      %p119 = por %p117, %p118
      %p120 = scmp.ne.s32.totalorder %s111, %s112
      %p121 = scmp.eq.s32.totalorder %s38, 0
      %p122 = por %p120, %p121
      %p123 = scmp.ne.s32.totalorder %s111, %s112
      %p124 = scmp.eq.s32.totalorder %s39, 1
      %p125 = por %p123, %p124
      %p127 = scmp.ne.s32.totalorder %s112, %s126
      %p128 = scmp.eq.s32.totalorder %s39, 0
      %p129 = por %p127, %p128
      %s131 = sadd.s32 %s130, 1
      %p134 = scmp.eq.s32.totalorder %s33, 1
      %p135 = scmp.ne.s32.totalorder %s130, %s132
      %p136 = scmp.eq.s32.totalorder %s33, 0
      %p137 = por %p135, %p136
      %p138 = scmp.ne.s32.totalorder %s130, %s132
      %p139 = scmp.eq.s32.totalorder %s38, 1
      %p140 = por %p138, %p139
      %p141 = scmp.ne.s32.totalorder %s132, %s133
      %p142 = scmp.eq.s32.totalorder %s38, 0
      %p143 = por %p141, %p142
      %p144 = scmp.ne.s32.totalorder %s132, %s133
      %p145 = scmp.eq.s32.totalorder %s39, 1
      %p146 = por %p144, %p145
      %p148 = scmp.ne.s32.totalorder %s133, %s147
      %p149 = scmp.eq.s32.totalorder %s39, 0
      %p150 = por %p148, %p149
      %s152 = sadd.s32 %s151, 1
      %p155 = scmp.eq.s32.totalorder %s33, 1
      %p156 = scmp.ne.s32.totalorder %s151, %s153
      %p157 = scmp.eq.s32.totalorder %s33, 0
      %p158 = por %p156, %p157
      %p159 = scmp.ne.s32.totalorder %s151, %s153
      %p160 = scmp.eq.s32.totalorder %s38, 1
      %p161 = por %p159, %p160
      %p162 = scmp.ne.s32.totalorder %s153, %s154
      %p163 = scmp.eq.s32.totalorder %s38, 0
      %p164 = por %p162, %p163
      %p165 = scmp.ne.s32.totalorder %s153, %s154
      %p166 = scmp.eq.s32.totalorder %s39, 1
      %p167 = por %p165, %p166
      %p169 = scmp.ne.s32.totalorder %s154, %s168
      %p170 = scmp.eq.s32.totalorder %s39, 0
      %p171 = por %p169, %p170
      %s173 = sadd.s32 %s172, 1
      %p176 = scmp.eq.s32.totalorder %s33, 1
      %p177 = scmp.ne.s32.totalorder %s172, %s174
      %p178 = scmp.eq.s32.totalorder %s33, 0
      %p179 = por %p177, %p178
      %p180 = scmp.ne.s32.totalorder %s172, %s174
      %p181 = scmp.eq.s32.totalorder %s38, 1
      %p182 = por %p180, %p181
      %p183 = scmp.ne.s32.totalorder %s174, %s175
      %p184 = scmp.eq.s32.totalorder %s38, 0
      %p185 = por %p183, %p184
      %p186 = scmp.ne.s32.totalorder %s174, %s175
      %p187 = scmp.eq.s32.totalorder %s39, 1
      %p188 = por %p186, %p187
      %p190 = scmp.ne.s32.totalorder %s175, %s189
      %p191 = scmp.eq.s32.totalorder %s39, 0
      %p192 = por %p190, %p191
      %s194 = sadd.s32 %s193, 1
      %p197 = scmp.eq.s32.totalorder %s33, 1
      %p198 = scmp.ne.s32.totalorder %s193, %s195
      %p199 = scmp.eq.s32.totalorder %s33, 0
      %p200 = por %p198, %p199
      %p201 = scmp.ne.s32.totalorder %s193, %s195
      %p202 = scmp.eq.s32.totalorder %s38, 1
      %p203 = por %p201, %p202
      %p204 = scmp.ne.s32.totalorder %s195, %s196
      %p205 = scmp.eq.s32.totalorder %s38, 0
      %p206 = por %p204, %p205
      %p207 = scmp.ne.s32.totalorder %s195, %s196
      %p208 = scmp.eq.s32.totalorder %s39, 1
      %p209 = por %p207, %p208
      %p211 = scmp.ne.s32.totalorder %s196, %s210
      %p212 = scmp.eq.s32.totalorder %s39, 0
      %p213 = por %p211, %p212
      %s215 = sadd.s32 %s214, 1
      %p218 = scmp.eq.s32.totalorder %s33, 1
      %p219 = scmp.ne.s32.totalorder %s214, %s216
      %p220 = scmp.eq.s32.totalorder %s33, 0
      %p221 = por %p219, %p220
      %p222 = scmp.ne.s32.totalorder %s214, %s216
      %p223 = scmp.eq.s32.totalorder %s38, 1
      %p224 = por %p222, %p223
      %p225 = scmp.ne.s32.totalorder %s216, %s217
      %p226 = scmp.eq.s32.totalorder %s38, 0
      %p227 = por %p225, %p226
      %p228 = scmp.ne.s32.totalorder %s216, %s217
      %p229 = scmp.eq.s32.totalorder %s39, 1
      %p230 = por %p228, %p229
      %p232 = scmp.ne.s32.totalorder %s217, %s231
      %p233 = scmp.eq.s32.totalorder %s39, 0
      %p234 = por %p232, %p233
      %s236 = sadd.s32 %s235, 1
      %p239 = scmp.eq.s32.totalorder %s33, 1
      %p240 = scmp.ne.s32.totalorder %s235, %s237
      %p241 = scmp.eq.s32.totalorder %s33, 0
      %p242 = por %p240, %p241
      %p243 = scmp.ne.s32.totalorder %s235, %s237
      %p244 = scmp.eq.s32.totalorder %s38, 1
      %p245 = por %p243, %p244
      %p246 = scmp.ne.s32.totalorder %s237, %s238
      %p247 = scmp.eq.s32.totalorder %s38, 0
      %p248 = por %p246, %p247
      %p249 = scmp.ne.s32.totalorder %s237, %s238
      %p250 = scmp.eq.s32.totalorder %s39, 1
      %p251 = por %p249, %p250
      %p253 = scmp.ne.s32.totalorder %s238, %s252
      %p254 = scmp.eq.s32.totalorder %s39, 0
      %p255 = por %p253, %p254
      %s257 = sadd.s32 %s256, 1
      %p260 = scmp.eq.s32.totalorder %s33, 1
      %p261 = scmp.ne.s32.totalorder %s256, %s258
      %p262 = scmp.eq.s32.totalorder %s33, 0
      %p263 = por %p261, %p262
      %p264 = scmp.ne.s32.totalorder %s256, %s258
      %p265 = scmp.eq.s32.totalorder %s38, 1
      %p266 = por %p264, %p265
      %p267 = scmp.ne.s32.totalorder %s258, %s259
      %p268 = scmp.eq.s32.totalorder %s38, 0
      %p269 = por %p267, %p268
      %p270 = scmp.ne.s32.totalorder %s258, %s259
      %p271 = scmp.eq.s32.totalorder %s39, 1
      %p272 = por %p270, %p271
      %p274 = scmp.ne.s32.totalorder %s259, %s273
      %p275 = scmp.eq.s32.totalorder %s39, 0
      %p276 = por %p274, %p275
      %s278 = sadd.s32 %s277, 1
      %p281 = scmp.eq.s32.totalorder %s33, 1
      %p282 = scmp.ne.s32.totalorder %s277, %s279
      %p283 = scmp.eq.s32.totalorder %s33, 0
      %p284 = por %p282, %p283
      %p285 = scmp.ne.s32.totalorder %s277, %s279
      %p286 = scmp.eq.s32.totalorder %s38, 1
      %p287 = por %p285, %p286
      %p288 = scmp.ne.s32.totalorder %s279, %s280
      %p289 = scmp.eq.s32.totalorder %s38, 0
      %p290 = por %p288, %p289
      %p291 = scmp.ne.s32.totalorder %s279, %s280
      %p292 = scmp.eq.s32.totalorder %s39, 1
      %p293 = por %p291, %p292
      %p295 = scmp.ne.s32.totalorder %s280, %s294
      %p296 = scmp.eq.s32.totalorder %s39, 0
      %p297 = por %p295, %p296
      %s299 = sadd.s32 %s298, 1
      %p302 = scmp.eq.s32.totalorder %s33, 1
      %p303 = scmp.ne.s32.totalorder %s298, %s300
      %p304 = scmp.eq.s32.totalorder %s33, 0
      %p305 = por %p303, %p304
      %p306 = scmp.ne.s32.totalorder %s298, %s300
      %p307 = scmp.eq.s32.totalorder %s38, 1
      %p308 = por %p306, %p307
      %p309 = scmp.ne.s32.totalorder %s300, %s301
      %p310 = scmp.eq.s32.totalorder %s38, 0
      %p311 = por %p309, %p310
      %p312 = scmp.ne.s32.totalorder %s300, %s301
      %p313 = scmp.eq.s32.totalorder %s39, 1
      %p314 = por %p312, %p313
      %p316 = scmp.ne.s32.totalorder %s301, %s315
      %p317 = scmp.eq.s32.totalorder %s39, 0
      %p318 = por %p316, %p317
      %s319 = ssub.s32 %s33, %s40
      %p320 = scmp.eq.s32.totalorder %s319, 0
      %s322 = sadd.s32 %s321, 1
      %s323 = scalar_select %p320, %s321, %s322
      %p326 = pneg %p320
      %p327 = scmp.eq.s32.totalorder %s33, 1
      %p328 = por %p326, %p327
      %p329 = scmp.ne.s32.totalorder %s321, %s324
      %p330 = scmp.eq.s32.totalorder %s33, 0
      %p331 = por %p329, %p330
      %p332 = scmp.ne.s32.totalorder %s321, %s324
      %p333 = scmp.eq.s32.totalorder %s38, 1
      %p334 = por %p332, %p333
      %p335 = scmp.ne.s32.totalorder %s324, %s325
      %p336 = scmp.eq.s32.totalorder %s38, 0
      %p337 = por %p335, %p336
      %p338 = scmp.ne.s32.totalorder %s324, %s325
      %p339 = scmp.eq.s32.totalorder %s39, 1
      %p340 = por %p338, %p339
      %p342 = scmp.ne.s32.totalorder %s325, %s341
      %p343 = scmp.eq.s32.totalorder %s39, 0
      %p344 = por %p342, %p343
      %s345 = ssub.s32 %s33, %s40
      %p346 = scmp.eq.s32.totalorder %s345, 0
      %s348 = sadd.s32 %s347, 1
      %s349 = scalar_select %p346, %s347, %s348
      %p352 = pneg %p346
      %p353 = scmp.eq.s32.totalorder %s33, 1
      %p354 = por %p352, %p353
      %p355 = scmp.ne.s32.totalorder %s347, %s350
      %p356 = scmp.eq.s32.totalorder %s33, 0
      %p357 = por %p355, %p356
      %p358 = scmp.ne.s32.totalorder %s347, %s350
      %p359 = scmp.eq.s32.totalorder %s38, 1
      %p360 = por %p358, %p359
      %p361 = scmp.ne.s32.totalorder %s350, %s351
      %p362 = scmp.eq.s32.totalorder %s38, 0
      %p363 = por %p361, %p362
      %p364 = scmp.ne.s32.totalorder %s350, %s351
      %p365 = scmp.eq.s32.totalorder %s39, 1
      %p366 = por %p364, %p365
      %p368 = scmp.ne.s32.totalorder %s351, %s367
      %p369 = scmp.eq.s32.totalorder %s39, 0
      %p370 = por %p368, %p369
      %p371 = scmp.le.s32.totalorder 1, %s33
      %p372 = scmp.lt.s32.totalorder %s33, 3
      %p373 = pnand %p371, %p372
      %p374 = pneg %p373
      // Predicated region
      $region9: #{tpu_custom_call.1} parent=5 // pred_check
        _
      $region10: #{tpu_custom_call.1} parent=5 // pred_check_branch
        %376 = sbr.rel (%p373) target = $region12
      $region11: #{tpu_custom_call.1} parent=5 // pred_region
        %s377 = ssub.s32 %s33, 1
        // Predicated region
        $region13: #{tpu_custom_call.1} parent=11 // pred_check
          %p378 = pneg %p80
        $region14: #{tpu_custom_call.1} parent=11 // pred_check_branch
          %380 = sbr.rel (%p378) target = $region16
        $region15: #{tpu_custom_call.1} parent=11 // pred_region
          %s382 = ssub.s32 1024, 1024
          %383 = vsyncadd [#allocation6], %s382
          %s384 = sshll.u32 [#allocation5], 4
          %s385 = int_to_ptr.vmem [resolvable:$true] %s384
          %390 = dma.hbm_to_vmem [thread:$0]  %s1, 1024, %s385, [#allocation6], 64, 64, 4
        $region16: #{tpu_custom_call.1} parent=11 // pred_fallthru
          _
        // Predicated region
        $region17: #{tpu_custom_call.1} parent=11 // pred_check
          %p391 = pneg %p101
        $region18: #{tpu_custom_call.1} parent=11 // pred_check_branch
          %393 = sbr.rel (%p391) target = $region20
        $region19: #{tpu_custom_call.1} parent=11 // pred_region
          _
        $region20: #{tpu_custom_call.1} parent=11 // pred_fallthru
          _
        // Predicated region
        $region21: #{tpu_custom_call.1} parent=11 // pred_check
          %p394 = pneg %p122
        $region22: #{tpu_custom_call.1} parent=11 // pred_check_branch
          %396 = sbr.rel (%p394) target = $region24
        $region23: #{tpu_custom_call.1} parent=11 // pred_region
          %s398 = ssub.s32 1024, 1024
          %399 = vsyncadd [#allocation6], %s398
          %s400 = sshll.u32 [#allocation7], 4
          %s401 = int_to_ptr.vmem [resolvable:$true] %s400
          %406 = dma.hbm_to_vmem [thread:$0]  %s3, 1024, %s401, [#allocation6], 64, 64, 4
        $region24: #{tpu_custom_call.1} parent=11 // pred_fallthru
          _
        // Predicated region
        $region25: #{tpu_custom_call.1} parent=11 // pred_check
          %p407 = pneg %p143
        $region26: #{tpu_custom_call.1} parent=11 // pred_check_branch
          %409 = sbr.rel (%p407) target = $region28
        $region27: #{tpu_custom_call.1} parent=11 // pred_region
          _
        $region28: #{tpu_custom_call.1} parent=11 // pred_fallthru
          _
        // Predicated region
        $region29: #{tpu_custom_call.1} parent=11 // pred_check
          %p410 = pneg %p164
        $region30: #{tpu_custom_call.1} parent=11 // pred_check_branch
          %412 = sbr.rel (%p410) target = $region32
        $region31: #{tpu_custom_call.1} parent=11 // pred_region
          %s414 = ssub.s32 1024, 1024
          %415 = vsyncadd [#allocation9], %s414
          %s416 = sshll.u32 [#allocation8], 4
          %s417 = int_to_ptr.vmem [resolvable:$true] %s416
          %422 = dma.hbm_to_vmem [thread:$0]  %s5, 1024, %s417, [#allocation9], 64, 64, 4
        $region32: #{tpu_custom_call.1} parent=11 // pred_fallthru
          _
        // Predicated region
        $region33: #{tpu_custom_call.1} parent=11 // pred_check
          %p423 = pneg %p185
        $region34: #{tpu_custom_call.1} parent=11 // pred_check_branch
          %425 = sbr.rel (%p423) target = $region36
        $region35: #{tpu_custom_call.1} parent=11 // pred_region
          _
        $region36: #{tpu_custom_call.1} parent=11 // pred_fallthru
          _
        // Predicated region
        $region37: #{tpu_custom_call.1} parent=11 // pred_check
          %p426 = pneg %p206
        $region38: #{tpu_custom_call.1} parent=11 // pred_check_branch
          %428 = sbr.rel (%p426) target = $region40
        $region39: #{tpu_custom_call.1} parent=11 // pred_region
          %s430 = ssub.s32 1024, 1024
          %431 = vsyncadd [#allocation9], %s430
          %s432 = sshll.u32 [#allocation10], 4
          %s433 = int_to_ptr.vmem [resolvable:$true] %s432
          %438 = dma.hbm_to_vmem [thread:$0]  %s7, 1024, %s433, [#allocation9], 64, 64, 4
        $region40: #{tpu_custom_call.1} parent=11 // pred_fallthru
          _
        // Predicated region
        $region41: #{tpu_custom_call.1} parent=11 // pred_check
          %p439 = pneg %p227
        $region42: #{tpu_custom_call.1} parent=11 // pred_check_branch
          %441 = sbr.rel (%p439) target = $region44
        $region43: #{tpu_custom_call.1} parent=11 // pred_region
          _
        $region44: #{tpu_custom_call.1} parent=11 // pred_fallthru
          _
        // Predicated region
        $region45: #{tpu_custom_call.1} parent=11 // pred_check
          %p442 = pneg %p248
        $region46: #{tpu_custom_call.1} parent=11 // pred_check_branch
          %444 = sbr.rel (%p442) target = $region48
        $region47: #{tpu_custom_call.1} parent=11 // pred_region
          %s446 = ssub.s32 1024, 1024
          %447 = vsyncadd [#allocation12], %s446
          %s448 = sshll.u32 [#allocation11], 4
          %s449 = int_to_ptr.vmem [resolvable:$true] %s448
          %454 = dma.hbm_to_vmem [thread:$0]  %s9, 1024, %s449, [#allocation12], 64, 64, 4
        $region48: #{tpu_custom_call.1} parent=11 // pred_fallthru
          _
        // Predicated region
        $region49: #{tpu_custom_call.1} parent=11 // pred_check
          %p455 = pneg %p269
        $region50: #{tpu_custom_call.1} parent=11 // pred_check_branch
          %457 = sbr.rel (%p455) target = $region52
        $region51: #{tpu_custom_call.1} parent=11 // pred_region
          _
        $region52: #{tpu_custom_call.1} parent=11 // pred_fallthru
          _
        // Predicated region
        $region53: #{tpu_custom_call.1} parent=11 // pred_check
          %p458 = pneg %p290
        $region54: #{tpu_custom_call.1} parent=11 // pred_check_branch
          %460 = sbr.rel (%p458) target = $region56
        $region55: #{tpu_custom_call.1} parent=11 // pred_region
          %s462 = ssub.s32 1024, 1024
          %463 = vsyncadd [#allocation12], %s462
          %s464 = sshll.u32 [#allocation13], 4
          %s465 = int_to_ptr.vmem [resolvable:$true] %s464
          %470 = dma.hbm_to_vmem [thread:$0]  %s11, 1024, %s465, [#allocation12], 64, 64, 4
        $region56: #{tpu_custom_call.1} parent=11 // pred_fallthru
          _
        // Predicated region
        $region57: #{tpu_custom_call.1} parent=11 // pred_check
          %p471 = pneg %p311
        $region58: #{tpu_custom_call.1} parent=11 // pred_check_branch
          %473 = sbr.rel (%p471) target = $region60
        $region59: #{tpu_custom_call.1} parent=11 // pred_region
          _
        $region60: #{tpu_custom_call.1} parent=11 // pred_fallthru
          _
      $region12: #{tpu_custom_call.1} parent=5 // pred_fallthru
        _
      %p474 = scmp.lt.s32.totalorder %s33, 2
      // Predicated region
      $region61: #{tpu_custom_call.1} parent=5 // pred_check
        %p475 = pneg %p474
      $region62: #{tpu_custom_call.1} parent=5 // pred_check_branch
        %477 = sbr.rel (%p475) target = $region64
      $region63: #{tpu_custom_call.1} parent=5 // pred_region
        // Predicated region
        $region65: #{tpu_custom_call.1} parent=63 // pred_check
          %p478 = pneg %p53
        $region66: #{tpu_custom_call.1} parent=63 // pred_check_branch
          %480 = sbr.rel (%p478) target = $region68
        $region67: #{tpu_custom_call.1} parent=63 // pred_region
          %s481 = sand.u32 %s43, 1
          %s482 = scalar_lea.sflag [#allocation3], %s481
          %s483 = sand.u32 %s43, 1
          %s484 = smul.addr %s483, 64
          %s485 = scalar_lea.vmem [#allocation2], %s484
          %s486 = smul.u32 16, %s33
          %s488 = ssub.s32 1024, 1024
          %489 = vsyncadd %s482, %s488
          %s490 = smul.addr %s486, 64
          %s491 = scalar_lea.hbm %s0, %s490
          %s492 = sshll.u32 %s485, 4
          %s493 = int_to_ptr.vmem [resolvable:$true] %s492
          %498 = dma.hbm_to_vmem [thread:$0]  %s491, 1024, %s493, %s482, 64, 64, 4
        $region68: #{tpu_custom_call.1} parent=63 // pred_fallthru
          _
      $region64: #{tpu_custom_call.1} parent=5 // pred_fallthru
        _
      %p499 = scmp.le.s32.totalorder 1, %s33
      %p500 = scmp.lt.s32.totalorder %s33, 3
      %p501 = pnand %p499, %p500
      %p502 = pneg %p501
      // Predicated region
      $region69: #{tpu_custom_call.1} parent=5 // pred_check
        _
      $region70: #{tpu_custom_call.1} parent=5 // pred_check_branch
        %504 = sbr.rel (%p501) target = $region72
      $region71: #{tpu_custom_call.1} parent=5 // pred_region
        %s505 = ssub.s32 %s33, 1
        %s506 = sand.u32 %s46, 1
        %s507 = scalar_lea.sflag [#allocation3], %s506
        %s508 = sand.u32 %s46, 1
        %s509 = smul.addr %s508, 64
        %s510 = scalar_lea.vmem [#allocation2], %s509
        // Predicated region
        $region73: #{tpu_custom_call.1} parent=71 // pred_check
          %p511 = pneg %p59
        $region74: #{tpu_custom_call.1} parent=71 // pred_check_branch
          %513 = sbr.rel (%p511) target = $region76
        $region75: #{tpu_custom_call.1} parent=71 // pred_region
          %514 = dma.done %s507, 1024
        $region76: #{tpu_custom_call.1} parent=71 // pred_fallthru
          _
        // Predicated region
        $region77: #{tpu_custom_call.1} parent=71 // pred_check
          %p515 = pneg %p80
        $region78: #{tpu_custom_call.1} parent=71 // pred_check_branch
          %517 = sbr.rel (%p515) target = $region80
        $region79: #{tpu_custom_call.1} parent=71 // pred_region
          %518 = dma.done [#allocation6], 1024
        $region80: #{tpu_custom_call.1} parent=71 // pred_fallthru
          _
        // Predicated region
        $region81: #{tpu_custom_call.1} parent=71 // pred_check
          %p519 = pneg %p122
        $region82: #{tpu_custom_call.1} parent=71 // pred_check_branch
          %521 = sbr.rel (%p519) target = $region84
        $region83: #{tpu_custom_call.1} parent=71 // pred_region
          %522 = dma.done [#allocation6], 1024
        $region84: #{tpu_custom_call.1} parent=71 // pred_fallthru
          _
        // Predicated region
        $region85: #{tpu_custom_call.1} parent=71 // pred_check
          %p523 = pneg %p164
        $region86: #{tpu_custom_call.1} parent=71 // pred_check_branch
          %525 = sbr.rel (%p523) target = $region88
        $region87: #{tpu_custom_call.1} parent=71 // pred_region
          %526 = dma.done [#allocation9], 1024
        $region88: #{tpu_custom_call.1} parent=71 // pred_fallthru
          _
        // Predicated region
        $region89: #{tpu_custom_call.1} parent=71 // pred_check
          %p527 = pneg %p206
        $region90: #{tpu_custom_call.1} parent=71 // pred_check_branch
          %529 = sbr.rel (%p527) target = $region92
        $region91: #{tpu_custom_call.1} parent=71 // pred_region
          %530 = dma.done [#allocation9], 1024
        $region92: #{tpu_custom_call.1} parent=71 // pred_fallthru
          _
        // Predicated region
        $region93: #{tpu_custom_call.1} parent=71 // pred_check
          %p531 = pneg %p248
        $region94: #{tpu_custom_call.1} parent=71 // pred_check_branch
          %533 = sbr.rel (%p531) target = $region96
        $region95: #{tpu_custom_call.1} parent=71 // pred_region
          %534 = dma.done [#allocation12], 1024
        $region96: #{tpu_custom_call.1} parent=71 // pred_fallthru
          _
        // Predicated region
        $region97: #{tpu_custom_call.1} parent=71 // pred_check
          %p535 = pneg %p290
        $region98: #{tpu_custom_call.1} parent=71 // pred_check_branch
          %537 = sbr.rel (%p535) target = $region100
        $region99: #{tpu_custom_call.1} parent=71 // pred_region
          %538 = dma.done [#allocation12], 1024
        $region100: #{tpu_custom_call.1} parent=71 // pred_fallthru
          _
        %s539 = sand.u32 %s46, 1
        %s540 = scalar_lea.sflag [#allocation3], %s539
        %s541 = sand.u32 %s46, 1
        %s542 = smul.addr %s541, 64
        %s543 = scalar_lea.vmem [#allocation2], %s542
        %p544 = pneg %p59
        %p545 = pneg %p56
        %p546 = pneg %p80
        %p547 = pneg %p77
        %p548 = pneg %p101
        %p549 = pneg %p98
        %p550 = pneg %p122
        %p551 = pneg %p119
        %p552 = pneg %p143
        %p553 = pneg %p140
        %p554 = pneg %p164
        %p555 = pneg %p161
        %p556 = pneg %p185
        %p557 = pneg %p182
        %p558 = pneg %p206
        %p559 = pneg %p203
        %p560 = pneg %p227
        %p561 = pneg %p224
        %p562 = pneg %p248
        %p563 = pneg %p245
        %p564 = pneg %p269
        %p565 = pneg %p266
        %p566 = pneg %p290
        %p567 = pneg %p287
        %p568 = pneg %p311
        %p569 = pneg %p308
        %p570 = pneg %p337
        %p571 = pneg %p334
        %s572 = sand.u32 %s324, 1
        %s573 = scalar_lea.sflag [#allocation4], %s572
        %s574 = sand.u32 %s324, 1
        %s575 = smul.addr %s574, 128
        %s576 = scalar_lea.vmem [#allocation14], %s575
        %p577 = pneg %p363
        %p578 = pneg %p360
        %s579 = sand.u32 %s350, 1
        %s580 = scalar_lea.sflag [#allocation16], %s579
        %s581 = sand.u32 %s350, 1
        %s582 = smul.addr %s581, 128
        %s583 = scalar_lea.vmem [#allocation15], %s582
        %s584 = smul.u32 16, %s38
        %s585 = smul.u32 16, %s38
        %s586 = smul.u32 16, %s38
        %v588 = vld [vmem:[%s510] sm:$0xf]
        %v589 = vld [vmem:[%s510 + $0x4] sm:$0xf]
        %v590 = vld [vmem:[%s510 + $0x8] sm:$0xf]
        %v591 = vld [vmem:[%s510 + $0xc] sm:$0xf]
        %v592 = vld [vmem:[%s510 + $0x10] sm:$0xf]
        %v593 = vld [vmem:[%s510 + $0x14] sm:$0xf]
        %v594 = vld [vmem:[%s510 + $0x18] sm:$0xf]
        %v595 = vld [vmem:[%s510 + $0x1c] sm:$0xf]
        %v596 = vld [vmem:[%s510 + $0x20] sm:$0xf]
        %v597 = vld [vmem:[%s510 + $0x24] sm:$0xf]
        %v598 = vld [vmem:[%s510 + $0x28] sm:$0xf]
        %v599 = vld [vmem:[%s510 + $0x2c] sm:$0xf]
        %v600 = vld [vmem:[%s510 + $0x30] sm:$0xf]
        %v601 = vld [vmem:[%s510 + $0x34] sm:$0xf]
        %v602 = vld [vmem:[%s510 + $0x38] sm:$0xf]
        %v603 = vld [vmem:[%s510 + $0x3c] sm:$0xf]
        %v604 = vld [vmem:[#allocation5] sm:$0xf]
        %v605 = vld [vmem:[#allocation5 + $0x4] sm:$0xf]
        %v606 = vld [vmem:[#allocation5 + $0x8] sm:$0xf]
        %v607 = vld [vmem:[#allocation5 + $0xc] sm:$0xf]
        %v608 = vld [vmem:[#allocation5 + $0x10] sm:$0xf]
        %v609 = vld [vmem:[#allocation5 + $0x14] sm:$0xf]
        %v610 = vld [vmem:[#allocation5 + $0x18] sm:$0xf]
        %v611 = vld [vmem:[#allocation5 + $0x1c] sm:$0xf]
        %v612 = vld [vmem:[#allocation5 + $0x20] sm:$0xf]
        %v613 = vld [vmem:[#allocation5 + $0x24] sm:$0xf]
        %v614 = vld [vmem:[#allocation5 + $0x28] sm:$0xf]
        %v615 = vld [vmem:[#allocation5 + $0x2c] sm:$0xf]
        %v616 = vld [vmem:[#allocation5 + $0x30] sm:$0xf]
        %v617 = vld [vmem:[#allocation5 + $0x34] sm:$0xf]
        %v618 = vld [vmem:[#allocation5 + $0x38] sm:$0xf]
        %v619 = vld [vmem:[#allocation5 + $0x3c] sm:$0xf]
        %v620 = vld [vmem:[%s2] sm:$0x1]
        %v622 = vlaneseq
        %v623 = vshrl.u32 %v622, 7
        %v624 = vsub.s32 0, %v623
        %v625 = vrot.slane %v620, %v624
        %v643 = vunpack.c.l.b16 %v588
        %v644 = vunpack.c.l.b16 %v589
        %v645 = vunpack.c.l.b16 %v590
        %v646 = vunpack.c.l.b16 %v591
        %v647 = vunpack.c.l.b16 %v592
        %v648 = vunpack.c.l.b16 %v593
        %v649 = vunpack.c.l.b16 %v594
        %v650 = vunpack.c.l.b16 %v595
        %v651 = vunpack.c.l.b16 %v596
        %v652 = vunpack.c.l.b16 %v597
        %v653 = vunpack.c.l.b16 %v598
        %v654 = vunpack.c.l.b16 %v599
        %v655 = vunpack.c.l.b16 %v600
        %v656 = vunpack.c.l.b16 %v601
        %v657 = vunpack.c.l.b16 %v602
        %v658 = vunpack.c.l.b16 %v603
        %v659 = vpack.c.b16 %v644, %v643
        %v660 = vpack.c.b16 %v646, %v645
        %v661 = vpack.c.b16 %v648, %v647
        %v662 = vpack.c.b16 %v650, %v649
        %v663 = vpack.c.b16 %v652, %v651
        %v664 = vpack.c.b16 %v654, %v653
        %v665 = vpack.c.b16 %v656, %v655
        %v666 = vpack.c.b16 %v658, %v657
        %v691 = vunpack.c.l.b16 %v604
        %v692 = vunpack.c.l.b16 %v605
        %v693 = vunpack.c.l.b16 %v606
        %v694 = vunpack.c.l.b16 %v607
        %v695 = vunpack.c.l.b16 %v608
        %v696 = vunpack.c.l.b16 %v609
        %v697 = vunpack.c.l.b16 %v610
        %v698 = vunpack.c.l.b16 %v611
        %v699 = vunpack.c.l.b16 %v612
        %v700 = vunpack.c.l.b16 %v613
        %v701 = vunpack.c.l.b16 %v614
        %v702 = vunpack.c.l.b16 %v615
        %v703 = vunpack.c.l.b16 %v616
        %v704 = vunpack.c.l.b16 %v617
        %v705 = vunpack.c.l.b16 %v618
        %v706 = vunpack.c.l.b16 %v619
        %v707 = vpack.c.b16 %v692, %v691
        %v708 = vpack.c.b16 %v694, %v693
        %v709 = vpack.c.b16 %v696, %v695
        %v710 = vpack.c.b16 %v698, %v697
        %v711 = vpack.c.b16 %v700, %v699
        %v712 = vpack.c.b16 %v702, %v701
        %v713 = vpack.c.b16 %v704, %v703
        %v714 = vpack.c.b16 %v706, %v705
        %723 = vmatprep.subr.bf16.mxu0 0
        %724 = vmatpush1.bf16.msra.mxu0 %v707
        %725 = vmatprep.subr.bf16.mxu0 0
        %726 = vmatpush1.bf16.msra.mxu0 %v708
        %727 = vmatprep.subr.bf16.mxu0 0
        %728 = vmatpush1.bf16.msra.mxu0 %v709
        %729 = vmatprep.subr.bf16.mxu0 0
        %730 = vmatpush1.bf16.msra.mxu0 %v710
        %731 = vmatprep.subr.bf16.mxu0 0
        %732 = vmatpush1.bf16.msra.mxu0 %v711
        %733 = vmatprep.subr.bf16.mxu0 0
        %734 = vmatpush1.bf16.msra.mxu0 %v712
        %735 = vmatprep.subr.bf16.mxu0 0
        %736 = vmatpush1.bf16.msra.mxu0 %v713
        %737 = vmatprep.subr.bf16.mxu0 0
        %738 = vmatpush1.bf16.msra.mxu0 %v714
        %739 = vmatprep.subr.bf16.mxu0 0
        %740 = vmatpush1.bf16.msra.mxu0 0
        %741 = vmatprep.subr.bf16.mxu0 0
        %742 = vmatpush1.bf16.msra.mxu0 0
        %743 = vmatprep.subr.bf16.mxu0 0
        %744 = vmatpush1.bf16.msra.mxu0 0
        %745 = vmatprep.subr.bf16.mxu0 0
        %746 = vmatpush1.bf16.msra.mxu0 0
        %747 = vmatprep.subr.bf16.mxu0 0
        %748 = vmatpush1.bf16.msra.mxu0 0
        %749 = vmatprep.subr.bf16.mxu0 0
        %750 = vmatpush1.bf16.msra.mxu0 0
        %751 = vmatprep.subr.bf16.mxu0 0
        %752 = vmatpush1.bf16.msra.mxu0 0
        %753 = vmatprep.subr.bf16.mxu0 0
        %754 = vmatpush1.bf16.msra.mxu0 0
        %755 = vmatprep.mubr.bf16.mxu0 0
        %756 = vmatmul.mubr.bf16.gmra.mrb[0].mxu0 %v659
        %v757 = vpop.f32.mrb[0].mxu0
        %v758 = vadd.f32 %v625, %v757
        %v759 = vpop.f32.mrb[0].mxu0
        %v760 = vpop.f32.mrb[0].mxu0
        %v761 = vadd.f32 %v625, %v760
        %v762 = vpop.f32.mrb[0].mxu0
        %763 = vmatprep.mubr.bf16.mxu0 0
        %764 = vmatmul.mubr.bf16.gmra.mrb[0].mxu0 %v660
        %v765 = vpop.f32.mrb[0].mxu0
        %v766 = vadd.f32 %v625, %v765
        %v767 = vpop.f32.mrb[0].mxu0
        %v768 = vpop.f32.mrb[0].mxu0
        %v769 = vadd.f32 %v625, %v768
        %v770 = vpop.f32.mrb[0].mxu0
        %771 = vmatprep.mubr.bf16.mxu0 0
        %772 = vmatmul.mubr.bf16.gmra.mrb[0].mxu0 %v661
        %v773 = vpop.f32.mrb[0].mxu0
        %v774 = vadd.f32 %v625, %v773
        %v775 = vpop.f32.mrb[0].mxu0
        %v776 = vpop.f32.mrb[0].mxu0
        %v777 = vadd.f32 %v625, %v776
        %v778 = vpop.f32.mrb[0].mxu0
        %779 = vmatprep.mubr.bf16.mxu0 0
        %780 = vmatmul.mubr.bf16.gmra.mrb[0].mxu0 %v662
        %v781 = vpop.f32.mrb[0].mxu0
        %v782 = vadd.f32 %v625, %v781
        %v783 = vpop.f32.mrb[0].mxu0
        %v784 = vpop.f32.mrb[0].mxu0
        %v785 = vadd.f32 %v625, %v784
        %v786 = vpop.f32.mrb[0].mxu0
        %787 = vmatprep.mubr.bf16.mxu0 0
        %788 = vmatmul.mubr.bf16.gmra.mrb[0].mxu0 %v663
        %v789 = vpop.f32.mrb[0].mxu0
        %v790 = vadd.f32 %v625, %v789
        %v791 = vpop.f32.mrb[0].mxu0
        %v792 = vpop.f32.mrb[0].mxu0
        %v793 = vadd.f32 %v625, %v792
        %v794 = vpop.f32.mrb[0].mxu0
        %795 = vmatprep.mubr.bf16.mxu0 0
        %796 = vmatmul.mubr.bf16.gmra.mrb[0].mxu0 %v664
        %v797 = vpop.f32.mrb[0].mxu0
        %v798 = vadd.f32 %v625, %v797
        %v799 = vpop.f32.mrb[0].mxu0
        %v800 = vpop.f32.mrb[0].mxu0
        %v801 = vadd.f32 %v625, %v800
        %v802 = vpop.f32.mrb[0].mxu0
        %803 = vmatprep.mubr.bf16.mxu0 0
        %804 = vmatmul.mubr.bf16.gmra.mrb[0].mxu0 %v665
        %v805 = vpop.f32.mrb[0].mxu0
        %v806 = vadd.f32 %v625, %v805
        %v807 = vpop.f32.mrb[0].mxu0
        %v808 = vpop.f32.mrb[0].mxu0
        %v809 = vadd.f32 %v625, %v808
        %v810 = vpop.f32.mrb[0].mxu0
        %811 = vmatprep.mubr.bf16.mxu0 0
        %812 = vmatmul.mubr.bf16.gmra.mrb[0].mxu0 %v666
        %v813 = vpop.f32.mrb[0].mxu0
        %v814 = vadd.f32 %v625, %v813
        %v815 = vpop.f32.mrb[0].mxu0
        %v816 = vpop.f32.mrb[0].mxu0
        %v817 = vadd.f32 %v625, %v816
        %v818 = vpop.f32.mrb[0].mxu0
        %819 = vdwg.mxu0
        %v820 = vtanh.pop %v758
        %v821 = vtanh.pop %v761
        %v822 = vtanh.pop %v766
        %v823 = vtanh.pop %v769
        %v824 = vtanh.pop %v774
        %v825 = vtanh.pop %v777
        %v826 = vtanh.pop %v782
        %v827 = vtanh.pop %v785
        %v828 = vtanh.pop %v790
        %v829 = vtanh.pop %v793
        %v830 = vtanh.pop %v798
        %v831 = vtanh.pop %v801
        %v832 = vtanh.pop %v806
        %v833 = vtanh.pop %v809
        %v834 = vtanh.pop %v814
        %v835 = vtanh.pop %v817
        %v836 = vpack.c.bf16 %v821, %v820
        %v837 = vpack.c.bf16 %v823, %v822
        %v838 = vpack.c.bf16 %v825, %v824
        %v839 = vpack.c.bf16 %v827, %v826
        %v840 = vpack.c.bf16 %v829, %v828
        %v841 = vpack.c.bf16 %v831, %v830
        %v842 = vpack.c.bf16 %v833, %v832
        %v843 = vpack.c.bf16 %v835, %v834
        %v844 = vld [vmem:[#allocation7] sm:$0xf]
        %v845 = vld [vmem:[#allocation7 + $0x4] sm:$0xf]
        %v846 = vld [vmem:[#allocation7 + $0x8] sm:$0xf]
        %v847 = vld [vmem:[#allocation7 + $0xc] sm:$0xf]
        %v848 = vld [vmem:[#allocation7 + $0x10] sm:$0xf]
        %v849 = vld [vmem:[#allocation7 + $0x14] sm:$0xf]
        %v850 = vld [vmem:[#allocation7 + $0x18] sm:$0xf]
        %v851 = vld [vmem:[#allocation7 + $0x1c] sm:$0xf]
        %v852 = vld [vmem:[#allocation7 + $0x20] sm:$0xf]
        %v853 = vld [vmem:[#allocation7 + $0x24] sm:$0xf]
        %v854 = vld [vmem:[#allocation7 + $0x28] sm:$0xf]
        %v855 = vld [vmem:[#allocation7 + $0x2c] sm:$0xf]
        %v856 = vld [vmem:[#allocation7 + $0x30] sm:$0xf]
        %v857 = vld [vmem:[#allocation7 + $0x34] sm:$0xf]
        %v858 = vld [vmem:[#allocation7 + $0x38] sm:$0xf]
        %v859 = vld [vmem:[#allocation7 + $0x3c] sm:$0xf]
        %v860 = vld [vmem:[%s4] sm:$0x1]
        %v862 = vlaneseq
        %v863 = vshrl.u32 %v862, 7
        %v864 = vsub.s32 0, %v863
        %v865 = vrot.slane %v860, %v864
        %v883 = vunpack.c.l.b16 %v844
        %v884 = vunpack.c.l.b16 %v845
        %v885 = vunpack.c.l.b16 %v846
        %v886 = vunpack.c.l.b16 %v847
        %v887 = vunpack.c.l.b16 %v848
        %v888 = vunpack.c.l.b16 %v849
        %v889 = vunpack.c.l.b16 %v850
        %v890 = vunpack.c.l.b16 %v851
        %v891 = vunpack.c.l.b16 %v852
        %v892 = vunpack.c.l.b16 %v853
        %v893 = vunpack.c.l.b16 %v854
        %v894 = vunpack.c.l.b16 %v855
        %v895 = vunpack.c.l.b16 %v856
        %v896 = vunpack.c.l.b16 %v857
        %v897 = vunpack.c.l.b16 %v858
        %v898 = vunpack.c.l.b16 %v859
        %v899 = vpack.c.b16 %v884, %v883
        %v900 = vpack.c.b16 %v886, %v885
        %v901 = vpack.c.b16 %v888, %v887
        %v902 = vpack.c.b16 %v890, %v889
        %v903 = vpack.c.b16 %v892, %v891
        %v904 = vpack.c.b16 %v894, %v893
        %v905 = vpack.c.b16 %v896, %v895
        %v906 = vpack.c.b16 %v898, %v897
        %915 = vmatprep.subr.bf16.mxu0 0
        %916 = vmatpush1.bf16.msra.mxu0 %v899
        %917 = vmatprep.subr.bf16.mxu0 0
        %918 = vmatpush1.bf16.msra.mxu0 %v900
        %919 = vmatprep.subr.bf16.mxu0 0
        %920 = vmatpush1.bf16.msra.mxu0 %v901
        %921 = vmatprep.subr.bf16.mxu0 0
        %922 = vmatpush1.bf16.msra.mxu0 %v902
        %923 = vmatprep.subr.bf16.mxu0 0
        %924 = vmatpush1.bf16.msra.mxu0 %v903
        %925 = vmatprep.subr.bf16.mxu0 0
        %926 = vmatpush1.bf16.msra.mxu0 %v904
        %927 = vmatprep.subr.bf16.mxu0 0
        %928 = vmatpush1.bf16.msra.mxu0 %v905
        %929 = vmatprep.subr.bf16.mxu0 0
        %930 = vmatpush1.bf16.msra.mxu0 %v906
        %931 = vmatprep.subr.bf16.mxu0 0
        %932 = vmatpush1.bf16.msra.mxu0 0
        %933 = vmatprep.subr.bf16.mxu0 0
        %934 = vmatpush1.bf16.msra.mxu0 0
        %935 = vmatprep.subr.bf16.mxu0 0
        %936 = vmatpush1.bf16.msra.mxu0 0
        %937 = vmatprep.subr.bf16.mxu0 0
        %938 = vmatpush1.bf16.msra.mxu0 0
        %939 = vmatprep.subr.bf16.mxu0 0
        %940 = vmatpush1.bf16.msra.mxu0 0
        %941 = vmatprep.subr.bf16.mxu0 0
        %942 = vmatpush1.bf16.msra.mxu0 0
        %943 = vmatprep.subr.bf16.mxu0 0
        %944 = vmatpush1.bf16.msra.mxu0 0
        %945 = vmatprep.subr.bf16.mxu0 0
        %946 = vmatpush1.bf16.msra.mxu0 0
        %947 = vmatprep.mubr.bf16.mxu0 0
        %948 = vmatmul.mubr.bf16.gmra.mrb[0].mxu0 %v836
        %v949 = vpop.f32.mrb[0].mxu0
        %v950 = vadd.f32 %v865, %v949
        %v951 = vpop.f32.mrb[0].mxu0
        %v952 = vpop.f32.mrb[0].mxu0
        %v953 = vadd.f32 %v865, %v952
        %v954 = vpop.f32.mrb[0].mxu0
        %955 = vmatprep.mubr.bf16.mxu0 0
        %956 = vmatmul.mubr.bf16.gmra.mrb[0].mxu0 %v837
        %v957 = vpop.f32.mrb[0].mxu0
        %v958 = vadd.f32 %v865, %v957
        %v959 = vpop.f32.mrb[0].mxu0
        %v960 = vpop.f32.mrb[0].mxu0
        %v961 = vadd.f32 %v865, %v960
        %v962 = vpop.f32.mrb[0].mxu0
        %963 = vmatprep.mubr.bf16.mxu0 0
        %964 = vmatmul.mubr.bf16.gmra.mrb[0].mxu0 %v838
        %v965 = vpop.f32.mrb[0].mxu0
        %v966 = vadd.f32 %v865, %v965
        %v967 = vpop.f32.mrb[0].mxu0
        %v968 = vpop.f32.mrb[0].mxu0
        %v969 = vadd.f32 %v865, %v968
        %v970 = vpop.f32.mrb[0].mxu0
        %971 = vmatprep.mubr.bf16.mxu0 0
        %972 = vmatmul.mubr.bf16.gmra.mrb[0].mxu0 %v839
        %v973 = vpop.f32.mrb[0].mxu0
        %v974 = vadd.f32 %v865, %v973
        %v975 = vpop.f32.mrb[0].mxu0
        %v976 = vpop.f32.mrb[0].mxu0
        %v977 = vadd.f32 %v865, %v976
        %v978 = vpop.f32.mrb[0].mxu0
        %979 = vmatprep.mubr.bf16.mxu0 0
        %980 = vmatmul.mubr.bf16.gmra.mrb[0].mxu0 %v840
        %v981 = vpop.f32.mrb[0].mxu0
        %v982 = vadd.f32 %v865, %v981
        %v983 = vpop.f32.mrb[0].mxu0
        %v984 = vpop.f32.mrb[0].mxu0
        %v985 = vadd.f32 %v865, %v984
        %v986 = vpop.f32.mrb[0].mxu0
        %987 = vmatprep.mubr.bf16.mxu0 0
        %988 = vmatmul.mubr.bf16.gmra.mrb[0].mxu0 %v841
        %v989 = vpop.f32.mrb[0].mxu0
        %v990 = vadd.f32 %v865, %v989
        %v991 = vpop.f32.mrb[0].mxu0
        %v992 = vpop.f32.mrb[0].mxu0
        %v993 = vadd.f32 %v865, %v992
        %v994 = vpop.f32.mrb[0].mxu0
        %995 = vmatprep.mubr.bf16.mxu0 0
        %996 = vmatmul.mubr.bf16.gmra.mrb[0].mxu0 %v842
        %v997 = vpop.f32.mrb[0].mxu0
        %v998 = vadd.f32 %v865, %v997
        %v999 = vpop.f32.mrb[0].mxu0
        %v1000 = vpop.f32.mrb[0].mxu0
        %v1001 = vadd.f32 %v865, %v1000
        %v1002 = vpop.f32.mrb[0].mxu0
        %1003 = vmatprep.mubr.bf16.mxu0 0
        %1004 = vmatmul.mubr.bf16.gmra.mrb[0].mxu0 %v843
        %v1005 = vpop.f32.mrb[0].mxu0
        %v1006 = vadd.f32 %v865, %v1005
        %v1007 = vpop.f32.mrb[0].mxu0
        %v1008 = vpop.f32.mrb[0].mxu0
        %v1009 = vadd.f32 %v865, %v1008
        %v1010 = vpop.f32.mrb[0].mxu0
        %1011 = vdwg.mxu0
        %v1012 = vtanh.pop %v950
        %v1013 = vtanh.pop %v953
        %v1014 = vtanh.pop %v958
        %v1015 = vtanh.pop %v961
        %v1016 = vtanh.pop %v966
        %v1017 = vtanh.pop %v969
        %v1018 = vtanh.pop %v974
        %v1019 = vtanh.pop %v977
        %v1020 = vtanh.pop %v982
        %v1021 = vtanh.pop %v985
        %v1022 = vtanh.pop %v990
        %v1023 = vtanh.pop %v993
        %v1024 = vtanh.pop %v998
        %v1025 = vtanh.pop %v1001
        %v1026 = vtanh.pop %v1006
        %v1027 = vtanh.pop %v1009
        %v1028 = vpack.c.bf16 %v1013, %v1012
        %v1029 = vpack.c.bf16 %v1015, %v1014
        %v1030 = vpack.c.bf16 %v1017, %v1016
        %v1031 = vpack.c.bf16 %v1019, %v1018
        %v1032 = vpack.c.bf16 %v1021, %v1020
        %v1033 = vpack.c.bf16 %v1023, %v1022
        %v1034 = vpack.c.bf16 %v1025, %v1024
        %v1035 = vpack.c.bf16 %v1027, %v1026
        %v1036 = vld [vmem:[#allocation8] sm:$0xf]
        %v1037 = vld [vmem:[#allocation8 + $0x4] sm:$0xf]
        %v1038 = vld [vmem:[#allocation8 + $0x8] sm:$0xf]
        %v1039 = vld [vmem:[#allocation8 + $0xc] sm:$0xf]
        %v1040 = vld [vmem:[#allocation8 + $0x10] sm:$0xf]
        %v1041 = vld [vmem:[#allocation8 + $0x14] sm:$0xf]
        %v1042 = vld [vmem:[#allocation8 + $0x18] sm:$0xf]
        %v1043 = vld [vmem:[#allocation8 + $0x1c] sm:$0xf]
        %v1044 = vld [vmem:[#allocation8 + $0x20] sm:$0xf]
        %v1045 = vld [vmem:[#allocation8 + $0x24] sm:$0xf]
        %v1046 = vld [vmem:[#allocation8 + $0x28] sm:$0xf]
        %v1047 = vld [vmem:[#allocation8 + $0x2c] sm:$0xf]
        %v1048 = vld [vmem:[#allocation8 + $0x30] sm:$0xf]
        %v1049 = vld [vmem:[#allocation8 + $0x34] sm:$0xf]
        %v1050 = vld [vmem:[#allocation8 + $0x38] sm:$0xf]
        %v1051 = vld [vmem:[#allocation8 + $0x3c] sm:$0xf]
        %v1052 = vld [vmem:[%s6] sm:$0x1]
        %v1054 = vlaneseq
        %v1055 = vshrl.u32 %v1054, 7
        %v1056 = vsub.s32 0, %v1055
        %v1057 = vrot.slane %v1052, %v1056
        %v1075 = vunpack.c.l.b16 %v1036
        %v1076 = vunpack.c.l.b16 %v1037
        %v1077 = vunpack.c.l.b16 %v1038
        %v1078 = vunpack.c.l.b16 %v1039
        %v1079 = vunpack.c.l.b16 %v1040
        %v1080 = vunpack.c.l.b16 %v1041
        %v1081 = vunpack.c.l.b16 %v1042
        %v1082 = vunpack.c.l.b16 %v1043
        %v1083 = vunpack.c.l.b16 %v1044
        %v1084 = vunpack.c.l.b16 %v1045
        %v1085 = vunpack.c.l.b16 %v1046
        %v1086 = vunpack.c.l.b16 %v1047
        %v1087 = vunpack.c.l.b16 %v1048
        %v1088 = vunpack.c.l.b16 %v1049
        %v1089 = vunpack.c.l.b16 %v1050
        %v1090 = vunpack.c.l.b16 %v1051
        %v1091 = vpack.c.b16 %v1076, %v1075
        %v1092 = vpack.c.b16 %v1078, %v1077
        %v1093 = vpack.c.b16 %v1080, %v1079
        %v1094 = vpack.c.b16 %v1082, %v1081
        %v1095 = vpack.c.b16 %v1084, %v1083
        %v1096 = vpack.c.b16 %v1086, %v1085
        %v1097 = vpack.c.b16 %v1088, %v1087
        %v1098 = vpack.c.b16 %v1090, %v1089
        %1107 = vmatprep.subr.bf16.mxu0 0
        %1108 = vmatpush1.bf16.msra.mxu0 %v1091
        %1109 = vmatprep.subr.bf16.mxu0 0
        %1110 = vmatpush1.bf16.msra.mxu0 %v1092
        %1111 = vmatprep.subr.bf16.mxu0 0
        %1112 = vmatpush1.bf16.msra.mxu0 %v1093
        %1113 = vmatprep.subr.bf16.mxu0 0
        %1114 = vmatpush1.bf16.msra.mxu0 %v1094
        %1115 = vmatprep.subr.bf16.mxu0 0
        %1116 = vmatpush1.bf16.msra.mxu0 %v1095
        %1117 = vmatprep.subr.bf16.mxu0 0
        %1118 = vmatpush1.bf16.msra.mxu0 %v1096
        %1119 = vmatprep.subr.bf16.mxu0 0
        %1120 = vmatpush1.bf16.msra.mxu0 %v1097
        %1121 = vmatprep.subr.bf16.mxu0 0
        %1122 = vmatpush1.bf16.msra.mxu0 %v1098
        %1123 = vmatprep.subr.bf16.mxu0 0
        %1124 = vmatpush1.bf16.msra.mxu0 0
        %1125 = vmatprep.subr.bf16.mxu0 0
        %1126 = vmatpush1.bf16.msra.mxu0 0
        %1127 = vmatprep.subr.bf16.mxu0 0
        %1128 = vmatpush1.bf16.msra.mxu0 0
        %1129 = vmatprep.subr.bf16.mxu0 0
        %1130 = vmatpush1.bf16.msra.mxu0 0
        %1131 = vmatprep.subr.bf16.mxu0 0
        %1132 = vmatpush1.bf16.msra.mxu0 0
        %1133 = vmatprep.subr.bf16.mxu0 0
        %1134 = vmatpush1.bf16.msra.mxu0 0
        %1135 = vmatprep.subr.bf16.mxu0 0
        %1136 = vmatpush1.bf16.msra.mxu0 0
        %1137 = vmatprep.subr.bf16.mxu0 0
        %1138 = vmatpush1.bf16.msra.mxu0 0
        %1139 = vmatprep.mubr.bf16.mxu0 0
        %1140 = vmatmul.mubr.bf16.gmra.mrb[0].mxu0 %v1028
        %v1141 = vpop.f32.mrb[0].mxu0
        %v1142 = vadd.f32 %v1057, %v1141
        %v1143 = vpop.f32.mrb[0].mxu0
        %v1144 = vpop.f32.mrb[0].mxu0
        %v1145 = vadd.f32 %v1057, %v1144
        %v1146 = vpop.f32.mrb[0].mxu0
        %1147 = vmatprep.mubr.bf16.mxu0 0
        %1148 = vmatmul.mubr.bf16.gmra.mrb[0].mxu0 %v1029
        %v1149 = vpop.f32.mrb[0].mxu0
        %v1150 = vadd.f32 %v1057, %v1149
        %v1151 = vpop.f32.mrb[0].mxu0
        %v1152 = vpop.f32.mrb[0].mxu0
        %v1153 = vadd.f32 %v1057, %v1152
        %v1154 = vpop.f32.mrb[0].mxu0
        %1155 = vmatprep.mubr.bf16.mxu0 0
        %1156 = vmatmul.mubr.bf16.gmra.mrb[0].mxu0 %v1030
        %v1157 = vpop.f32.mrb[0].mxu0
        %v1158 = vadd.f32 %v1057, %v1157
        %v1159 = vpop.f32.mrb[0].mxu0
        %v1160 = vpop.f32.mrb[0].mxu0
        %v1161 = vadd.f32 %v1057, %v1160
        %v1162 = vpop.f32.mrb[0].mxu0
        %1163 = vmatprep.mubr.bf16.mxu0 0
        %1164 = vmatmul.mubr.bf16.gmra.mrb[0].mxu0 %v1031
        %v1165 = vpop.f32.mrb[0].mxu0
        %v1166 = vadd.f32 %v1057, %v1165
        %v1167 = vpop.f32.mrb[0].mxu0
        %v1168 = vpop.f32.mrb[0].mxu0
        %v1169 = vadd.f32 %v1057, %v1168
        %v1170 = vpop.f32.mrb[0].mxu0
        %1171 = vmatprep.mubr.bf16.mxu0 0
        %1172 = vmatmul.mubr.bf16.gmra.mrb[0].mxu0 %v1032
        %v1173 = vpop.f32.mrb[0].mxu0
        %v1174 = vadd.f32 %v1057, %v1173
        %v1175 = vpop.f32.mrb[0].mxu0
        %v1176 = vpop.f32.mrb[0].mxu0
        %v1177 = vadd.f32 %v1057, %v1176
        %v1178 = vpop.f32.mrb[0].mxu0
        %1179 = vmatprep.mubr.bf16.mxu0 0
        %1180 = vmatmul.mubr.bf16.gmra.mrb[0].mxu0 %v1033
        %v1181 = vpop.f32.mrb[0].mxu0
        %v1182 = vadd.f32 %v1057, %v1181
        %v1183 = vpop.f32.mrb[0].mxu0
        %v1184 = vpop.f32.mrb[0].mxu0
        %v1185 = vadd.f32 %v1057, %v1184
        %v1186 = vpop.f32.mrb[0].mxu0
        %1187 = vmatprep.mubr.bf16.mxu0 0
        %1188 = vmatmul.mubr.bf16.gmra.mrb[0].mxu0 %v1034
        %v1189 = vpop.f32.mrb[0].mxu0
        %v1190 = vadd.f32 %v1057, %v1189
        %v1191 = vpop.f32.mrb[0].mxu0
        %v1192 = vpop.f32.mrb[0].mxu0
        %v1193 = vadd.f32 %v1057, %v1192
        %v1194 = vpop.f32.mrb[0].mxu0
        %1195 = vmatprep.mubr.bf16.mxu0 0
        %1196 = vmatmul.mubr.bf16.gmra.mrb[0].mxu0 %v1035
        %v1197 = vpop.f32.mrb[0].mxu0
        %v1198 = vadd.f32 %v1057, %v1197
        %v1199 = vpop.f32.mrb[0].mxu0
        %v1200 = vpop.f32.mrb[0].mxu0
        %v1201 = vadd.f32 %v1057, %v1200
        %v1202 = vpop.f32.mrb[0].mxu0
        %1203 = vdwg.mxu0
        %1204 = vst [vmem:[%s576] sm:$0xff] %v1142
        %1205 = vst [vmem:[%s576 + $0x8] sm:$0xff] %v1145
        %1206 = vst [vmem:[%s576 + $0x10] sm:$0xff] %v1150
        %1207 = vst [vmem:[%s576 + $0x18] sm:$0xff] %v1153
        %1208 = vst [vmem:[%s576 + $0x20] sm:$0xff] %v1158
        %1209 = vst [vmem:[%s576 + $0x28] sm:$0xff] %v1161
        %1210 = vst [vmem:[%s576 + $0x30] sm:$0xff] %v1166
        %1211 = vst [vmem:[%s576 + $0x38] sm:$0xff] %v1169
        %1212 = vst [vmem:[%s576 + $0x40] sm:$0xff] %v1174
        %1213 = vst [vmem:[%s576 + $0x48] sm:$0xff] %v1177
        %1214 = vst [vmem:[%s576 + $0x50] sm:$0xff] %v1182
        %1215 = vst [vmem:[%s576 + $0x58] sm:$0xff] %v1185
        %1216 = vst [vmem:[%s576 + $0x60] sm:$0xff] %v1190
        %1217 = vst [vmem:[%s576 + $0x68] sm:$0xff] %v1193
        %1218 = vst [vmem:[%s576 + $0x70] sm:$0xff] %v1198
        %1219 = vst [vmem:[%s576 + $0x78] sm:$0xff] %v1201
        %v1220 = vpack.c.bf16 %v1145, %v1142
        %v1221 = vpack.c.bf16 %v1153, %v1150
        %v1222 = vpack.c.bf16 %v1161, %v1158
        %v1223 = vpack.c.bf16 %v1169, %v1166
        %v1224 = vpack.c.bf16 %v1177, %v1174
        %v1225 = vpack.c.bf16 %v1185, %v1182
        %v1226 = vpack.c.bf16 %v1193, %v1190
        %v1227 = vpack.c.bf16 %v1201, %v1198
        %v1228 = vld [vmem:[#allocation10] sm:$0xf]
        %v1229 = vld [vmem:[#allocation10 + $0x4] sm:$0xf]
        %v1230 = vld [vmem:[#allocation10 + $0x8] sm:$0xf]
        %v1231 = vld [vmem:[#allocation10 + $0xc] sm:$0xf]
        %v1232 = vld [vmem:[#allocation10 + $0x10] sm:$0xf]
        %v1233 = vld [vmem:[#allocation10 + $0x14] sm:$0xf]
        %v1234 = vld [vmem:[#allocation10 + $0x18] sm:$0xf]
        %v1235 = vld [vmem:[#allocation10 + $0x1c] sm:$0xf]
        %v1236 = vld [vmem:[#allocation10 + $0x20] sm:$0xf]
        %v1237 = vld [vmem:[#allocation10 + $0x24] sm:$0xf]
        %v1238 = vld [vmem:[#allocation10 + $0x28] sm:$0xf]
        %v1239 = vld [vmem:[#allocation10 + $0x2c] sm:$0xf]
        %v1240 = vld [vmem:[#allocation10 + $0x30] sm:$0xf]
        %v1241 = vld [vmem:[#allocation10 + $0x34] sm:$0xf]
        %v1242 = vld [vmem:[#allocation10 + $0x38] sm:$0xf]
        %v1243 = vld [vmem:[#allocation10 + $0x3c] sm:$0xf]
        %v1244 = vld [vmem:[%s8] sm:$0x1]
        %v1246 = vlaneseq
        %v1247 = vshrl.u32 %v1246, 7
        %v1248 = vsub.s32 0, %v1247
        %v1249 = vrot.slane %v1244, %v1248
        %v1267 = vunpack.c.l.b16 %v1228
        %v1268 = vunpack.c.l.b16 %v1229
        %v1269 = vunpack.c.l.b16 %v1230
        %v1270 = vunpack.c.l.b16 %v1231
        %v1271 = vunpack.c.l.b16 %v1232
        %v1272 = vunpack.c.l.b16 %v1233
        %v1273 = vunpack.c.l.b16 %v1234
        %v1274 = vunpack.c.l.b16 %v1235
        %v1275 = vunpack.c.l.b16 %v1236
        %v1276 = vunpack.c.l.b16 %v1237
        %v1277 = vunpack.c.l.b16 %v1238
        %v1278 = vunpack.c.l.b16 %v1239
        %v1279 = vunpack.c.l.b16 %v1240
        %v1280 = vunpack.c.l.b16 %v1241
        %v1281 = vunpack.c.l.b16 %v1242
        %v1282 = vunpack.c.l.b16 %v1243
        %v1283 = vpack.c.b16 %v1268, %v1267
        %v1284 = vpack.c.b16 %v1270, %v1269
        %v1285 = vpack.c.b16 %v1272, %v1271
        %v1286 = vpack.c.b16 %v1274, %v1273
        %v1287 = vpack.c.b16 %v1276, %v1275
        %v1288 = vpack.c.b16 %v1278, %v1277
        %v1289 = vpack.c.b16 %v1280, %v1279
        %v1290 = vpack.c.b16 %v1282, %v1281
        %1299 = vmatprep.subr.bf16.mxu0 0
        %1300 = vmatpush1.bf16.msra.mxu0 %v1283
        %1301 = vmatprep.subr.bf16.mxu0 0
        %1302 = vmatpush1.bf16.msra.mxu0 %v1284
        %1303 = vmatprep.subr.bf16.mxu0 0
        %1304 = vmatpush1.bf16.msra.mxu0 %v1285
        %1305 = vmatprep.subr.bf16.mxu0 0
        %1306 = vmatpush1.bf16.msra.mxu0 %v1286
        %1307 = vmatprep.subr.bf16.mxu0 0
        %1308 = vmatpush1.bf16.msra.mxu0 %v1287
        %1309 = vmatprep.subr.bf16.mxu0 0
        %1310 = vmatpush1.bf16.msra.mxu0 %v1288
        %1311 = vmatprep.subr.bf16.mxu0 0
        %1312 = vmatpush1.bf16.msra.mxu0 %v1289
        %1313 = vmatprep.subr.bf16.mxu0 0
        %1314 = vmatpush1.bf16.msra.mxu0 %v1290
        %1315 = vmatprep.subr.bf16.mxu0 0
        %1316 = vmatpush1.bf16.msra.mxu0 0
        %1317 = vmatprep.subr.bf16.mxu0 0
        %1318 = vmatpush1.bf16.msra.mxu0 0
        %1319 = vmatprep.subr.bf16.mxu0 0
        %1320 = vmatpush1.bf16.msra.mxu0 0
        %1321 = vmatprep.subr.bf16.mxu0 0
        %1322 = vmatpush1.bf16.msra.mxu0 0
        %1323 = vmatprep.subr.bf16.mxu0 0
        %1324 = vmatpush1.bf16.msra.mxu0 0
        %1325 = vmatprep.subr.bf16.mxu0 0
        %1326 = vmatpush1.bf16.msra.mxu0 0
        %1327 = vmatprep.subr.bf16.mxu0 0
        %1328 = vmatpush1.bf16.msra.mxu0 0
        %1329 = vmatprep.subr.bf16.mxu0 0
        %1330 = vmatpush1.bf16.msra.mxu0 0
        %1331 = vmatprep.mubr.bf16.mxu0 0
        %1332 = vmatmul.mubr.bf16.gmra.mrb[0].mxu0 %v1220
        %v1333 = vpop.f32.mrb[0].mxu0
        %v1334 = vadd.f32 %v1249, %v1333
        %v1335 = vpop.f32.mrb[0].mxu0
        %v1336 = vpop.f32.mrb[0].mxu0
        %v1337 = vadd.f32 %v1249, %v1336
        %v1338 = vpop.f32.mrb[0].mxu0
        %1339 = vmatprep.mubr.bf16.mxu0 0
        %1340 = vmatmul.mubr.bf16.gmra.mrb[0].mxu0 %v1221
        %v1341 = vpop.f32.mrb[0].mxu0
        %v1342 = vadd.f32 %v1249, %v1341
        %v1343 = vpop.f32.mrb[0].mxu0
        %v1344 = vpop.f32.mrb[0].mxu0
        %v1345 = vadd.f32 %v1249, %v1344
        %v1346 = vpop.f32.mrb[0].mxu0
        %1347 = vmatprep.mubr.bf16.mxu0 0
        %1348 = vmatmul.mubr.bf16.gmra.mrb[0].mxu0 %v1222
        %v1349 = vpop.f32.mrb[0].mxu0
        %v1350 = vadd.f32 %v1249, %v1349
        %v1351 = vpop.f32.mrb[0].mxu0
        %v1352 = vpop.f32.mrb[0].mxu0
        %v1353 = vadd.f32 %v1249, %v1352
        %v1354 = vpop.f32.mrb[0].mxu0
        %1355 = vmatprep.mubr.bf16.mxu0 0
        %1356 = vmatmul.mubr.bf16.gmra.mrb[0].mxu0 %v1223
        %v1357 = vpop.f32.mrb[0].mxu0
        %v1358 = vadd.f32 %v1249, %v1357
        %v1359 = vpop.f32.mrb[0].mxu0
        %v1360 = vpop.f32.mrb[0].mxu0
        %v1361 = vadd.f32 %v1249, %v1360
        %v1362 = vpop.f32.mrb[0].mxu0
        %1363 = vmatprep.mubr.bf16.mxu0 0
        %1364 = vmatmul.mubr.bf16.gmra.mrb[0].mxu0 %v1224
        %v1365 = vpop.f32.mrb[0].mxu0
        %v1366 = vadd.f32 %v1249, %v1365
        %v1367 = vpop.f32.mrb[0].mxu0
        %v1368 = vpop.f32.mrb[0].mxu0
        %v1369 = vadd.f32 %v1249, %v1368
        %v1370 = vpop.f32.mrb[0].mxu0
        %1371 = vmatprep.mubr.bf16.mxu0 0
        %1372 = vmatmul.mubr.bf16.gmra.mrb[0].mxu0 %v1225
        %v1373 = vpop.f32.mrb[0].mxu0
        %v1374 = vadd.f32 %v1249, %v1373
        %v1375 = vpop.f32.mrb[0].mxu0
        %v1376 = vpop.f32.mrb[0].mxu0
        %v1377 = vadd.f32 %v1249, %v1376
        %v1378 = vpop.f32.mrb[0].mxu0
        %1379 = vmatprep.mubr.bf16.mxu0 0
        %1380 = vmatmul.mubr.bf16.gmra.mrb[0].mxu0 %v1226
        %v1381 = vpop.f32.mrb[0].mxu0
        %v1382 = vadd.f32 %v1249, %v1381
        %v1383 = vpop.f32.mrb[0].mxu0
        %v1384 = vpop.f32.mrb[0].mxu0
        %v1385 = vadd.f32 %v1249, %v1384
        %v1386 = vpop.f32.mrb[0].mxu0
        %1387 = vmatprep.mubr.bf16.mxu0 0
        %1388 = vmatmul.mubr.bf16.gmra.mrb[0].mxu0 %v1227
        %v1389 = vpop.f32.mrb[0].mxu0
        %v1390 = vadd.f32 %v1249, %v1389
        %v1391 = vpop.f32.mrb[0].mxu0
        %v1392 = vpop.f32.mrb[0].mxu0
        %v1393 = vadd.f32 %v1249, %v1392
        %v1394 = vpop.f32.mrb[0].mxu0
        %1395 = vdwg.mxu0
        %v1396 = vtanh.pop %v1334
        %v1397 = vtanh.pop %v1337
        %v1398 = vtanh.pop %v1342
        %v1399 = vtanh.pop %v1345
        %v1400 = vtanh.pop %v1350
        %v1401 = vtanh.pop %v1353
        %v1402 = vtanh.pop %v1358
        %v1403 = vtanh.pop %v1361
        %v1404 = vtanh.pop %v1366
        %v1405 = vtanh.pop %v1369
        %v1406 = vtanh.pop %v1374
        %v1407 = vtanh.pop %v1377
        %v1408 = vtanh.pop %v1382
        %v1409 = vtanh.pop %v1385
        %v1410 = vtanh.pop %v1390
        %v1411 = vtanh.pop %v1393
        %v1412 = vpack.c.bf16 %v1397, %v1396
        %v1413 = vpack.c.bf16 %v1399, %v1398
        %v1414 = vpack.c.bf16 %v1401, %v1400
        %v1415 = vpack.c.bf16 %v1403, %v1402
        %v1416 = vpack.c.bf16 %v1405, %v1404
        %v1417 = vpack.c.bf16 %v1407, %v1406
        %v1418 = vpack.c.bf16 %v1409, %v1408
        %v1419 = vpack.c.bf16 %v1411, %v1410
        %v1420 = vld [vmem:[#allocation11] sm:$0xf]
        %v1421 = vld [vmem:[#allocation11 + $0x4] sm:$0xf]
        %v1422 = vld [vmem:[#allocation11 + $0x8] sm:$0xf]
        %v1423 = vld [vmem:[#allocation11 + $0xc] sm:$0xf]
        %v1424 = vld [vmem:[#allocation11 + $0x10] sm:$0xf]
        %v1425 = vld [vmem:[#allocation11 + $0x14] sm:$0xf]
        %v1426 = vld [vmem:[#allocation11 + $0x18] sm:$0xf]
        %v1427 = vld [vmem:[#allocation11 + $0x1c] sm:$0xf]
        %v1428 = vld [vmem:[#allocation11 + $0x20] sm:$0xf]
        %v1429 = vld [vmem:[#allocation11 + $0x24] sm:$0xf]
        %v1430 = vld [vmem:[#allocation11 + $0x28] sm:$0xf]
        %v1431 = vld [vmem:[#allocation11 + $0x2c] sm:$0xf]
        %v1432 = vld [vmem:[#allocation11 + $0x30] sm:$0xf]
        %v1433 = vld [vmem:[#allocation11 + $0x34] sm:$0xf]
        %v1434 = vld [vmem:[#allocation11 + $0x38] sm:$0xf]
        %v1435 = vld [vmem:[#allocation11 + $0x3c] sm:$0xf]
        %v1436 = vld [vmem:[%s10] sm:$0x1]
        %v1438 = vlaneseq
        %v1439 = vshrl.u32 %v1438, 7
        %v1440 = vsub.s32 0, %v1439
        %v1441 = vrot.slane %v1436, %v1440
        %v1459 = vunpack.c.l.b16 %v1420
        %v1460 = vunpack.c.l.b16 %v1421
        %v1461 = vunpack.c.l.b16 %v1422
        %v1462 = vunpack.c.l.b16 %v1423
        %v1463 = vunpack.c.l.b16 %v1424
        %v1464 = vunpack.c.l.b16 %v1425
        %v1465 = vunpack.c.l.b16 %v1426
        %v1466 = vunpack.c.l.b16 %v1427
        %v1467 = vunpack.c.l.b16 %v1428
        %v1468 = vunpack.c.l.b16 %v1429
        %v1469 = vunpack.c.l.b16 %v1430
        %v1470 = vunpack.c.l.b16 %v1431
        %v1471 = vunpack.c.l.b16 %v1432
        %v1472 = vunpack.c.l.b16 %v1433
        %v1473 = vunpack.c.l.b16 %v1434
        %v1474 = vunpack.c.l.b16 %v1435
        %v1475 = vpack.c.b16 %v1460, %v1459
        %v1476 = vpack.c.b16 %v1462, %v1461
        %v1477 = vpack.c.b16 %v1464, %v1463
        %v1478 = vpack.c.b16 %v1466, %v1465
        %v1479 = vpack.c.b16 %v1468, %v1467
        %v1480 = vpack.c.b16 %v1470, %v1469
        %v1481 = vpack.c.b16 %v1472, %v1471
        %v1482 = vpack.c.b16 %v1474, %v1473
        %1491 = vmatprep.subr.bf16.mxu0 0
        %1492 = vmatpush1.bf16.msra.mxu0 %v1475
        %1493 = vmatprep.subr.bf16.mxu0 0
        %1494 = vmatpush1.bf16.msra.mxu0 %v1476
        %1495 = vmatprep.subr.bf16.mxu0 0
        %1496 = vmatpush1.bf16.msra.mxu0 %v1477
        %1497 = vmatprep.subr.bf16.mxu0 0
        %1498 = vmatpush1.bf16.msra.mxu0 %v1478
        %1499 = vmatprep.subr.bf16.mxu0 0
        %1500 = vmatpush1.bf16.msra.mxu0 %v1479
        %1501 = vmatprep.subr.bf16.mxu0 0
        %1502 = vmatpush1.bf16.msra.mxu0 %v1480
        %1503 = vmatprep.subr.bf16.mxu0 0
        %1504 = vmatpush1.bf16.msra.mxu0 %v1481
        %1505 = vmatprep.subr.bf16.mxu0 0
        %1506 = vmatpush1.bf16.msra.mxu0 %v1482
        %1507 = vmatprep.subr.bf16.mxu0 0
        %1508 = vmatpush1.bf16.msra.mxu0 0
        %1509 = vmatprep.subr.bf16.mxu0 0
        %1510 = vmatpush1.bf16.msra.mxu0 0
        %1511 = vmatprep.subr.bf16.mxu0 0
        %1512 = vmatpush1.bf16.msra.mxu0 0
        %1513 = vmatprep.subr.bf16.mxu0 0
        %1514 = vmatpush1.bf16.msra.mxu0 0
        %1515 = vmatprep.subr.bf16.mxu0 0
        %1516 = vmatpush1.bf16.msra.mxu0 0
        %1517 = vmatprep.subr.bf16.mxu0 0
        %1518 = vmatpush1.bf16.msra.mxu0 0
        %1519 = vmatprep.subr.bf16.mxu0 0
        %1520 = vmatpush1.bf16.msra.mxu0 0
        %1521 = vmatprep.subr.bf16.mxu0 0
        %1522 = vmatpush1.bf16.msra.mxu0 0
        %1523 = vmatprep.mubr.bf16.mxu0 0
        %1524 = vmatmul.mubr.bf16.gmra.mrb[0].mxu0 %v1412
        %v1525 = vpop.f32.mrb[0].mxu0
        %v1526 = vadd.f32 %v1441, %v1525
        %v1527 = vpop.f32.mrb[0].mxu0
        %v1528 = vpop.f32.mrb[0].mxu0
        %v1529 = vadd.f32 %v1441, %v1528
        %v1530 = vpop.f32.mrb[0].mxu0
        %1531 = vmatprep.mubr.bf16.mxu0 0
        %1532 = vmatmul.mubr.bf16.gmra.mrb[0].mxu0 %v1413
        %v1533 = vpop.f32.mrb[0].mxu0
        %v1534 = vadd.f32 %v1441, %v1533
        %v1535 = vpop.f32.mrb[0].mxu0
        %v1536 = vpop.f32.mrb[0].mxu0
        %v1537 = vadd.f32 %v1441, %v1536
        %v1538 = vpop.f32.mrb[0].mxu0
        %1539 = vmatprep.mubr.bf16.mxu0 0
        %1540 = vmatmul.mubr.bf16.gmra.mrb[0].mxu0 %v1414
        %v1541 = vpop.f32.mrb[0].mxu0
        %v1542 = vadd.f32 %v1441, %v1541
        %v1543 = vpop.f32.mrb[0].mxu0
        %v1544 = vpop.f32.mrb[0].mxu0
        %v1545 = vadd.f32 %v1441, %v1544
        %v1546 = vpop.f32.mrb[0].mxu0
        %1547 = vmatprep.mubr.bf16.mxu0 0
        %1548 = vmatmul.mubr.bf16.gmra.mrb[0].mxu0 %v1415
        %v1549 = vpop.f32.mrb[0].mxu0
        %v1550 = vadd.f32 %v1441, %v1549
        %v1551 = vpop.f32.mrb[0].mxu0
        %v1552 = vpop.f32.mrb[0].mxu0
        %v1553 = vadd.f32 %v1441, %v1552
        %v1554 = vpop.f32.mrb[0].mxu0
        %1555 = vmatprep.mubr.bf16.mxu0 0
        %1556 = vmatmul.mubr.bf16.gmra.mrb[0].mxu0 %v1416
        %v1557 = vpop.f32.mrb[0].mxu0
        %v1558 = vadd.f32 %v1441, %v1557
        %v1559 = vpop.f32.mrb[0].mxu0
        %v1560 = vpop.f32.mrb[0].mxu0
        %v1561 = vadd.f32 %v1441, %v1560
        %v1562 = vpop.f32.mrb[0].mxu0
        %1563 = vmatprep.mubr.bf16.mxu0 0
        %1564 = vmatmul.mubr.bf16.gmra.mrb[0].mxu0 %v1417
        %v1565 = vpop.f32.mrb[0].mxu0
        %v1566 = vadd.f32 %v1441, %v1565
        %v1567 = vpop.f32.mrb[0].mxu0
        %v1568 = vpop.f32.mrb[0].mxu0
        %v1569 = vadd.f32 %v1441, %v1568
        %v1570 = vpop.f32.mrb[0].mxu0
        %1571 = vmatprep.mubr.bf16.mxu0 0
        %1572 = vmatmul.mubr.bf16.gmra.mrb[0].mxu0 %v1418
        %v1573 = vpop.f32.mrb[0].mxu0
        %v1574 = vadd.f32 %v1441, %v1573
        %v1575 = vpop.f32.mrb[0].mxu0
        %v1576 = vpop.f32.mrb[0].mxu0
        %v1577 = vadd.f32 %v1441, %v1576
        %v1578 = vpop.f32.mrb[0].mxu0
        %1579 = vmatprep.mubr.bf16.mxu0 0
        %1580 = vmatmul.mubr.bf16.gmra.mrb[0].mxu0 %v1419
        %v1581 = vpop.f32.mrb[0].mxu0
        %v1582 = vadd.f32 %v1441, %v1581
        %v1583 = vpop.f32.mrb[0].mxu0
        %v1584 = vpop.f32.mrb[0].mxu0
        %v1585 = vadd.f32 %v1441, %v1584
        %v1586 = vpop.f32.mrb[0].mxu0
        %1587 = vdwg.mxu0
        %v1588 = vtanh.pop %v1526
        %v1589 = vtanh.pop %v1529
        %v1590 = vtanh.pop %v1534
        %v1591 = vtanh.pop %v1537
        %v1592 = vtanh.pop %v1542
        %v1593 = vtanh.pop %v1545
        %v1594 = vtanh.pop %v1550
        %v1595 = vtanh.pop %v1553
        %v1596 = vtanh.pop %v1558
        %v1597 = vtanh.pop %v1561
        %v1598 = vtanh.pop %v1566
        %v1599 = vtanh.pop %v1569
        %v1600 = vtanh.pop %v1574
        %v1601 = vtanh.pop %v1577
        %v1602 = vtanh.pop %v1582
        %v1603 = vtanh.pop %v1585
        %v1604 = vpack.c.bf16 %v1589, %v1588
        %v1605 = vpack.c.bf16 %v1591, %v1590
        %v1606 = vpack.c.bf16 %v1593, %v1592
        %v1607 = vpack.c.bf16 %v1595, %v1594
        %v1608 = vpack.c.bf16 %v1597, %v1596
        %v1609 = vpack.c.bf16 %v1599, %v1598
        %v1610 = vpack.c.bf16 %v1601, %v1600
        %v1611 = vpack.c.bf16 %v1603, %v1602
        %v1612 = vld [vmem:[#allocation13] sm:$0xf]
        %v1613 = vld [vmem:[#allocation13 + $0x4] sm:$0xf]
        %v1614 = vld [vmem:[#allocation13 + $0x8] sm:$0xf]
        %v1615 = vld [vmem:[#allocation13 + $0xc] sm:$0xf]
        %v1616 = vld [vmem:[#allocation13 + $0x10] sm:$0xf]
        %v1617 = vld [vmem:[#allocation13 + $0x14] sm:$0xf]
        %v1618 = vld [vmem:[#allocation13 + $0x18] sm:$0xf]
        %v1619 = vld [vmem:[#allocation13 + $0x1c] sm:$0xf]
        %v1620 = vld [vmem:[#allocation13 + $0x20] sm:$0xf]
        %v1621 = vld [vmem:[#allocation13 + $0x24] sm:$0xf]
        %v1622 = vld [vmem:[#allocation13 + $0x28] sm:$0xf]
        %v1623 = vld [vmem:[#allocation13 + $0x2c] sm:$0xf]
        %v1624 = vld [vmem:[#allocation13 + $0x30] sm:$0xf]
        %v1625 = vld [vmem:[#allocation13 + $0x34] sm:$0xf]
        %v1626 = vld [vmem:[#allocation13 + $0x38] sm:$0xf]
        %v1627 = vld [vmem:[#allocation13 + $0x3c] sm:$0xf]
        %v1628 = vld [vmem:[%s12] sm:$0x1]
        %v1630 = vlaneseq
        %v1631 = vshrl.u32 %v1630, 7
        %v1632 = vsub.s32 0, %v1631
        %v1633 = vrot.slane %v1628, %v1632
        %v1651 = vunpack.c.l.b16 %v1612
        %v1652 = vunpack.c.l.b16 %v1613
        %v1653 = vunpack.c.l.b16 %v1614
        %v1654 = vunpack.c.l.b16 %v1615
        %v1655 = vunpack.c.l.b16 %v1616
        %v1656 = vunpack.c.l.b16 %v1617
        %v1657 = vunpack.c.l.b16 %v1618
        %v1658 = vunpack.c.l.b16 %v1619
        %v1659 = vunpack.c.l.b16 %v1620
        %v1660 = vunpack.c.l.b16 %v1621
        %v1661 = vunpack.c.l.b16 %v1622
        %v1662 = vunpack.c.l.b16 %v1623
        %v1663 = vunpack.c.l.b16 %v1624
        %v1664 = vunpack.c.l.b16 %v1625
        %v1665 = vunpack.c.l.b16 %v1626
        %v1666 = vunpack.c.l.b16 %v1627
        %v1667 = vpack.c.b16 %v1652, %v1651
        %v1668 = vpack.c.b16 %v1654, %v1653
        %v1669 = vpack.c.b16 %v1656, %v1655
        %v1670 = vpack.c.b16 %v1658, %v1657
        %v1671 = vpack.c.b16 %v1660, %v1659
        %v1672 = vpack.c.b16 %v1662, %v1661
        %v1673 = vpack.c.b16 %v1664, %v1663
        %v1674 = vpack.c.b16 %v1666, %v1665
        %1683 = vmatprep.subr.bf16.mxu0 0
        %1684 = vmatpush1.bf16.msra.mxu0 %v1667
        %1685 = vmatprep.subr.bf16.mxu0 0
        %1686 = vmatpush1.bf16.msra.mxu0 %v1668
        %1687 = vmatprep.subr.bf16.mxu0 0
        %1688 = vmatpush1.bf16.msra.mxu0 %v1669
        %1689 = vmatprep.subr.bf16.mxu0 0
        %1690 = vmatpush1.bf16.msra.mxu0 %v1670
        %1691 = vmatprep.subr.bf16.mxu0 0
        %1692 = vmatpush1.bf16.msra.mxu0 %v1671
        %1693 = vmatprep.subr.bf16.mxu0 0
        %1694 = vmatpush1.bf16.msra.mxu0 %v1672
        %1695 = vmatprep.subr.bf16.mxu0 0
        %1696 = vmatpush1.bf16.msra.mxu0 %v1673
        %1697 = vmatprep.subr.bf16.mxu0 0
        %1698 = vmatpush1.bf16.msra.mxu0 %v1674
        %1699 = vmatprep.subr.bf16.mxu0 0
        %1700 = vmatpush1.bf16.msra.mxu0 0
        %1701 = vmatprep.subr.bf16.mxu0 0
        %1702 = vmatpush1.bf16.msra.mxu0 0
        %1703 = vmatprep.subr.bf16.mxu0 0
        %1704 = vmatpush1.bf16.msra.mxu0 0
        %1705 = vmatprep.subr.bf16.mxu0 0
        %1706 = vmatpush1.bf16.msra.mxu0 0
        %1707 = vmatprep.subr.bf16.mxu0 0
        %1708 = vmatpush1.bf16.msra.mxu0 0
        %1709 = vmatprep.subr.bf16.mxu0 0
        %1710 = vmatpush1.bf16.msra.mxu0 0
        %1711 = vmatprep.subr.bf16.mxu0 0
        %1712 = vmatpush1.bf16.msra.mxu0 0
        %1713 = vmatprep.subr.bf16.mxu0 0
        %1714 = vmatpush1.bf16.msra.mxu0 0
        %1715 = vmatprep.mubr.bf16.mxu0 0
        %1716 = vmatmul.mubr.bf16.gmra.mrb[0].mxu0 %v1604
        %v1717 = vpop.f32.mrb[0].mxu0
        %v1718 = vadd.f32 %v1633, %v1717
        %v1719 = vpop.f32.mrb[0].mxu0
        %v1720 = vpop.f32.mrb[0].mxu0
        %v1721 = vadd.f32 %v1633, %v1720
        %v1722 = vpop.f32.mrb[0].mxu0
        %1723 = vmatprep.mubr.bf16.mxu0 0
        %1724 = vmatmul.mubr.bf16.gmra.mrb[0].mxu0 %v1605
        %v1725 = vpop.f32.mrb[0].mxu0
        %v1726 = vadd.f32 %v1633, %v1725
        %v1727 = vpop.f32.mrb[0].mxu0
        %v1728 = vpop.f32.mrb[0].mxu0
        %v1729 = vadd.f32 %v1633, %v1728
        %v1730 = vpop.f32.mrb[0].mxu0
        %1731 = vmatprep.mubr.bf16.mxu0 0
        %1732 = vmatmul.mubr.bf16.gmra.mrb[0].mxu0 %v1606
        %v1733 = vpop.f32.mrb[0].mxu0
        %v1734 = vadd.f32 %v1633, %v1733
        %v1735 = vpop.f32.mrb[0].mxu0
        %v1736 = vpop.f32.mrb[0].mxu0
        %v1737 = vadd.f32 %v1633, %v1736
        %v1738 = vpop.f32.mrb[0].mxu0
        %1739 = vmatprep.mubr.bf16.mxu0 0
        %1740 = vmatmul.mubr.bf16.gmra.mrb[0].mxu0 %v1607
        %v1741 = vpop.f32.mrb[0].mxu0
        %v1742 = vadd.f32 %v1633, %v1741
        %v1743 = vpop.f32.mrb[0].mxu0
        %v1744 = vpop.f32.mrb[0].mxu0
        %v1745 = vadd.f32 %v1633, %v1744
        %v1746 = vpop.f32.mrb[0].mxu0
        %1747 = vmatprep.mubr.bf16.mxu0 0
        %1748 = vmatmul.mubr.bf16.gmra.mrb[0].mxu0 %v1608
        %v1749 = vpop.f32.mrb[0].mxu0
        %v1750 = vadd.f32 %v1633, %v1749
        %v1751 = vpop.f32.mrb[0].mxu0
        %v1752 = vpop.f32.mrb[0].mxu0
        %v1753 = vadd.f32 %v1633, %v1752
        %v1754 = vpop.f32.mrb[0].mxu0
        %1755 = vmatprep.mubr.bf16.mxu0 0
        %1756 = vmatmul.mubr.bf16.gmra.mrb[0].mxu0 %v1609
        %v1757 = vpop.f32.mrb[0].mxu0
        %v1758 = vadd.f32 %v1633, %v1757
        %v1759 = vpop.f32.mrb[0].mxu0
        %v1760 = vpop.f32.mrb[0].mxu0
        %v1761 = vadd.f32 %v1633, %v1760
        %v1762 = vpop.f32.mrb[0].mxu0
        %1763 = vmatprep.mubr.bf16.mxu0 0
        %1764 = vmatmul.mubr.bf16.gmra.mrb[0].mxu0 %v1610
        %v1765 = vpop.f32.mrb[0].mxu0
        %v1766 = vadd.f32 %v1633, %v1765
        %v1767 = vpop.f32.mrb[0].mxu0
        %v1768 = vpop.f32.mrb[0].mxu0
        %v1769 = vadd.f32 %v1633, %v1768
        %v1770 = vpop.f32.mrb[0].mxu0
        %1771 = vmatprep.mubr.bf16.mxu0 0
        %1772 = vmatmul.mubr.bf16.gmra.mrb[0].mxu0 %v1611
        %v1773 = vpop.f32.mrb[0].mxu0
        %v1774 = vadd.f32 %v1633, %v1773
        %v1775 = vpop.f32.mrb[0].mxu0
        %v1776 = vpop.f32.mrb[0].mxu0
        %v1777 = vadd.f32 %v1633, %v1776
        %v1778 = vpop.f32.mrb[0].mxu0
        %1779 = vdwg.mxu0
        %v1780 = vtanh.pop %v1718
        %v1781 = vtanh.pop %v1721
        %v1782 = vtanh.pop %v1726
        %v1783 = vtanh.pop %v1729
        %v1784 = vtanh.pop %v1734
        %v1785 = vtanh.pop %v1737
        %v1786 = vtanh.pop %v1742
        %v1787 = vtanh.pop %v1745
        %v1788 = vtanh.pop %v1750
        %v1789 = vtanh.pop %v1753
        %v1790 = vtanh.pop %v1758
        %v1791 = vtanh.pop %v1761
        %v1792 = vtanh.pop %v1766
        %v1793 = vtanh.pop %v1769
        %v1794 = vtanh.pop %v1774
        %v1795 = vtanh.pop %v1777
        %1796 = vst [vmem:[%s583] sm:$0xff] %v1780
        %1797 = vst [vmem:[%s583 + $0x8] sm:$0xff] %v1781
        %1798 = vst [vmem:[%s583 + $0x10] sm:$0xff] %v1782
        %1799 = vst [vmem:[%s583 + $0x18] sm:$0xff] %v1783
        %1800 = vst [vmem:[%s583 + $0x20] sm:$0xff] %v1784
        %1801 = vst [vmem:[%s583 + $0x28] sm:$0xff] %v1785
        %1802 = vst [vmem:[%s583 + $0x30] sm:$0xff] %v1786
        %1803 = vst [vmem:[%s583 + $0x38] sm:$0xff] %v1787
        %1804 = vst [vmem:[%s583 + $0x40] sm:$0xff] %v1788
        %1805 = vst [vmem:[%s583 + $0x48] sm:$0xff] %v1789
        %1806 = vst [vmem:[%s583 + $0x50] sm:$0xff] %v1790
        %1807 = vst [vmem:[%s583 + $0x58] sm:$0xff] %v1791
        %1808 = vst [vmem:[%s583 + $0x60] sm:$0xff] %v1792
        %1809 = vst [vmem:[%s583 + $0x68] sm:$0xff] %v1793
        %1810 = vst [vmem:[%s583 + $0x70] sm:$0xff] %v1794
        %1811 = vst [vmem:[%s583 + $0x78] sm:$0xff] %v1795
        %s1812 = sand.u32 %s324, 1
        %s1813 = scalar_lea.sflag [#allocation4], %s1812
        %s1814 = sand.u32 %s324, 1
        %s1815 = smul.addr %s1814, 128
        %s1816 = scalar_lea.vmem [#allocation14], %s1815
        %s1817 = sand.u32 %s350, 1
        %s1818 = scalar_lea.sflag [#allocation16], %s1817
        %s1819 = sand.u32 %s350, 1
        %s1820 = smul.addr %s1819, 128
        %s1821 = scalar_lea.vmem [#allocation15], %s1820
        // Predicated region
        $region101: #{tpu_custom_call.1} parent=71 // pred_check
          %p1822 = pneg %p334
        $region102: #{tpu_custom_call.1} parent=71 // pred_check_branch
          %1824 = sbr.rel (%p1822) target = $region104
        $region103: #{tpu_custom_call.1} parent=71 // pred_region
          %s1825 = smul.u32 16, %s38
          %s1827 = ssub.s32 2048, 2048
          %1828 = vsyncadd %s1813, %s1827
          %s1829 = smul.addr %s1825, 128
          %s1830 = scalar_lea.hbm %s13, %s1829
          %s1831 = sshll.u32 %s1816, 4
          %s1832 = int_to_ptr.vmem [resolvable:$true] %s1831
          %1837 = dma.vmem_to_hbm [thread:$0]  %s1832, 2048, %s1830, %s1813, 128, 128, 8
        $region104: #{tpu_custom_call.1} parent=71 // pred_fallthru
          _
        // Predicated region
        $region105: #{tpu_custom_call.1} parent=71 // pred_check
          %p1838 = pneg %p360
        $region106: #{tpu_custom_call.1} parent=71 // pred_check_branch
          %1840 = sbr.rel (%p1838) target = $region108
        $region107: #{tpu_custom_call.1} parent=71 // pred_region
          %s1841 = smul.u32 16, %s38
          %s1843 = ssub.s32 2048, 2048
          %1844 = vsyncadd %s1818, %s1843
          %s1845 = smul.addr %s1841, 128
          %s1846 = scalar_lea.hbm %s14, %s1845
          %s1847 = sshll.u32 %s1821, 4
          %s1848 = int_to_ptr.vmem [resolvable:$true] %s1847
          %1853 = dma.vmem_to_hbm [thread:$0]  %s1848, 2048, %s1846, %s1818, 128, 128, 8
        $region108: #{tpu_custom_call.1} parent=71 // pred_fallthru
          _
      $region72: #{tpu_custom_call.1} parent=5 // pred_fallthru
        _
      %p1854 = scmp.le.s32.totalorder 2, %s33
      // Predicated region
      $region109: #{tpu_custom_call.1} parent=5 // pred_check
        %p1855 = pneg %p1854
      $region110: #{tpu_custom_call.1} parent=5 // pred_check_branch
        %1857 = sbr.rel (%p1855) target = $region112
      $region111: #{tpu_custom_call.1} parent=5 // pred_region
        %s1858 = ssub.s32 %s33, 2
        // Predicated region
        $region113: #{tpu_custom_call.1} parent=111 // pred_check
          %p1859 = pneg %p340
        $region114: #{tpu_custom_call.1} parent=111 // pred_check_branch
          %1861 = sbr.rel (%p1859) target = $region116
        $region115: #{tpu_custom_call.1} parent=111 // pred_region
          %s1862 = sand.u32 %s325, 1
          %s1863 = scalar_lea.sflag [#allocation4], %s1862
          %s1864 = sand.u32 %s325, 1
          %s1865 = smul.addr %s1864, 128
          %s1866 = scalar_lea.vmem [#allocation14], %s1865
          %1867 = dma.done %s1863, 2048
        $region116: #{tpu_custom_call.1} parent=111 // pred_fallthru
          _
        // Predicated region
        $region117: #{tpu_custom_call.1} parent=111 // pred_check
          %p1868 = pneg %p366
        $region118: #{tpu_custom_call.1} parent=111 // pred_check_branch
          %1870 = sbr.rel (%p1868) target = $region120
        $region119: #{tpu_custom_call.1} parent=111 // pred_region
          %s1871 = sand.u32 %s351, 1
          %s1872 = scalar_lea.sflag [#allocation16], %s1871
          %s1873 = sand.u32 %s351, 1
          %s1874 = smul.addr %s1873, 128
          %s1875 = scalar_lea.vmem [#allocation15], %s1874
          %1876 = dma.done %s1872, 2048
        $region120: #{tpu_custom_call.1} parent=111 // pred_fallthru
          _
      $region112: #{tpu_custom_call.1} parent=5 // pred_fallthru
        _
    $region6: #{tpu_custom_call.1} parent=1 // loop_footer
      %s37 = sadd.s32 1, %s33
    $region7: #{tpu_custom_call.1} parent=1 // loop_footer_branch
      %32 = sbr.rel target = $region3
    $region8: #{tpu_custom_call.1} parent=1 // loop_exit
      _
    %1877 = vsyncpa [#allocation3], 1
    %s1878 = scalar_lea.sflag [#allocation3], 1
    %1879 = vsyncpa %s1878, 1
    %1880 = vsyncpa [#allocation6], 1
    %1881 = vsyncpa [#allocation9], 1
    %1882 = vsyncpa [#allocation12], 1
    %1883 = vsyncpa [#allocation4], 1
    %s1884 = scalar_lea.sflag [#allocation4], 1
    %1885 = vsyncpa %s1884, 1
    %1886 = vsyncpa [#allocation16], 1
    %s1887 = scalar_lea.sflag [#allocation16], 1
    %1888 = vsyncpa %s1887, 1

</llo_original>
